<compile_context>
chip_gen: v7x
topology: tpu7x:2x2x1
jax: 0.10.0
libtpu: 0.0.40
codegen_flags: <defaults>
</compile_context>

<pallas_src>
import functools

import numpy as np
import jax
import jax.numpy as jnp
from jax.experimental import pallas as pl
from jax.experimental.pallas import tpu as pltpu


# ----------------------------- fused Pallas kernel ---------------------------

def _fused_resi_relu_kernel(x_ref, mask_ref, w1_ref, b1_ref, w2_ref, b2_ref,
                            w3_ref, b3_ref, o_ref, *, W, scales, Cs, mm_dtype):
    """Whole ResiRelu block for a block of B images (flattened on the lane axis).

    x_ref   : (Cin, L)           L = B*H*W, channel-major, images on lanes
    mask_ref: (8, L)             per-tap boundary masks (non-center taps), f32
    w1_ref  : (Cb, Cin)          conv1 weight with bn1 scale folded in (mm_dtype)
    b1_ref  : (Cb, 1)            bn1 bias (f32)
    w2_ref  : (S-1, Cs, 9*Cs)    conv2[s] weights (bn2 scale folded), im2col layout
    b2_ref  : (S-1, Cs, 1)       bn2 biases (f32)
    w3_ref  : (Cout, Cb)         conv3 weight with bn3 scale folded in (mm_dtype)
    b3_ref  : (Cout, 1)          bn3 bias (f32)
    o_ref   : (Cout, L)
    """
    x = x_ref[...]                                          # (Cin, L) f32
    L = x.shape[1]
    masks = mask_ref[...]                                   # (8, L) f32

    # conv1 (1x1, folded BN) + ReLU: channel matmul, (image, spatial) stays on lanes.
    out1 = jnp.dot(w1_ref[...], x.astype(mm_dtype),
                   preferred_element_type=jnp.float32)
    out1 = jnp.maximum(out1 + b1_ref[...], 0.0)             # (Cb, L) f32

    w3 = w3_ref[...]                                        # (Cout, Cb)

    # Res2Net hierarchical branches; conv3 contribution accumulated per scale.
    y = out1[0:Cs, :]                                       # scale 0 passthrough
    acc = jnp.dot(w3[:, 0:Cs], y.astype(mm_dtype),
                  preferred_element_type=jnp.float32)       # (Cout, L) f32

    for s in range(1, scales):
        inp = out1[s * Cs:(s + 1) * Cs, :]                  # 8-aligned sublane slice
        if s >= 2:
            inp = inp + y

        # im2col (9*Cs, L): 9 lane-rotated copies; boundary taps masked per image so
        # rolls that would read across an image edge contribute zero.
        cols = []
        mi = 0
        for kh in range(3):
            for kw in range(3):
                dh, dw = kh - 1, kw - 1
                off = dh * W + dw
                if off == 0:
                    cols.append(inp)                        # center tap: always valid
                else:
                    # shifted[:, p] = inp[:, (p + off) mod L]
                    shifted = pltpu.roll(inp, (-off) % L, axis=1)
                    cols.append(shifted * masks[mi:mi + 1, :])
                    mi += 1
        col = jnp.concatenate(cols, axis=0)                 # (9*Cs, L) f32

        y = jnp.dot(w2_ref[s - 1], col.astype(mm_dtype),
                    preferred_element_type=jnp.float32)
        y = jnp.maximum(y + b2_ref[s - 1], 0.0)             # (Cs, L) f32
        acc = acc + jnp.dot(w3[:, s * Cs:(s + 1) * Cs], y.astype(mm_dtype),
                            preferred_element_type=jnp.float32)

    # conv3 bias (folded BN) + identity residual + ReLU.
    o_ref[...] = jnp.maximum(acc + b3_ref[...] + x, 0.0).astype(o_ref.dtype)


# ----------------------------- wrapper ----------------------------------------

def _make_tap_masks(H, W, B):
    """(8, B*H*W) f32 validity masks for the 8 non-center 3x3 taps, tiled per image."""
    hh, ww = np.meshgrid(np.arange(H), np.arange(W), indexing='ij')
    rows = []
    for kh in range(3):
        for kw in range(3):
            dh, dw = kh - 1, kw - 1
            if dh == 0 and dw == 0:
                continue
            valid = ((hh + dh >= 0) & (hh + dh < H) &
                     (ww + dw >= 0) & (ww + dw < W)).reshape(-1)
            rows.append(np.tile(valid, B))
    return jnp.asarray(np.stack(rows), dtype=jnp.float32)


def resi_relu_forward(x_nchw, kp, scales=4, images_per_block=4,
                      matmul_dtype=jnp.float32):
    """ResiRelu.forward.  x_nchw: (N, C, H, W) -> (N, C, H, W)."""
    N, Cin, H, W = x_nchw.shape
    Cb = kp['w1k'].shape[0]
    Cs = Cb // scales
    Cout = kp['w3k'].shape[0]
    assert Cb % scales == 0
    assert Cout == Cin, "identity residual requires inplanes == planes"
    HW = H * W

    B = max(1, min(images_per_block, N))        # images per grid step
    n_blocks = -(-N // B)
    Npad = n_blocks * B
    L = B * HW                                  # lane width per grid step

    x_flat = x_nchw.reshape(N, Cin, HW)
    if Npad != N:
        x_flat = jnp.pad(x_flat, ((0, Npad - N), (0, 0), (0, 0)))
    # Channel-major layout, images flattened onto the lane axis: (Cin, Npad*HW).
    x_cm = jnp.transpose(x_flat, (1, 0, 2)).reshape(Cin, Npad * HW)

    masks = _make_tap_masks(H, W, B)            # hoisted out of the kernel

    kernel = functools.partial(_fused_resi_relu_kernel, W=W, scales=scales,
                               Cs=Cs, mm_dtype=jnp.dtype(matmul_dtype))

    out_cm = pl.pallas_call(
        kernel,
        out_shape=jax.ShapeDtypeStruct((Cout, Npad * HW), x_nchw.dtype),
        grid=(n_blocks,),
        in_specs=[
            pl.BlockSpec((Cin, L), lambda g: (0, g)),
            # Grid-invariant operands (constant index_maps) below.
            pl.BlockSpec((8, L), lambda g: (0, 0)),
            pl.BlockSpec((Cb, Cin), lambda g: (0, 0)),
            pl.BlockSpec((Cb, 1), lambda g: (0, 0)),
            pl.BlockSpec((scales - 1, Cs, 9 * Cs), lambda g: (0, 0, 0)),
            pl.BlockSpec((scales - 1, Cs, 1), lambda g: (0, 0, 0)),
            pl.BlockSpec((Cout, Cb), lambda g: (0, 0)),
            pl.BlockSpec((Cout, 1), lambda g: (0, 0)),
        ],
        out_specs=pl.BlockSpec((Cout, L), lambda g: (0, g)),
        compiler_params=pltpu.CompilerParams(
            dimension_semantics=("parallel",)),
    )(x_cm, masks, kp['w1k'], kp['b1k'], kp['w2k'], kp['b2k'],
      kp['w3k'], kp['b3k'])

    out = out_cm.reshape(Cout, Npad, HW).transpose(1, 0, 2)[:N]
    return out.reshape(N, Cout, H, W)


# ----------------------------- parameters -------------------------------------

def init_params(key, inplanes, planes, scales=4, groups=1, eps=1e-5):
    """Raw (PyTorch-layout) parameters: conv weights + eval-mode BN scale/bias."""
    Cb = groups * planes
    Cs = Cb // scales
    keys = iter(jax.random.split(key, 32))

    def conv_w(shape):
        return 0.1 * jax.random.normal(next(keys), shape, jnp.float32)

    def bn(c):  # eval-mode BatchNorm folded into per-channel scale/bias
        gamma = 1.0 + 0.1 * jax.random.normal(next(keys), (c,), jnp.float32)
        beta = 0.1 * jax.random.normal(next(keys), (c,), jnp.float32)
        mean = 0.1 * jax.random.normal(next(keys), (c,), jnp.float32)
        var = 0.5 + jnp.abs(jax.random.normal(next(keys), (c,), jnp.float32))
        scale = gamma / jnp.sqrt(var + eps)
        bias = beta - mean * scale
        return scale, bias

    w1 = conv_w((Cb, inplanes, 1, 1))[:, :, 0, 0]            # OIHW -> (Cout, Cin)
    s1, b1 = bn(Cb)

    w2_l, s2_l, b2_l = [], [], []
    for _ in range(scales - 1):
        w2_l.append(conv_w((Cs, Cs, 3, 3)))                  # OIHW
        s, b = bn(Cs)
        s2_l.append(s)
        b2_l.append(b)
    w2 = jnp.stack(w2_l)                                     # (S-1, Cs, Cs, 3, 3)
    s2 = jnp.stack(s2_l)
    b2 = jnp.stack(b2_l)

    w3 = conv_w((planes, Cb, 1, 1))[:, :, 0, 0]              # (Cout, Cin)
    s3, b3 = bn(planes)

    return dict(w1=w1, s1=s1, b1=b1, w2=w2, s2=s2, b2=b2, w3=w3, s3=s3, b3=b3)


def prepare_kernel_params(p, scales=4, matmul_dtype=jnp.float32):
    """Fold BN scales into conv weights (offline), cast matmul operands, pack."""
    Cb = p['w1'].shape[0]
    Cs = Cb // scales
    w1k = (p['w1'] * p['s1'][:, None]).astype(matmul_dtype)  # (Cb, Cin)
    b1k = p['b1'][:, None]                                   # (Cb, 1) f32
    w2s = p['w2'] * p['s2'][:, :, None, None, None]          # scale output channels
    # (S-1, cout, cin, kh, kw) -> (S-1, cout, kh, kw, cin) -> (S-1, Cs, 9*Cs)
    w2k = jnp.transpose(w2s, (0, 1, 3, 4, 2)).reshape(
        scales - 1, Cs, 9 * Cs).astype(matmul_dtype)
    b2k = p['b2'][:, :, None]                                # (S-1, Cs, 1) f32
    w3k = (p['w3'] * p['s3'][:, None]).astype(matmul_dtype)  # (Cout, Cb)
    b3k = p['b3'][:, None]                                   # (Cout, 1) f32
    return dict(w1k=w1k, b1k=b1k, w2k=w2k, b2k=b2k, w3k=w3k, b3k=b3k)


# ----------------------------- pure-JAX reference -----------------------------

def ref_forward(x, p, scales=4):
    hp = jax.lax.Precision.HIGHEST
    Cb = p['w1'].shape[0]
    Cs = Cb // scales
    out = jnp.einsum('oc,nchw->nohw', p['w1'], x, precision=hp)
    out = jnp.maximum(out * p['s1'][None, :, None, None]
                      + p['b1'][None, :, None, None], 0.0)
    xs = [out[:, s * Cs:(s + 1) * Cs] for s in range(scales)]
    ys = [xs[0]]
    for s in range(1, scales):
        inp = xs[s] if s == 1 else xs[s] + ys[-1]
        conv = jax.lax.conv_general_dilated(
            inp, p['w2'][s - 1], window_strides=(1, 1), padding='SAME',
            dimension_numbers=('NCHW', 'OIHW', 'NCHW'), precision=hp)
        ys.append(jnp.maximum(conv * p['s2'][s - 1][None, :, None, None]
                              + p['b2'][s - 1][None, :, None, None], 0.0))
    out = jnp.concatenate(ys, axis=1)
    out = jnp.einsum('oc,nchw->nohw', p['w3'], out, precision=hp)
    out = jnp.maximum(out * p['s3'][None, :, None, None]
                      + p['b3'][None, :, None, None] + x, 0.0)
    return out


# ----------------------------- main --------------------------------------------

if __name__ == "__main__":
    key = jax.random.PRNGKey(0)
    kx, kparam = jax.random.split(key)

    N, H, W = 8, 16, 16
    inplanes = planes = 32          # identity residual requires inplanes == planes
    scales = 4

    x = jax.random.normal(kx, (N, inplanes, H, W), jnp.float32)   # NCHW like PyTorch
    raw = init_params(kparam, inplanes, planes, scales=scales)
    ref = ref_forward(x, raw, scales=scales)

    # f32 matmul path (tight check): 4 images per grid step -> grid=(2,) "parallel".
    kp32 = prepare_kernel_params(raw, scales=scales, matmul_dtype=jnp.float32)
    out = jax.block_until_ready(
        resi_relu_forward(x, kp32, scales=scales, images_per_block=4))
    assert out.shape == (N, planes, H, W)
    np.testing.assert_allclose(np.asarray(out), np.asarray(ref),
                               rtol=5e-4, atol=5e-4)

    # bf16 matmul-operand path (v6e/v7x MXU rate; VPU math stays f32) — looser check.
    kpbf = prepare_kernel_params(raw, scales=scales, matmul_dtype=jnp.bfloat16)
    out_bf = jax.block_until_ready(
        resi_relu_forward(x, kpbf, scales=scales, images_per_block=4,
                          matmul_dtype=jnp.bfloat16))
    np.testing.assert_allclose(np.asarray(out_bf), np.asarray(ref),
                               rtol=5e-2, atol=5e-2)

    print("KERNEL_OK")
</pallas_src>

<mosaic_0001>
module attributes {stable_mosaic.version = 11 : i64} {
  func.func @_fused_resi_relu_kernel(%arg0: i32, %arg1: memref<32x1024xf32, #tpu.memory_space<vmem>>, %arg2: memref<8x1024xf32, #tpu.memory_space<vmem>>, %arg3: memref<32x32xf32, #tpu.memory_space<vmem>>, %arg4: memref<32x1xf32, #tpu.memory_space<vmem>>, %arg5: memref<3x8x72xf32, #tpu.memory_space<vmem>>, %arg6: memref<3x8x1xf32, #tpu.memory_space<vmem>>, %arg7: memref<32x32xf32, #tpu.memory_space<vmem>>, %arg8: memref<32x1xf32, #tpu.memory_space<vmem>>, %arg9: memref<32x1024xf32, #tpu.memory_space<vmem>>) attributes {dimension_semantics = [#tpu.dimension_semantics<parallel>], iteration_bounds = array<i64: 2>, scalar_prefetch = 0 : i64, scratch_operands = 0 : i64, tpu.core_type = #tpu.core_type<tc>, window_params = [{transform_indices = @transform_0, window_bounds = array<i64: 32, 1024>}, {pipeline_mode = #tpu.pipeline_mode<synchronous>, transform_indices = @transform_1, window_bounds = array<i64: 8, 1024>}, {pipeline_mode = #tpu.pipeline_mode<synchronous>, transform_indices = @transform_2, window_bounds = array<i64: 32, 32>}, {pipeline_mode = #tpu.pipeline_mode<synchronous>, transform_indices = @transform_3, window_bounds = array<i64: 32, 1>}, {pipeline_mode = #tpu.pipeline_mode<synchronous>, transform_indices = @transform_4, window_bounds = array<i64: 3, 8, 72>}, {pipeline_mode = #tpu.pipeline_mode<synchronous>, transform_indices = @transform_5, window_bounds = array<i64: 3, 8, 1>}, {pipeline_mode = #tpu.pipeline_mode<synchronous>, transform_indices = @transform_6, window_bounds = array<i64: 32, 32>}, {pipeline_mode = #tpu.pipeline_mode<synchronous>, transform_indices = @transform_7, window_bounds = array<i64: 32, 1>}, {transform_indices = @transform_8, window_bounds = array<i64: 32, 1024>}]} {
    %c0 = arith.constant 0 : index
    %c0_0 = arith.constant 0 : index
    %0 = vector.load %arg1[%c0, %c0_0] : memref<32x1024xf32, #tpu.memory_space<vmem>>, vector<32x1024xf32>
    %c0_1 = arith.constant 0 : index
    %c0_2 = arith.constant 0 : index
    %1 = vector.load %arg2[%c0_1, %c0_2] : memref<8x1024xf32, #tpu.memory_space<vmem>>, vector<8x1024xf32>
    %c0_3 = arith.constant 0 : index
    %c0_4 = arith.constant 0 : index
    %2 = vector.load %arg3[%c0_3, %c0_4] : memref<32x32xf32, #tpu.memory_space<vmem>>, vector<32x32xf32>
    %cst = arith.constant dense<0.000000e+00> : vector<32x1024xf32>
    %3 = tpu.matmul %2, %0, %cst {dimension_numbers = #tpu.dot_dimension_numbers<[1], [0], [0], [1], [0, 0, 1, 1], [], []>} : vector<32x32xf32>, vector<32x1024xf32>, vector<32x1024xf32> -> vector<32x1024xf32>
    %c0_5 = arith.constant 0 : index
    %c0_6 = arith.constant 0 : index
    %4 = vector.load %arg4[%c0_5, %c0_6] : memref<32x1xf32, #tpu.memory_space<vmem>>, vector<32x1xf32>
    %5 = vector.broadcast %4 : vector<32x1xf32> to vector<32x1024xf32>
    %6 = arith.addf %3, %5 : vector<32x1024xf32>
    %cst_7 = arith.constant 0.000000e+00 : f32
    %7 = vector.broadcast %cst_7 : f32 to vector<32x1024xf32>
    %8 = arith.maximumf %6, %7 : vector<32x1024xf32>
    %c0_8 = arith.constant 0 : index
    %c0_9 = arith.constant 0 : index
    %9 = vector.load %arg7[%c0_8, %c0_9] : memref<32x32xf32, #tpu.memory_space<vmem>>, vector<32x32xf32>
    %10 = vector.extract_strided_slice %8 {offsets = [0, 0], sizes = [8, 1024], strides = [1, 1]} : vector<32x1024xf32> to vector<8x1024xf32>
    %11 = vector.extract_strided_slice %9 {offsets = [0, 0], sizes = [32, 8], strides = [1, 1]} : vector<32x32xf32> to vector<32x8xf32>
    %cst_10 = arith.constant dense<0.000000e+00> : vector<32x1024xf32>
    %12 = tpu.matmul %11, %10, %cst_10 {dimension_numbers = #tpu.dot_dimension_numbers<[1], [0], [0], [1], [0, 0, 1, 1], [], []>} : vector<32x8xf32>, vector<8x1024xf32>, vector<32x1024xf32> -> vector<32x1024xf32>
    %13 = vector.extract_strided_slice %8 {offsets = [8, 0], sizes = [8, 1024], strides = [1, 1]} : vector<32x1024xf32> to vector<8x1024xf32>
    %c17_i32 = arith.constant 17 : i32
    %14 = tpu.dynamic_rotate %13 by %c17_i32 dim 1 : vector<8x1024xf32>, i32 -> vector<8x1024xf32>
    %15 = vector.extract_strided_slice %1 {offsets = [0, 0], sizes = [1, 1024], strides = [1, 1]} : vector<8x1024xf32> to vector<1x1024xf32>
    %16 = vector.broadcast %15 : vector<1x1024xf32> to vector<8x1024xf32>
    %17 = arith.mulf %14, %16 : vector<8x1024xf32>
    %c16_i32 = arith.constant 16 : i32
    %18 = tpu.dynamic_rotate %13 by %c16_i32 dim 1 : vector<8x1024xf32>, i32 -> vector<8x1024xf32>
    %19 = vector.extract_strided_slice %1 {offsets = [1, 0], sizes = [1, 1024], strides = [1, 1]} : vector<8x1024xf32> to vector<1x1024xf32>
    %20 = vector.broadcast %19 : vector<1x1024xf32> to vector<8x1024xf32>
    %21 = arith.mulf %18, %20 : vector<8x1024xf32>
    %c15_i32 = arith.constant 15 : i32
    %22 = tpu.dynamic_rotate %13 by %c15_i32 dim 1 : vector<8x1024xf32>, i32 -> vector<8x1024xf32>
    %23 = vector.extract_strided_slice %1 {offsets = [2, 0], sizes = [1, 1024], strides = [1, 1]} : vector<8x1024xf32> to vector<1x1024xf32>
    %24 = vector.broadcast %23 : vector<1x1024xf32> to vector<8x1024xf32>
    %25 = arith.mulf %22, %24 : vector<8x1024xf32>
    %c1_i32 = arith.constant 1 : i32
    %26 = tpu.dynamic_rotate %13 by %c1_i32 dim 1 : vector<8x1024xf32>, i32 -> vector<8x1024xf32>
    %27 = vector.extract_strided_slice %1 {offsets = [3, 0], sizes = [1, 1024], strides = [1, 1]} : vector<8x1024xf32> to vector<1x1024xf32>
    %28 = vector.broadcast %27 : vector<1x1024xf32> to vector<8x1024xf32>
    %29 = arith.mulf %26, %28 : vector<8x1024xf32>
    %c1023_i32 = arith.constant 1023 : i32
    %30 = tpu.dynamic_rotate %13 by %c1023_i32 dim 1 : vector<8x1024xf32>, i32 -> vector<8x1024xf32>
    %31 = vector.extract_strided_slice %1 {offsets = [4, 0], sizes = [1, 1024], strides = [1, 1]} : vector<8x1024xf32> to vector<1x1024xf32>
    %32 = vector.broadcast %31 : vector<1x1024xf32> to vector<8x1024xf32>
    %33 = arith.mulf %30, %32 : vector<8x1024xf32>
    %c1009_i32 = arith.constant 1009 : i32
    %34 = tpu.dynamic_rotate %13 by %c1009_i32 dim 1 : vector<8x1024xf32>, i32 -> vector<8x1024xf32>
    %35 = vector.extract_strided_slice %1 {offsets = [5, 0], sizes = [1, 1024], strides = [1, 1]} : vector<8x1024xf32> to vector<1x1024xf32>
    %36 = vector.broadcast %35 : vector<1x1024xf32> to vector<8x1024xf32>
    %37 = arith.mulf %34, %36 : vector<8x1024xf32>
    %c1008_i32 = arith.constant 1008 : i32
    %38 = tpu.dynamic_rotate %13 by %c1008_i32 dim 1 : vector<8x1024xf32>, i32 -> vector<8x1024xf32>
    %39 = vector.extract_strided_slice %1 {offsets = [6, 0], sizes = [1, 1024], strides = [1, 1]} : vector<8x1024xf32> to vector<1x1024xf32>
    %40 = vector.broadcast %39 : vector<1x1024xf32> to vector<8x1024xf32>
    %41 = arith.mulf %38, %40 : vector<8x1024xf32>
    %c1007_i32 = arith.constant 1007 : i32
    %42 = tpu.dynamic_rotate %13 by %c1007_i32 dim 1 : vector<8x1024xf32>, i32 -> vector<8x1024xf32>
    %43 = vector.extract_strided_slice %1 {offsets = [7, 0], sizes = [1, 1024], strides = [1, 1]} : vector<8x1024xf32> to vector<1x1024xf32>
    %44 = vector.broadcast %43 : vector<1x1024xf32> to vector<8x1024xf32>
    %45 = arith.mulf %42, %44 : vector<8x1024xf32>
    %46 = tpu.concatenate %17, %21, %25, %29, %13, %33, %37, %41, %45 in 0 : vector<8x1024xf32>, vector<8x1024xf32>, vector<8x1024xf32>, vector<8x1024xf32>, vector<8x1024xf32>, vector<8x1024xf32>, vector<8x1024xf32>, vector<8x1024xf32>, vector<8x1024xf32> -> vector<72x1024xf32>
    %c0_11 = arith.constant 0 : index
    %c0_12 = arith.constant 0 : index
    %c0_13 = arith.constant 0 : index
    %47 = vector.load %arg5[%c0_11, %c0_12, %c0_13] : memref<3x8x72xf32, #tpu.memory_space<vmem>>, vector<1x8x72xf32>
    %48 = vector.shape_cast %47 : vector<1x8x72xf32> to vector<8x72xf32>
    %cst_14 = arith.constant dense<0.000000e+00> : vector<8x1024xf32>
    %49 = tpu.matmul %48, %46, %cst_14 {dimension_numbers = #tpu.dot_dimension_numbers<[1], [0], [0], [1], [0, 0, 1, 1], [], []>} : vector<8x72xf32>, vector<72x1024xf32>, vector<8x1024xf32> -> vector<8x1024xf32>
    %c0_15 = arith.constant 0 : index
    %c0_16 = arith.constant 0 : index
    %c0_17 = arith.constant 0 : index
    %50 = vector.load %arg6[%c0_15, %c0_16, %c0_17] : memref<3x8x1xf32, #tpu.memory_space<vmem>>, vector<1x8x1xf32>
    %51 = vector.shape_cast %50 : vector<1x8x1xf32> to vector<8x1xf32>
    %52 = vector.broadcast %51 : vector<8x1xf32> to vector<8x1024xf32>
    %53 = arith.addf %49, %52 : vector<8x1024xf32>
    %cst_18 = arith.constant 0.000000e+00 : f32
    %54 = vector.broadcast %cst_18 : f32 to vector<8x1024xf32>
    %55 = arith.maximumf %53, %54 : vector<8x1024xf32>
    %56 = vector.extract_strided_slice %9 {offsets = [0, 8], sizes = [32, 8], strides = [1, 1]} : vector<32x32xf32> to vector<32x8xf32>
    %cst_19 = arith.constant dense<0.000000e+00> : vector<32x1024xf32>
    %57 = tpu.matmul %56, %55, %cst_19 {dimension_numbers = #tpu.dot_dimension_numbers<[1], [0], [0], [1], [0, 0, 1, 1], [], []>} : vector<32x8xf32>, vector<8x1024xf32>, vector<32x1024xf32> -> vector<32x1024xf32>
    %58 = arith.addf %12, %57 : vector<32x1024xf32>
    %59 = vector.extract_strided_slice %8 {offsets = [16, 0], sizes = [8, 1024], strides = [1, 1]} : vector<32x1024xf32> to vector<8x1024xf32>
    %60 = arith.addf %59, %55 : vector<8x1024xf32>
    %c17_i32_20 = arith.constant 17 : i32
    %61 = tpu.dynamic_rotate %60 by %c17_i32_20 dim 1 : vector<8x1024xf32>, i32 -> vector<8x1024xf32>
    %62 = vector.extract_strided_slice %1 {offsets = [0, 0], sizes = [1, 1024], strides = [1, 1]} : vector<8x1024xf32> to vector<1x1024xf32>
    %63 = vector.broadcast %62 : vector<1x1024xf32> to vector<8x1024xf32>
    %64 = arith.mulf %61, %63 : vector<8x1024xf32>
    %c16_i32_21 = arith.constant 16 : i32
    %65 = tpu.dynamic_rotate %60 by %c16_i32_21 dim 1 : vector<8x1024xf32>, i32 -> vector<8x1024xf32>
    %66 = vector.extract_strided_slice %1 {offsets = [1, 0], sizes = [1, 1024], strides = [1, 1]} : vector<8x1024xf32> to vector<1x1024xf32>
    %67 = vector.broadcast %66 : vector<1x1024xf32> to vector<8x1024xf32>
    %68 = arith.mulf %65, %67 : vector<8x1024xf32>
    %c15_i32_22 = arith.constant 15 : i32
    %69 = tpu.dynamic_rotate %60 by %c15_i32_22 dim 1 : vector<8x1024xf32>, i32 -> vector<8x1024xf32>
    %70 = vector.extract_strided_slice %1 {offsets = [2, 0], sizes = [1, 1024], strides = [1, 1]} : vector<8x1024xf32> to vector<1x1024xf32>
    %71 = vector.broadcast %70 : vector<1x1024xf32> to vector<8x1024xf32>
    %72 = arith.mulf %69, %71 : vector<8x1024xf32>
    %c1_i32_23 = arith.constant 1 : i32
    %73 = tpu.dynamic_rotate %60 by %c1_i32_23 dim 1 : vector<8x1024xf32>, i32 -> vector<8x1024xf32>
    %74 = vector.extract_strided_slice %1 {offsets = [3, 0], sizes = [1, 1024], strides = [1, 1]} : vector<8x1024xf32> to vector<1x1024xf32>
    %75 = vector.broadcast %74 : vector<1x1024xf32> to vector<8x1024xf32>
    %76 = arith.mulf %73, %75 : vector<8x1024xf32>
    %c1023_i32_24 = arith.constant 1023 : i32
    %77 = tpu.dynamic_rotate %60 by %c1023_i32_24 dim 1 : vector<8x1024xf32>, i32 -> vector<8x1024xf32>
    %78 = vector.extract_strided_slice %1 {offsets = [4, 0], sizes = [1, 1024], strides = [1, 1]} : vector<8x1024xf32> to vector<1x1024xf32>
    %79 = vector.broadcast %78 : vector<1x1024xf32> to vector<8x1024xf32>
    %80 = arith.mulf %77, %79 : vector<8x1024xf32>
    %c1009_i32_25 = arith.constant 1009 : i32
    %81 = tpu.dynamic_rotate %60 by %c1009_i32_25 dim 1 : vector<8x1024xf32>, i32 -> vector<8x1024xf32>
    %82 = vector.extract_strided_slice %1 {offsets = [5, 0], sizes = [1, 1024], strides = [1, 1]} : vector<8x1024xf32> to vector<1x1024xf32>
    %83 = vector.broadcast %82 : vector<1x1024xf32> to vector<8x1024xf32>
    %84 = arith.mulf %81, %83 : vector<8x1024xf32>
    %c1008_i32_26 = arith.constant 1008 : i32
    %85 = tpu.dynamic_rotate %60 by %c1008_i32_26 dim 1 : vector<8x1024xf32>, i32 -> vector<8x1024xf32>
    %86 = vector.extract_strided_slice %1 {offsets = [6, 0], sizes = [1, 1024], strides = [1, 1]} : vector<8x1024xf32> to vector<1x1024xf32>
    %87 = vector.broadcast %86 : vector<1x1024xf32> to vector<8x1024xf32>
    %88 = arith.mulf %85, %87 : vector<8x1024xf32>
    %c1007_i32_27 = arith.constant 1007 : i32
    %89 = tpu.dynamic_rotate %60 by %c1007_i32_27 dim 1 : vector<8x1024xf32>, i32 -> vector<8x1024xf32>
    %90 = vector.extract_strided_slice %1 {offsets = [7, 0], sizes = [1, 1024], strides = [1, 1]} : vector<8x1024xf32> to vector<1x1024xf32>
    %91 = vector.broadcast %90 : vector<1x1024xf32> to vector<8x1024xf32>
    %92 = arith.mulf %89, %91 : vector<8x1024xf32>
    %93 = tpu.concatenate %64, %68, %72, %76, %60, %80, %84, %88, %92 in 0 : vector<8x1024xf32>, vector<8x1024xf32>, vector<8x1024xf32>, vector<8x1024xf32>, vector<8x1024xf32>, vector<8x1024xf32>, vector<8x1024xf32>, vector<8x1024xf32>, vector<8x1024xf32> -> vector<72x1024xf32>
    %c1 = arith.constant 1 : index
    %c0_28 = arith.constant 0 : index
    %c0_29 = arith.constant 0 : index
    %94 = vector.load %arg5[%c1, %c0_28, %c0_29] : memref<3x8x72xf32, #tpu.memory_space<vmem>>, vector<1x8x72xf32>
    %95 = vector.shape_cast %94 : vector<1x8x72xf32> to vector<8x72xf32>
    %cst_30 = arith.constant dense<0.000000e+00> : vector<8x1024xf32>
    %96 = tpu.matmul %95, %93, %cst_30 {dimension_numbers = #tpu.dot_dimension_numbers<[1], [0], [0], [1], [0, 0, 1, 1], [], []>} : vector<8x72xf32>, vector<72x1024xf32>, vector<8x1024xf32> -> vector<8x1024xf32>
    %c1_31 = arith.constant 1 : index
    %c0_32 = arith.constant 0 : index
    %c0_33 = arith.constant 0 : index
    %97 = vector.load %arg6[%c1_31, %c0_32, %c0_33] : memref<3x8x1xf32, #tpu.memory_space<vmem>>, vector<1x8x1xf32>
    %98 = vector.shape_cast %97 : vector<1x8x1xf32> to vector<8x1xf32>
    %99 = vector.broadcast %98 : vector<8x1xf32> to vector<8x1024xf32>
    %100 = arith.addf %96, %99 : vector<8x1024xf32>
    %cst_34 = arith.constant 0.000000e+00 : f32
    %101 = vector.broadcast %cst_34 : f32 to vector<8x1024xf32>
    %102 = arith.maximumf %100, %101 : vector<8x1024xf32>
    %103 = vector.extract_strided_slice %9 {offsets = [0, 16], sizes = [32, 8], strides = [1, 1]} : vector<32x32xf32> to vector<32x8xf32>
    %cst_35 = arith.constant dense<0.000000e+00> : vector<32x1024xf32>
    %104 = tpu.matmul %103, %102, %cst_35 {dimension_numbers = #tpu.dot_dimension_numbers<[1], [0], [0], [1], [0, 0, 1, 1], [], []>} : vector<32x8xf32>, vector<8x1024xf32>, vector<32x1024xf32> -> vector<32x1024xf32>
    %105 = arith.addf %58, %104 : vector<32x1024xf32>
    %106 = vector.extract_strided_slice %8 {offsets = [24, 0], sizes = [8, 1024], strides = [1, 1]} : vector<32x1024xf32> to vector<8x1024xf32>
    %107 = arith.addf %106, %102 : vector<8x1024xf32>
    %c17_i32_36 = arith.constant 17 : i32
    %108 = tpu.dynamic_rotate %107 by %c17_i32_36 dim 1 : vector<8x1024xf32>, i32 -> vector<8x1024xf32>
    %109 = vector.extract_strided_slice %1 {offsets = [0, 0], sizes = [1, 1024], strides = [1, 1]} : vector<8x1024xf32> to vector<1x1024xf32>
    %110 = vector.broadcast %109 : vector<1x1024xf32> to vector<8x1024xf32>
    %111 = arith.mulf %108, %110 : vector<8x1024xf32>
    %c16_i32_37 = arith.constant 16 : i32
    %112 = tpu.dynamic_rotate %107 by %c16_i32_37 dim 1 : vector<8x1024xf32>, i32 -> vector<8x1024xf32>
    %113 = vector.extract_strided_slice %1 {offsets = [1, 0], sizes = [1, 1024], strides = [1, 1]} : vector<8x1024xf32> to vector<1x1024xf32>
    %114 = vector.broadcast %113 : vector<1x1024xf32> to vector<8x1024xf32>
    %115 = arith.mulf %112, %114 : vector<8x1024xf32>
    %c15_i32_38 = arith.constant 15 : i32
    %116 = tpu.dynamic_rotate %107 by %c15_i32_38 dim 1 : vector<8x1024xf32>, i32 -> vector<8x1024xf32>
    %117 = vector.extract_strided_slice %1 {offsets = [2, 0], sizes = [1, 1024], strides = [1, 1]} : vector<8x1024xf32> to vector<1x1024xf32>
    %118 = vector.broadcast %117 : vector<1x1024xf32> to vector<8x1024xf32>
    %119 = arith.mulf %116, %118 : vector<8x1024xf32>
    %c1_i32_39 = arith.constant 1 : i32
    %120 = tpu.dynamic_rotate %107 by %c1_i32_39 dim 1 : vector<8x1024xf32>, i32 -> vector<8x1024xf32>
    %121 = vector.extract_strided_slice %1 {offsets = [3, 0], sizes = [1, 1024], strides = [1, 1]} : vector<8x1024xf32> to vector<1x1024xf32>
    %122 = vector.broadcast %121 : vector<1x1024xf32> to vector<8x1024xf32>
    %123 = arith.mulf %120, %122 : vector<8x1024xf32>
    %c1023_i32_40 = arith.constant 1023 : i32
    %124 = tpu.dynamic_rotate %107 by %c1023_i32_40 dim 1 : vector<8x1024xf32>, i32 -> vector<8x1024xf32>
    %125 = vector.extract_strided_slice %1 {offsets = [4, 0], sizes = [1, 1024], strides = [1, 1]} : vector<8x1024xf32> to vector<1x1024xf32>
    %126 = vector.broadcast %125 : vector<1x1024xf32> to vector<8x1024xf32>
    %127 = arith.mulf %124, %126 : vector<8x1024xf32>
    %c1009_i32_41 = arith.constant 1009 : i32
    %128 = tpu.dynamic_rotate %107 by %c1009_i32_41 dim 1 : vector<8x1024xf32>, i32 -> vector<8x1024xf32>
    %129 = vector.extract_strided_slice %1 {offsets = [5, 0], sizes = [1, 1024], strides = [1, 1]} : vector<8x1024xf32> to vector<1x1024xf32>
    %130 = vector.broadcast %129 : vector<1x1024xf32> to vector<8x1024xf32>
    %131 = arith.mulf %128, %130 : vector<8x1024xf32>
    %c1008_i32_42 = arith.constant 1008 : i32
    %132 = tpu.dynamic_rotate %107 by %c1008_i32_42 dim 1 : vector<8x1024xf32>, i32 -> vector<8x1024xf32>
    %133 = vector.extract_strided_slice %1 {offsets = [6, 0], sizes = [1, 1024], strides = [1, 1]} : vector<8x1024xf32> to vector<1x1024xf32>
    %134 = vector.broadcast %133 : vector<1x1024xf32> to vector<8x1024xf32>
    %135 = arith.mulf %132, %134 : vector<8x1024xf32>
    %c1007_i32_43 = arith.constant 1007 : i32
    %136 = tpu.dynamic_rotate %107 by %c1007_i32_43 dim 1 : vector<8x1024xf32>, i32 -> vector<8x1024xf32>
    %137 = vector.extract_strided_slice %1 {offsets = [7, 0], sizes = [1, 1024], strides = [1, 1]} : vector<8x1024xf32> to vector<1x1024xf32>
    %138 = vector.broadcast %137 : vector<1x1024xf32> to vector<8x1024xf32>
    %139 = arith.mulf %136, %138 : vector<8x1024xf32>
    %140 = tpu.concatenate %111, %115, %119, %123, %107, %127, %131, %135, %139 in 0 : vector<8x1024xf32>, vector<8x1024xf32>, vector<8x1024xf32>, vector<8x1024xf32>, vector<8x1024xf32>, vector<8x1024xf32>, vector<8x1024xf32>, vector<8x1024xf32>, vector<8x1024xf32> -> vector<72x1024xf32>
    %c2 = arith.constant 2 : index
    %c0_44 = arith.constant 0 : index
    %c0_45 = arith.constant 0 : index
    %141 = vector.load %arg5[%c2, %c0_44, %c0_45] : memref<3x8x72xf32, #tpu.memory_space<vmem>>, vector<1x8x72xf32>
    %142 = vector.shape_cast %141 : vector<1x8x72xf32> to vector<8x72xf32>
    %cst_46 = arith.constant dense<0.000000e+00> : vector<8x1024xf32>
    %143 = tpu.matmul %142, %140, %cst_46 {dimension_numbers = #tpu.dot_dimension_numbers<[1], [0], [0], [1], [0, 0, 1, 1], [], []>} : vector<8x72xf32>, vector<72x1024xf32>, vector<8x1024xf32> -> vector<8x1024xf32>
    %c2_47 = arith.constant 2 : index
    %c0_48 = arith.constant 0 : index
    %c0_49 = arith.constant 0 : index
    %144 = vector.load %arg6[%c2_47, %c0_48, %c0_49] : memref<3x8x1xf32, #tpu.memory_space<vmem>>, vector<1x8x1xf32>
    %145 = vector.shape_cast %144 : vector<1x8x1xf32> to vector<8x1xf32>
    %146 = vector.broadcast %145 : vector<8x1xf32> to vector<8x1024xf32>
    %147 = arith.addf %143, %146 : vector<8x1024xf32>
    %cst_50 = arith.constant 0.000000e+00 : f32
    %148 = vector.broadcast %cst_50 : f32 to vector<8x1024xf32>
    %149 = arith.maximumf %147, %148 : vector<8x1024xf32>
    %150 = vector.extract_strided_slice %9 {offsets = [0, 24], sizes = [32, 8], strides = [1, 1]} : vector<32x32xf32> to vector<32x8xf32>
    %cst_51 = arith.constant dense<0.000000e+00> : vector<32x1024xf32>
    %151 = tpu.matmul %150, %149, %cst_51 {dimension_numbers = #tpu.dot_dimension_numbers<[1], [0], [0], [1], [0, 0, 1, 1], [], []>} : vector<32x8xf32>, vector<8x1024xf32>, vector<32x1024xf32> -> vector<32x1024xf32>
    %152 = arith.addf %105, %151 : vector<32x1024xf32>
    %c0_52 = arith.constant 0 : index
    %c0_53 = arith.constant 0 : index
    %153 = vector.load %arg8[%c0_52, %c0_53] : memref<32x1xf32, #tpu.memory_space<vmem>>, vector<32x1xf32>
    %154 = vector.broadcast %153 : vector<32x1xf32> to vector<32x1024xf32>
    %155 = arith.addf %152, %154 : vector<32x1024xf32>
    %156 = arith.addf %155, %0 : vector<32x1024xf32>
    %cst_54 = arith.constant 0.000000e+00 : f32
    %157 = vector.broadcast %cst_54 : f32 to vector<32x1024xf32>
    %158 = arith.maximumf %156, %157 : vector<32x1024xf32>
    %c0_55 = arith.constant 0 : index
    %c0_56 = arith.constant 0 : index
    %159 = vector.load %arg9[%c0_55, %c0_56] : memref<32x1024xf32, #tpu.memory_space<vmem>>, vector<32x1024xf32>
    tpu.vector_store %arg9[%c0_55, %c0_56], %158 {strides = array<i32>} : memref<32x1024xf32, #tpu.memory_space<vmem>>, vector<32x1024xf32>,
    return
  }
  func.func @transform_0(%arg0: i32) -> (i32, i32) {
    %c0_i32 = arith.constant 0 : i32
    %c0_i32_0 = arith.constant 0 : i32
    return %c0_i32, %arg0 : i32, i32
  }
  func.func @transform_1(%arg0: i32) -> (i32, i32) {
    %c0_i32 = arith.constant 0 : i32
    %c0_i32_0 = arith.constant 0 : i32
    %c0_i32_1 = arith.constant 0 : i32
    return %c0_i32, %c0_i32_0 : i32, i32
  }
  func.func @transform_2(%arg0: i32) -> (i32, i32) {
    %c0_i32 = arith.constant 0 : i32
    %c0_i32_0 = arith.constant 0 : i32
    %c0_i32_1 = arith.constant 0 : i32
    return %c0_i32, %c0_i32_0 : i32, i32
  }
  func.func @transform_3(%arg0: i32) -> (i32, i32) {
    %c0_i32 = arith.constant 0 : i32
    %c0_i32_0 = arith.constant 0 : i32
    %c0_i32_1 = arith.constant 0 : i32
    return %c0_i32, %c0_i32_0 : i32, i32
  }
  func.func @transform_4(%arg0: i32) -> (i32, i32, i32) {
    %c0_i32 = arith.constant 0 : i32
    %c0_i32_0 = arith.constant 0 : i32
    %c0_i32_1 = arith.constant 0 : i32
    %c0_i32_2 = arith.constant 0 : i32
    return %c0_i32, %c0_i32_0, %c0_i32_1 : i32, i32, i32
  }
  func.func @transform_5(%arg0: i32) -> (i32, i32, i32) {
    %c0_i32 = arith.constant 0 : i32
    %c0_i32_0 = arith.constant 0 : i32
    %c0_i32_1 = arith.constant 0 : i32
    %c0_i32_2 = arith.constant 0 : i32
    return %c0_i32, %c0_i32_0, %c0_i32_1 : i32, i32, i32
  }
  func.func @transform_6(%arg0: i32) -> (i32, i32) {
    %c0_i32 = arith.constant 0 : i32
    %c0_i32_0 = arith.constant 0 : i32
    %c0_i32_1 = arith.constant 0 : i32
    return %c0_i32, %c0_i32_0 : i32, i32
  }
  func.func @transform_7(%arg0: i32) -> (i32, i32) {
    %c0_i32 = arith.constant 0 : i32
    %c0_i32_0 = arith.constant 0 : i32
    %c0_i32_1 = arith.constant 0 : i32
    return %c0_i32, %c0_i32_0 : i32, i32
  }
  func.func @transform_8(%arg0: i32) -> (i32, i32) {
    %c0_i32 = arith.constant 0 : i32
    %c0_i32_0 = arith.constant 0 : i32
    return %c0_i32, %arg0 : i32, i32
  }
}

</mosaic_0001>

<llo_original>
// kernel: tpu_custom_call.1
$region0: #{tpu_custom_call.1}
  #allocation0 [shape = 'u32[]', space=smem, size = 0x4, offset = 0x4, fixed_abs, tag = 'smem constant byte address 0x4 - core index']
  #allocation1 [shape = 'u32[144,128]{1,0:T(1,128)}', space=vmem, size = 0x12000, scoped, tag = 'internal scratch']
  %s0 = inlined_call_operand.hbm [shape: f32[32,2048], index: 0, kind: input, shape index: {}]
  %s1 = inlined_call_operand.vmem [shape: f32[8,1024], index: 1, kind: input, shape index: {}]
  %s2 = inlined_call_operand.vmem [shape: f32[32,32], index: 2, kind: input, shape index: {}]
  %s3 = inlined_call_operand.vmem [shape: f32[32,1], index: 3, kind: input, shape index: {}]
  %s4 = inlined_call_operand.hbm [shape: f32[3,8,72], index: 4, kind: input, shape index: {}]
  %s5 = inlined_call_operand.vmem [shape: f32[3,8,1], index: 5, kind: input, shape index: {}]
  %s6 = inlined_call_operand.hbm [shape: f32[32,32], index: 6, kind: input, shape index: {}]
  %s7 = inlined_call_operand.vmem [shape: f32[32,1], index: 7, kind: input, shape index: {}]
  %s8 = inlined_call_operand.hbm [shape: f32[32,2048], index: 8, kind: output, shape index: {}]
  %s9 = sld [smem:[#allocation0]]
  $region77: #{tpu_custom_call.1} parent=0
    _
  %s11 = ssub.s32 1, %s9
  %s12 = scalar_select 0, %s11, %s9
  $region1: #{tpu_custom_call.1} parent=0
    #allocation2 [shape = 'u8[262144]{0}', space=vmem, size = 0x40000, scoped, tag = 'input window, operand 0']
    #allocation3 [shape = 's32[2]{0}', space=sflag, size = 0x8, scoped, tag = 'scoped memory for tpu_custom_call.1']
    #allocation4 [shape = 's32[2]{0}', space=sflag, size = 0x8, scoped, tag = 'scoped memory for tpu_custom_call.1']
    #allocation5 [shape = 'u8[12288]{0}', space=vmem, size = 0x3000, scoped, tag = 'input window, operand 4, single buffered']
    #allocation6 [shape = 's32[1]{0}', space=sflag, size = 0x4, scoped, tag = 'scoped memory for tpu_custom_call.1']
    #allocation7 [shape = 'u8[16384]{0}', space=vmem, size = 0x4000, scoped, tag = 'input window, operand 6, single buffered']
    #allocation8 [shape = 'u8[262144]{0}', space=vmem, size = 0x40000, scoped, tag = 'output window, operand 0']
    %13 = vsyncpa [#allocation3], 0
    %s14 = scalar_lea.sflag [#allocation3], 1
    %15 = vsyncpa %s14, 0
    %16 = vsyncpa [#allocation6], 0
    %17 = vsyncpa [#allocation4], 0
    %s18 = scalar_lea.sflag [#allocation4], 1
    %19 = vsyncpa %s18, 0
    loop: start=0, step=1, limit=4
    $region2: #{tpu_custom_call.1} parent=1 // loop_pre_header
      _
    $region3: #{tpu_custom_call.1} parent=1 // loop_header
      %s21 = sphi 0, %s25
      %p22 = scmp.ge.s32.totalorder %s21, 4
      %s31 = sphi 0, %s33
      %s34 = sphi 0, %s31
      %s35 = sphi 0, %s34
      %s51 = sphi 0, %s35
      %s55 = sphi 0, %s55
      %s57 = sphi 0, %s55
      %s58 = sphi 0, %s57
      %s72 = sphi 0, %s58
      %s76 = sphi 0, %s76
      %s78 = sphi 0, %s76
      %s79 = sphi 0, %s78
      %s93 = sphi 0, %s79
      %s97 = sphi 0, %s97
      %s99 = sphi 0, %s97
      %s100 = sphi 0, %s99
      %s114 = sphi 0, %s100
      %s118 = sphi 0, %s118
      %s120 = sphi 0, %s118
      %s121 = sphi 0, %s120
      %s135 = sphi 0, %s121
      %s139 = sphi 0, %s139
      %s141 = sphi 0, %s139
      %s142 = sphi 0, %s141
      %s156 = sphi 0, %s142
      %s160 = sphi 0, %s160
      %s162 = sphi 0, %s160
      %s163 = sphi 0, %s162
      %s177 = sphi 0, %s163
      %s181 = sphi 0, %s181
      %s183 = sphi 0, %s181
      %s184 = sphi 0, %s183
      %s198 = sphi 0, %s184
      %s204 = sphi 0, %s206
      %s207 = sphi 0, %s204
      %s208 = sphi 0, %s207
      %s224 = sphi 0, %s208
    $region4: #{tpu_custom_call.1} parent=1 // loop_header_branch
      %24 = sbr.rel (%p22) target = $region8
    $region5: #{tpu_custom_call.1} parent=1 // loop_body
      %s26 = ssub.s32 %s21, 1
      %s27 = ssub.s32 %s21, 2
      %s28 = sadd.s32 %s21, 1
      %s29 = ssub.s32 %s21, %s28
      %p30 = scmp.eq.s32.totalorder %s29, 0
      %s32 = sadd.s32 %s31, 1
      %s33 = scalar_select %p30, %s31, %s32
      %p36 = pneg %p30
      %p37 = scmp.eq.s32.totalorder %s21, 1
      %p38 = por %p36, %p37
      %p39 = scmp.ne.s32.totalorder %s31, %s34
      %p40 = scmp.eq.s32.totalorder %s21, 0
      %p41 = por %p39, %p40
      %p42 = scmp.ne.s32.totalorder %s31, %s34
      %p43 = scmp.eq.s32.totalorder %s26, 1
      %p44 = por %p42, %p43
      %p45 = scmp.ne.s32.totalorder %s34, %s35
      %p46 = scmp.eq.s32.totalorder %s26, 0
      %p47 = por %p45, %p46
      %p48 = scmp.ne.s32.totalorder %s34, %s35
      %p49 = scmp.eq.s32.totalorder %s27, 1
      %p50 = por %p48, %p49
      %p52 = scmp.ne.s32.totalorder %s35, %s51
      %p53 = scmp.eq.s32.totalorder %s27, 0
      %p54 = por %p52, %p53
      %s56 = sadd.s32 %s55, 1
      %p59 = scmp.eq.s32.totalorder %s21, 1
      %p60 = scmp.ne.s32.totalorder %s55, %s57
      %p61 = scmp.eq.s32.totalorder %s21, 0
      %p62 = por %p60, %p61
      %p63 = scmp.ne.s32.totalorder %s55, %s57
      %p64 = scmp.eq.s32.totalorder %s26, 1
      %p65 = por %p63, %p64
      %p66 = scmp.ne.s32.totalorder %s57, %s58
      %p67 = scmp.eq.s32.totalorder %s26, 0
      %p68 = por %p66, %p67
      %p69 = scmp.ne.s32.totalorder %s57, %s58
      %p70 = scmp.eq.s32.totalorder %s27, 1
      %p71 = por %p69, %p70
      %p73 = scmp.ne.s32.totalorder %s58, %s72
      %p74 = scmp.eq.s32.totalorder %s27, 0
      %p75 = por %p73, %p74
      %s77 = sadd.s32 %s76, 1
      %p80 = scmp.eq.s32.totalorder %s21, 1
      %p81 = scmp.ne.s32.totalorder %s76, %s78
      %p82 = scmp.eq.s32.totalorder %s21, 0
      %p83 = por %p81, %p82
      %p84 = scmp.ne.s32.totalorder %s76, %s78
      %p85 = scmp.eq.s32.totalorder %s26, 1
      %p86 = por %p84, %p85
      %p87 = scmp.ne.s32.totalorder %s78, %s79
      %p88 = scmp.eq.s32.totalorder %s26, 0
      %p89 = por %p87, %p88
      %p90 = scmp.ne.s32.totalorder %s78, %s79
      %p91 = scmp.eq.s32.totalorder %s27, 1
      %p92 = por %p90, %p91
      %p94 = scmp.ne.s32.totalorder %s79, %s93
      %p95 = scmp.eq.s32.totalorder %s27, 0
      %p96 = por %p94, %p95
      %s98 = sadd.s32 %s97, 1
      %p101 = scmp.eq.s32.totalorder %s21, 1
      %p102 = scmp.ne.s32.totalorder %s97, %s99
      %p103 = scmp.eq.s32.totalorder %s21, 0
      %p104 = por %p102, %p103
      %p105 = scmp.ne.s32.totalorder %s97, %s99
      %p106 = scmp.eq.s32.totalorder %s26, 1
      %p107 = por %p105, %p106
      %p108 = scmp.ne.s32.totalorder %s99, %s100
      %p109 = scmp.eq.s32.totalorder %s26, 0
      %p110 = por %p108, %p109
      %p111 = scmp.ne.s32.totalorder %s99, %s100
      %p112 = scmp.eq.s32.totalorder %s27, 1
      %p113 = por %p111, %p112
      %p115 = scmp.ne.s32.totalorder %s100, %s114
      %p116 = scmp.eq.s32.totalorder %s27, 0
      %p117 = por %p115, %p116
      %s119 = sadd.s32 %s118, 1
      %p122 = scmp.eq.s32.totalorder %s21, 1
      %p123 = scmp.ne.s32.totalorder %s118, %s120
      %p124 = scmp.eq.s32.totalorder %s21, 0
      %p125 = por %p123, %p124
      %p126 = scmp.ne.s32.totalorder %s118, %s120
      %p127 = scmp.eq.s32.totalorder %s26, 1
      %p128 = por %p126, %p127
      %p129 = scmp.ne.s32.totalorder %s120, %s121
      %p130 = scmp.eq.s32.totalorder %s26, 0
      %p131 = por %p129, %p130
      %p132 = scmp.ne.s32.totalorder %s120, %s121
      %p133 = scmp.eq.s32.totalorder %s27, 1
      %p134 = por %p132, %p133
      %p136 = scmp.ne.s32.totalorder %s121, %s135
      %p137 = scmp.eq.s32.totalorder %s27, 0
      %p138 = por %p136, %p137
      %s140 = sadd.s32 %s139, 1
      %p143 = scmp.eq.s32.totalorder %s21, 1
      %p144 = scmp.ne.s32.totalorder %s139, %s141
      %p145 = scmp.eq.s32.totalorder %s21, 0
      %p146 = por %p144, %p145
      %p147 = scmp.ne.s32.totalorder %s139, %s141
      %p148 = scmp.eq.s32.totalorder %s26, 1
      %p149 = por %p147, %p148
      %p150 = scmp.ne.s32.totalorder %s141, %s142
      %p151 = scmp.eq.s32.totalorder %s26, 0
      %p152 = por %p150, %p151
      %p153 = scmp.ne.s32.totalorder %s141, %s142
      %p154 = scmp.eq.s32.totalorder %s27, 1
      %p155 = por %p153, %p154
      %p157 = scmp.ne.s32.totalorder %s142, %s156
      %p158 = scmp.eq.s32.totalorder %s27, 0
      %p159 = por %p157, %p158
      %s161 = sadd.s32 %s160, 1
      %p164 = scmp.eq.s32.totalorder %s21, 1
      %p165 = scmp.ne.s32.totalorder %s160, %s162
      %p166 = scmp.eq.s32.totalorder %s21, 0
      %p167 = por %p165, %p166
      %p168 = scmp.ne.s32.totalorder %s160, %s162
      %p169 = scmp.eq.s32.totalorder %s26, 1
      %p170 = por %p168, %p169
      %p171 = scmp.ne.s32.totalorder %s162, %s163
      %p172 = scmp.eq.s32.totalorder %s26, 0
      %p173 = por %p171, %p172
      %p174 = scmp.ne.s32.totalorder %s162, %s163
      %p175 = scmp.eq.s32.totalorder %s27, 1
      %p176 = por %p174, %p175
      %p178 = scmp.ne.s32.totalorder %s163, %s177
      %p179 = scmp.eq.s32.totalorder %s27, 0
      %p180 = por %p178, %p179
      %s182 = sadd.s32 %s181, 1
      %p185 = scmp.eq.s32.totalorder %s21, 1
      %p186 = scmp.ne.s32.totalorder %s181, %s183
      %p187 = scmp.eq.s32.totalorder %s21, 0
      %p188 = por %p186, %p187
      %p189 = scmp.ne.s32.totalorder %s181, %s183
      %p190 = scmp.eq.s32.totalorder %s26, 1
      %p191 = por %p189, %p190
      %p192 = scmp.ne.s32.totalorder %s183, %s184
      %p193 = scmp.eq.s32.totalorder %s26, 0
      %p194 = por %p192, %p193
      %p195 = scmp.ne.s32.totalorder %s183, %s184
      %p196 = scmp.eq.s32.totalorder %s27, 1
      %p197 = por %p195, %p196
      %p199 = scmp.ne.s32.totalorder %s184, %s198
      %p200 = scmp.eq.s32.totalorder %s27, 0
      %p201 = por %p199, %p200
      %s202 = ssub.s32 %s21, %s28
      %p203 = scmp.eq.s32.totalorder %s202, 0
      %s205 = sadd.s32 %s204, 1
      %s206 = scalar_select %p203, %s204, %s205
      %p209 = pneg %p203
      %p210 = scmp.eq.s32.totalorder %s21, 1
      %p211 = por %p209, %p210
      %p212 = scmp.ne.s32.totalorder %s204, %s207
      %p213 = scmp.eq.s32.totalorder %s21, 0
      %p214 = por %p212, %p213
      %p215 = scmp.ne.s32.totalorder %s204, %s207
      %p216 = scmp.eq.s32.totalorder %s26, 1
      %p217 = por %p215, %p216
      %p218 = scmp.ne.s32.totalorder %s207, %s208
      %p219 = scmp.eq.s32.totalorder %s26, 0
      %p220 = por %p218, %p219
      %p221 = scmp.ne.s32.totalorder %s207, %s208
      %p222 = scmp.eq.s32.totalorder %s27, 1
      %p223 = por %p221, %p222
      %p225 = scmp.ne.s32.totalorder %s208, %s224
      %p226 = scmp.eq.s32.totalorder %s27, 0
      %p227 = por %p225, %p226
      %p228 = scmp.le.s32.totalorder 1, %s21
      %p229 = scmp.lt.s32.totalorder %s21, 3
      %p230 = pnand %p228, %p229
      %p231 = pneg %p230
      // Predicated region
      $region9: #{tpu_custom_call.1} parent=5 // pred_check
        _
      $region10: #{tpu_custom_call.1} parent=5 // pred_check_branch
        %233 = sbr.rel (%p230) target = $region12
      $region11: #{tpu_custom_call.1} parent=5 // pred_region
        %s234 = ssub.s32 %s21, 1
        // Predicated region
        $region13: #{tpu_custom_call.1} parent=11 // pred_check
          %p235 = pneg %p68
        $region14: #{tpu_custom_call.1} parent=11 // pred_check_branch
          %237 = sbr.rel (%p235) target = $region16
        $region15: #{tpu_custom_call.1} parent=11 // pred_region
          _
        $region16: #{tpu_custom_call.1} parent=11 // pred_fallthru
          _
        // Predicated region
        $region17: #{tpu_custom_call.1} parent=11 // pred_check
          %p238 = pneg %p89
        $region18: #{tpu_custom_call.1} parent=11 // pred_check_branch
          %240 = sbr.rel (%p238) target = $region20
        $region19: #{tpu_custom_call.1} parent=11 // pred_region
          _
        $region20: #{tpu_custom_call.1} parent=11 // pred_fallthru
          _
        // Predicated region
        $region21: #{tpu_custom_call.1} parent=11 // pred_check
          %p241 = pneg %p110
        $region22: #{tpu_custom_call.1} parent=11 // pred_check_branch
          %243 = sbr.rel (%p241) target = $region24
        $region23: #{tpu_custom_call.1} parent=11 // pred_region
          _
        $region24: #{tpu_custom_call.1} parent=11 // pred_fallthru
          _
        // Predicated region
        $region25: #{tpu_custom_call.1} parent=11 // pred_check
          %p244 = pneg %p131
        $region26: #{tpu_custom_call.1} parent=11 // pred_check_branch
          %246 = sbr.rel (%p244) target = $region28
        $region27: #{tpu_custom_call.1} parent=11 // pred_region
          %s248 = ssub.s32 384, 384
          %249 = vsyncadd [#allocation6], %s248
          %s250 = sshll.u32 [#allocation5], 4
          %s251 = int_to_ptr.vmem [resolvable:$true] %s250
          %256 = dma.hbm_to_vmem [thread:$0]  %s4, 384, %s251, [#allocation6], 128, 128, 8
        $region28: #{tpu_custom_call.1} parent=11 // pred_fallthru
          _
        // Predicated region
        $region29: #{tpu_custom_call.1} parent=11 // pred_check
          %p257 = pneg %p152
        $region30: #{tpu_custom_call.1} parent=11 // pred_check_branch
          %259 = sbr.rel (%p257) target = $region32
        $region31: #{tpu_custom_call.1} parent=11 // pred_region
          _
        $region32: #{tpu_custom_call.1} parent=11 // pred_fallthru
          _
        // Predicated region
        $region33: #{tpu_custom_call.1} parent=11 // pred_check
          %p260 = pneg %p173
        $region34: #{tpu_custom_call.1} parent=11 // pred_check_branch
          %262 = sbr.rel (%p260) target = $region36
        $region35: #{tpu_custom_call.1} parent=11 // pred_region
          %s264 = ssub.s32 512, 512
          %265 = vsyncadd [#allocation6], %s264
          %s266 = sshll.u32 [#allocation7], 4
          %s267 = int_to_ptr.vmem [resolvable:$true] %s266
          %272 = dma.hbm_to_vmem [thread:$0]  %s6, 512, %s267, [#allocation6], 128, 128, 8
        $region36: #{tpu_custom_call.1} parent=11 // pred_fallthru
          _
        // Predicated region
        $region37: #{tpu_custom_call.1} parent=11 // pred_check
          %p273 = pneg %p194
        $region38: #{tpu_custom_call.1} parent=11 // pred_check_branch
          %275 = sbr.rel (%p273) target = $region40
        $region39: #{tpu_custom_call.1} parent=11 // pred_region
          _
        $region40: #{tpu_custom_call.1} parent=11 // pred_fallthru
          _
      $region12: #{tpu_custom_call.1} parent=5 // pred_fallthru
        _
      %p276 = scmp.lt.s32.totalorder %s21, 2
      // Predicated region
      $region41: #{tpu_custom_call.1} parent=5 // pred_check
        %p277 = pneg %p276
      $region42: #{tpu_custom_call.1} parent=5 // pred_check_branch
        %279 = sbr.rel (%p277) target = $region44
      $region43: #{tpu_custom_call.1} parent=5 // pred_region
        // Predicated region
        $region45: #{tpu_custom_call.1} parent=43 // pred_check
          %p280 = pneg %p41
        $region46: #{tpu_custom_call.1} parent=43 // pred_check_branch
          %282 = sbr.rel (%p280) target = $region48
        $region47: #{tpu_custom_call.1} parent=43 // pred_region
          %s283 = sand.u32 %s31, 1
          %s284 = scalar_lea.sflag [#allocation3], %s283
          %s285 = sand.u32 %s31, 1
          %s286 = smul.addr %s285, 256
          %s287 = scalar_lea.vmem [#allocation2], %s286
          %s288 = smul.u32 8, %s21
          %s290 = ssub.s32 4096, 4096
          %291 = vsyncadd %s284, %s290
          %s292 = smul.addr %s288, 128
          %s293 = scalar_lea.hbm %s0, %s292
          %s294 = sshll.u32 %s287, 4
          %s295 = int_to_ptr.vmem [resolvable:$true] %s294
          %300 = dma.hbm_to_vmem [thread:$0]  %s293, 4096, %s295, %s284, 2048, 1024, 64
        $region48: #{tpu_custom_call.1} parent=43 // pred_fallthru
          _
      $region44: #{tpu_custom_call.1} parent=5 // pred_fallthru
        _
      %p301 = scmp.le.s32.totalorder 1, %s21
      %p302 = scmp.lt.s32.totalorder %s21, 3
      %p303 = pnand %p301, %p302
      %p304 = pneg %p303
      // Predicated region
      $region49: #{tpu_custom_call.1} parent=5 // pred_check
        _
      $region50: #{tpu_custom_call.1} parent=5 // pred_check_branch
        %306 = sbr.rel (%p303) target = $region52
      $region51: #{tpu_custom_call.1} parent=5 // pred_region
        %s307 = ssub.s32 %s21, 1
        %s308 = sand.u32 %s34, 1
        %s309 = scalar_lea.sflag [#allocation3], %s308
        %s310 = sand.u32 %s34, 1
        %s311 = smul.addr %s310, 256
        %s312 = scalar_lea.vmem [#allocation2], %s311
        // Predicated region
        $region53: #{tpu_custom_call.1} parent=51 // pred_check
          %p313 = pneg %p47
        $region54: #{tpu_custom_call.1} parent=51 // pred_check_branch
          %315 = sbr.rel (%p313) target = $region56
        $region55: #{tpu_custom_call.1} parent=51 // pred_region
          %316 = dma.done %s309, 4096
        $region56: #{tpu_custom_call.1} parent=51 // pred_fallthru
          _
        // Predicated region
        $region57: #{tpu_custom_call.1} parent=51 // pred_check
          %p317 = pneg %p131
        $region58: #{tpu_custom_call.1} parent=51 // pred_check_branch
          %319 = sbr.rel (%p317) target = $region60
        $region59: #{tpu_custom_call.1} parent=51 // pred_region
          %320 = dma.done [#allocation6], 384
        $region60: #{tpu_custom_call.1} parent=51 // pred_fallthru
          _
        // Predicated region
        $region61: #{tpu_custom_call.1} parent=51 // pred_check
          %p321 = pneg %p173
        $region62: #{tpu_custom_call.1} parent=51 // pred_check_branch
          %323 = sbr.rel (%p321) target = $region64
        $region63: #{tpu_custom_call.1} parent=51 // pred_region
          %324 = dma.done [#allocation6], 512
        $region64: #{tpu_custom_call.1} parent=51 // pred_fallthru
          _
        %s325 = sand.u32 %s34, 1
        %s326 = scalar_lea.sflag [#allocation3], %s325
        %s327 = sand.u32 %s34, 1
        %s328 = smul.addr %s327, 256
        %s329 = scalar_lea.vmem [#allocation2], %s328
        %p330 = pneg %p47
        %p331 = pneg %p44
        %p332 = pneg %p68
        %p333 = pneg %p65
        %p334 = pneg %p89
        %p335 = pneg %p86
        %p336 = pneg %p110
        %p337 = pneg %p107
        %p338 = pneg %p131
        %p339 = pneg %p128
        %p340 = pneg %p152
        %p341 = pneg %p149
        %p342 = pneg %p173
        %p343 = pneg %p170
        %p344 = pneg %p194
        %p345 = pneg %p191
        %p346 = pneg %p220
        %p347 = pneg %p217
        %s348 = sand.u32 %s207, 1
        %s349 = scalar_lea.sflag [#allocation4], %s348
        %s350 = sand.u32 %s207, 1
        %s351 = smul.addr %s350, 256
        %s352 = scalar_lea.vmem [#allocation8], %s351
        %s353 = smul.u32 8, %s26
        %s354 = smul.u32 8, %s26
        %v355 = vld [vmem:[%s312] sm:$0xff]
        %v356 = vld [vmem:[%s312 + $0x8] sm:$0xff]
        %v357 = vld [vmem:[%s312 + $0x10] sm:$0xff]
        %v358 = vld [vmem:[%s312 + $0x18] sm:$0xff]
        %v359 = vld [vmem:[%s312 + $0x20] sm:$0xff]
        %v360 = vld [vmem:[%s312 + $0x28] sm:$0xff]
        %v361 = vld [vmem:[%s312 + $0x30] sm:$0xff]
        %v362 = vld [vmem:[%s312 + $0x38] sm:$0xff]
        %v363 = vld [vmem:[%s312 + $0x40] sm:$0xff]
        %v364 = vld [vmem:[%s312 + $0x48] sm:$0xff]
        %v365 = vld [vmem:[%s312 + $0x50] sm:$0xff]
        %v366 = vld [vmem:[%s312 + $0x58] sm:$0xff]
        %v367 = vld [vmem:[%s312 + $0x60] sm:$0xff]
        %v368 = vld [vmem:[%s312 + $0x68] sm:$0xff]
        %v369 = vld [vmem:[%s312 + $0x70] sm:$0xff]
        %v370 = vld [vmem:[%s312 + $0x78] sm:$0xff]
        %v371 = vld [vmem:[%s312 + $0x80] sm:$0xff]
        %v372 = vld [vmem:[%s312 + $0x88] sm:$0xff]
        %v373 = vld [vmem:[%s312 + $0x90] sm:$0xff]
        %v374 = vld [vmem:[%s312 + $0x98] sm:$0xff]
        %v375 = vld [vmem:[%s312 + $0xa0] sm:$0xff]
        %v376 = vld [vmem:[%s312 + $0xa8] sm:$0xff]
        %v377 = vld [vmem:[%s312 + $0xb0] sm:$0xff]
        %v378 = vld [vmem:[%s312 + $0xb8] sm:$0xff]
        %v379 = vld [vmem:[%s312 + $0xc0] sm:$0xff]
        %v380 = vld [vmem:[%s312 + $0xc8] sm:$0xff]
        %v381 = vld [vmem:[%s312 + $0xd0] sm:$0xff]
        %v382 = vld [vmem:[%s312 + $0xd8] sm:$0xff]
        %v383 = vld [vmem:[%s312 + $0xe0] sm:$0xff]
        %v384 = vld [vmem:[%s312 + $0xe8] sm:$0xff]
        %v385 = vld [vmem:[%s312 + $0xf0] sm:$0xff]
        %v386 = vld [vmem:[%s312 + $0xf8] sm:$0xff]
        %v387 = vld [vmem:[%s1] sm:$0xff]
        %v388 = vld [vmem:[%s1 + $0x8] sm:$0xff]
        %v389 = vld [vmem:[%s1 + $0x10] sm:$0xff]
        %v390 = vld [vmem:[%s1 + $0x18] sm:$0xff]
        %v391 = vld [vmem:[%s1 + $0x20] sm:$0xff]
        %v392 = vld [vmem:[%s1 + $0x28] sm:$0xff]
        %v393 = vld [vmem:[%s1 + $0x30] sm:$0xff]
        %v394 = vld [vmem:[%s1 + $0x38] sm:$0xff]
        %v395 = vld [vmem:[%s2] sm:$0xff]
        %v396 = vld [vmem:[%s2 + $0x8] sm:$0xff]
        %v397 = vld [vmem:[%s2 + $0x10] sm:$0xff]
        %v398 = vld [vmem:[%s2 + $0x18] sm:$0xff]
        %v399 = vld [vmem:[%s3] sm:$0xff]
        %v400 = vld [vmem:[%s3 + $0x8] sm:$0xff]
        %v401 = vld [vmem:[%s3 + $0x10] sm:$0xff]
        %v402 = vld [vmem:[%s3 + $0x18] sm:$0xff]
        %404 = vset.pattern.permute.xlu0 0
        %405 = vperm.xlu0 %404, %v399
        %v406 = vpop.permute.xlu0 %405
        %409 = vset.pattern.permute.xlu0 0
        %410 = vperm.xlu0 %409, %v400
        %v411 = vpop.permute.xlu0 %410
        %414 = vset.pattern.permute.xlu0 0
        %415 = vperm.xlu0 %414, %v401
        %v416 = vpop.permute.xlu0 %415
        %419 = vset.pattern.permute.xlu0 0
        %420 = vperm.xlu0 %419, %v402
        %v421 = vpop.permute.xlu0 %420
        %vm423 = vcmask 261120
        %v425 = vsel %vm423, %v395, 0
        %v428 = vsel %vm423, %v396, 0
        %v431 = vsel %vm423, %v397, 0
        %v434 = vsel %vm423, %v398, 0
        %436 = vmatprep.subr.mxu0 %v356
        %437 = vmatpush1.msra.mxu0 %v355
        %438 = vmatprep.subr.mxu0 %v364
        %439 = vmatpush1.msra.mxu0 %v363
        %440 = vmatprep.subr.mxu0 %v372
        %441 = vmatpush1.msra.mxu0 %v371
        %442 = vmatprep.subr.mxu0 %v380
        %443 = vmatpush1.msra.mxu0 %v379
        %444 = vmatprep.subr.mxu0 0.0
        %445 = vmatpush1.msra.mxu0 0.0
        %446 = vmatprep.subr.mxu0 0.0
        %447 = vmatpush1.msra.mxu0 0.0
        %448 = vmatprep.subr.mxu0 0.0
        %449 = vmatpush1.msra.mxu0 0.0
        %450 = vmatprep.subr.mxu0 0.0
        %451 = vmatpush1.msra.mxu0 0.0
        %452 = vmatprep.subr.mxu0 0.0
        %453 = vmatpush1.msra.mxu0 0.0
        %454 = vmatprep.subr.mxu0 0.0
        %455 = vmatpush1.msra.mxu0 0.0
        %456 = vmatprep.subr.mxu0 0.0
        %457 = vmatpush1.msra.mxu0 0.0
        %458 = vmatprep.subr.mxu0 0.0
        %459 = vmatpush1.msra.mxu0 0.0
        %460 = vmatprep.subr.mxu0 0.0
        %461 = vmatpush1.msra.mxu0 0.0
        %462 = vmatprep.subr.mxu0 0.0
        %463 = vmatpush1.msra.mxu0 0.0
        %464 = vmatprep.subr.mxu0 0.0
        %465 = vmatpush1.msra.mxu0 0.0
        %466 = vmatprep.subr.mxu0 0.0
        %467 = vmatpush1.msra.mxu0 0.0
        %468 = vmatprep.subr.mxu0 0.0
        %469 = vmatpush1.msra.mxu0 0.0
        %470 = vmatprep.subr.mxu0 0.0
        %471 = vmatpush1.msra.mxu0 0.0
        %472 = vmatprep.subr.mxu0 0.0
        %473 = vmatpush1.msra.mxu0 0.0
        %474 = vmatprep.subr.mxu0 0.0
        %475 = vmatpush1.msra.mxu0 0.0
        %476 = vmatprep.subr.mxu0 0.0
        %477 = vmatpush1.msra.mxu0 0.0
        %478 = vmatprep.subr.mxu0 0.0
        %479 = vmatpush1.msra.mxu0 0.0
        %480 = vmatprep.subr.mxu0 0.0
        %481 = vmatpush1.msra.mxu0 0.0
        %482 = vmatprep.subr.mxu0 0.0
        %483 = vmatpush1.msra.mxu0 0.0
        %484 = vmatprep.subr.mxu0 0.0
        %485 = vmatpush1.msra.mxu0 0.0
        %486 = vmatprep.subr.mxu0 0.0
        %487 = vmatpush1.msra.mxu0 0.0
        %488 = vmatprep.subr.mxu0 0.0
        %489 = vmatpush1.msra.mxu0 0.0
        %490 = vmatprep.subr.mxu0 0.0
        %491 = vmatpush1.msra.mxu0 0.0
        %492 = vmatprep.subr.mxu0 0.0
        %493 = vmatpush1.msra.mxu0 0.0
        %494 = vmatprep.subr.mxu0 0.0
        %495 = vmatpush1.msra.mxu0 0.0
        %496 = vmatprep.subr.mxu0 0.0
        %497 = vmatpush1.msra.mxu0 0.0
        %498 = vmatprep.subr.mxu0 0.0
        %499 = vmatpush1.msra.mxu0 0.0
        %500 = vmatprep.mubr.f32.mxu0 0.0
        %501 = vmatmul.mubr.f32.gmra.mrb[0].mxu0 %v425
        %v502 = vpop.f32.mrb[0].mxu0
        %v503 = vadd.f32 %v406, %v502
        %v504 = vpop.f32.mrb[0].mxu0
        %v505 = vadd.f32 %v406, %v504
        %506 = vmatprep.mubr.f32.mxu0 0.0
        %507 = vmatmul.mubr.f32.gmra.mrb[0].mxu0 %v428
        %v508 = vpop.f32.mrb[0].mxu0
        %v509 = vadd.f32 %v411, %v508
        %v510 = vpop.f32.mrb[0].mxu0
        %v511 = vadd.f32 %v411, %v510
        %512 = vmatprep.mubr.f32.mxu0 0.0
        %513 = vmatmul.mubr.f32.gmra.mrb[0].mxu0 %v431
        %v514 = vpop.f32.mrb[0].mxu0
        %v515 = vadd.f32 %v416, %v514
        %v516 = vpop.f32.mrb[0].mxu0
        %v517 = vadd.f32 %v416, %v516
        %518 = vmatprep.mubr.f32.mxu0 0.0
        %519 = vmatmul.mubr.f32.gmra.mrb[0].mxu0 %v434
        %v520 = vpop.f32.mrb[0].mxu0
        %v521 = vadd.f32 %v421, %v520
        %v522 = vpop.f32.mrb[0].mxu0
        %v523 = vadd.f32 %v421, %v522
        %524 = vdwg.mxu0
        %525 = vmatprep.subr.mxu0 %v358
        %526 = vmatpush1.msra.mxu0 %v357
        %527 = vmatprep.subr.mxu0 %v366
        %528 = vmatpush1.msra.mxu0 %v365
        %529 = vmatprep.subr.mxu0 %v374
        %530 = vmatpush1.msra.mxu0 %v373
        %531 = vmatprep.subr.mxu0 %v382
        %532 = vmatpush1.msra.mxu0 %v381
        %533 = vmatprep.subr.mxu0 0.0
        %534 = vmatpush1.msra.mxu0 0.0
        %535 = vmatprep.subr.mxu0 0.0
        %536 = vmatpush1.msra.mxu0 0.0
        %537 = vmatprep.subr.mxu0 0.0
        %538 = vmatpush1.msra.mxu0 0.0
        %539 = vmatprep.subr.mxu0 0.0
        %540 = vmatpush1.msra.mxu0 0.0
        %541 = vmatprep.subr.mxu0 0.0
        %542 = vmatpush1.msra.mxu0 0.0
        %543 = vmatprep.subr.mxu0 0.0
        %544 = vmatpush1.msra.mxu0 0.0
        %545 = vmatprep.subr.mxu0 0.0
        %546 = vmatpush1.msra.mxu0 0.0
        %547 = vmatprep.subr.mxu0 0.0
        %548 = vmatpush1.msra.mxu0 0.0
        %549 = vmatprep.subr.mxu0 0.0
        %550 = vmatpush1.msra.mxu0 0.0
        %551 = vmatprep.subr.mxu0 0.0
        %552 = vmatpush1.msra.mxu0 0.0
        %553 = vmatprep.subr.mxu0 0.0
        %554 = vmatpush1.msra.mxu0 0.0
        %555 = vmatprep.subr.mxu0 0.0
        %556 = vmatpush1.msra.mxu0 0.0
        %557 = vmatprep.subr.mxu0 0.0
        %558 = vmatpush1.msra.mxu0 0.0
        %559 = vmatprep.subr.mxu0 0.0
        %560 = vmatpush1.msra.mxu0 0.0
        %561 = vmatprep.subr.mxu0 0.0
        %562 = vmatpush1.msra.mxu0 0.0
        %563 = vmatprep.subr.mxu0 0.0
        %564 = vmatpush1.msra.mxu0 0.0
        %565 = vmatprep.subr.mxu0 0.0
        %566 = vmatpush1.msra.mxu0 0.0
        %567 = vmatprep.subr.mxu0 0.0
        %568 = vmatpush1.msra.mxu0 0.0
        %569 = vmatprep.subr.mxu0 0.0
        %570 = vmatpush1.msra.mxu0 0.0
        %571 = vmatprep.subr.mxu0 0.0
        %572 = vmatpush1.msra.mxu0 0.0
        %573 = vmatprep.subr.mxu0 0.0
        %574 = vmatpush1.msra.mxu0 0.0
        %575 = vmatprep.subr.mxu0 0.0
        %576 = vmatpush1.msra.mxu0 0.0
        %577 = vmatprep.subr.mxu0 0.0
        %578 = vmatpush1.msra.mxu0 0.0
        %579 = vmatprep.subr.mxu0 0.0
        %580 = vmatpush1.msra.mxu0 0.0
        %581 = vmatprep.subr.mxu0 0.0
        %582 = vmatpush1.msra.mxu0 0.0
        %583 = vmatprep.subr.mxu0 0.0
        %584 = vmatpush1.msra.mxu0 0.0
        %585 = vmatprep.subr.mxu0 0.0
        %586 = vmatpush1.msra.mxu0 0.0
        %587 = vmatprep.subr.mxu0 0.0
        %588 = vmatpush1.msra.mxu0 0.0
        %589 = vmatprep.mubr.f32.mxu0 0.0
        %590 = vmatmul.mubr.f32.gmra.mrb[0].mxu0 %v425
        %v591 = vpop.f32.mrb[0].mxu0
        %v592 = vadd.f32 %v406, %v591
        %v593 = vpop.f32.mrb[0].mxu0
        %v594 = vadd.f32 %v406, %v593
        %595 = vmatprep.mubr.f32.mxu0 0.0
        %596 = vmatmul.mubr.f32.gmra.mrb[0].mxu0 %v428
        %v597 = vpop.f32.mrb[0].mxu0
        %v598 = vadd.f32 %v411, %v597
        %v599 = vpop.f32.mrb[0].mxu0
        %v600 = vadd.f32 %v411, %v599
        %601 = vmatprep.mubr.f32.mxu0 0.0
        %602 = vmatmul.mubr.f32.gmra.mrb[0].mxu0 %v431
        %v603 = vpop.f32.mrb[0].mxu0
        %v604 = vadd.f32 %v416, %v603
        %v605 = vpop.f32.mrb[0].mxu0
        %v606 = vadd.f32 %v416, %v605
        %607 = vmatprep.mubr.f32.mxu0 0.0
        %608 = vmatmul.mubr.f32.gmra.mrb[0].mxu0 %v434
        %v609 = vpop.f32.mrb[0].mxu0
        %v610 = vadd.f32 %v421, %v609
        %v611 = vpop.f32.mrb[0].mxu0
        %v612 = vadd.f32 %v421, %v611
        %613 = vdwg.mxu0
        %614 = vmatprep.subr.mxu0 %v360
        %615 = vmatpush1.msra.mxu0 %v359
        %616 = vmatprep.subr.mxu0 %v368
        %617 = vmatpush1.msra.mxu0 %v367
        %618 = vmatprep.subr.mxu0 %v376
        %619 = vmatpush1.msra.mxu0 %v375
        %620 = vmatprep.subr.mxu0 %v384
        %621 = vmatpush1.msra.mxu0 %v383
        %622 = vmatprep.subr.mxu0 0.0
        %623 = vmatpush1.msra.mxu0 0.0
        %624 = vmatprep.subr.mxu0 0.0
        %625 = vmatpush1.msra.mxu0 0.0
        %626 = vmatprep.subr.mxu0 0.0
        %627 = vmatpush1.msra.mxu0 0.0
        %628 = vmatprep.subr.mxu0 0.0
        %629 = vmatpush1.msra.mxu0 0.0
        %630 = vmatprep.subr.mxu0 0.0
        %631 = vmatpush1.msra.mxu0 0.0
        %632 = vmatprep.subr.mxu0 0.0
        %633 = vmatpush1.msra.mxu0 0.0
        %634 = vmatprep.subr.mxu0 0.0
        %635 = vmatpush1.msra.mxu0 0.0
        %636 = vmatprep.subr.mxu0 0.0
        %637 = vmatpush1.msra.mxu0 0.0
        %638 = vmatprep.subr.mxu0 0.0
        %639 = vmatpush1.msra.mxu0 0.0
        %640 = vmatprep.subr.mxu0 0.0
        %641 = vmatpush1.msra.mxu0 0.0
        %642 = vmatprep.subr.mxu0 0.0
        %643 = vmatpush1.msra.mxu0 0.0
        %644 = vmatprep.subr.mxu0 0.0
        %645 = vmatpush1.msra.mxu0 0.0
        %646 = vmatprep.subr.mxu0 0.0
        %647 = vmatpush1.msra.mxu0 0.0
        %648 = vmatprep.subr.mxu0 0.0
        %649 = vmatpush1.msra.mxu0 0.0
        %650 = vmatprep.subr.mxu0 0.0
        %651 = vmatpush1.msra.mxu0 0.0
        %652 = vmatprep.subr.mxu0 0.0
        %653 = vmatpush1.msra.mxu0 0.0
        %654 = vmatprep.subr.mxu0 0.0
        %655 = vmatpush1.msra.mxu0 0.0
        %656 = vmatprep.subr.mxu0 0.0
        %657 = vmatpush1.msra.mxu0 0.0
        %658 = vmatprep.subr.mxu0 0.0
        %659 = vmatpush1.msra.mxu0 0.0
        %660 = vmatprep.subr.mxu0 0.0
        %661 = vmatpush1.msra.mxu0 0.0
        %662 = vmatprep.subr.mxu0 0.0
        %663 = vmatpush1.msra.mxu0 0.0
        %664 = vmatprep.subr.mxu0 0.0
        %665 = vmatpush1.msra.mxu0 0.0
        %666 = vmatprep.subr.mxu0 0.0
        %667 = vmatpush1.msra.mxu0 0.0
        %668 = vmatprep.subr.mxu0 0.0
        %669 = vmatpush1.msra.mxu0 0.0
        %670 = vmatprep.subr.mxu0 0.0
        %671 = vmatpush1.msra.mxu0 0.0
        %672 = vmatprep.subr.mxu0 0.0
        %673 = vmatpush1.msra.mxu0 0.0
        %674 = vmatprep.subr.mxu0 0.0
        %675 = vmatpush1.msra.mxu0 0.0
        %676 = vmatprep.subr.mxu0 0.0
        %677 = vmatpush1.msra.mxu0 0.0
        %678 = vmatprep.mubr.f32.mxu0 0.0
        %679 = vmatmul.mubr.f32.gmra.mrb[0].mxu0 %v425
        %v680 = vpop.f32.mrb[0].mxu0
        %v681 = vadd.f32 %v406, %v680
        %v682 = vpop.f32.mrb[0].mxu0
        %v683 = vadd.f32 %v406, %v682
        %684 = vmatprep.mubr.f32.mxu0 0.0
        %685 = vmatmul.mubr.f32.gmra.mrb[0].mxu0 %v428
        %v686 = vpop.f32.mrb[0].mxu0
        %v687 = vadd.f32 %v411, %v686
        %v688 = vpop.f32.mrb[0].mxu0
        %v689 = vadd.f32 %v411, %v688
        %690 = vmatprep.mubr.f32.mxu0 0.0
        %691 = vmatmul.mubr.f32.gmra.mrb[0].mxu0 %v431
        %v692 = vpop.f32.mrb[0].mxu0
        %v693 = vadd.f32 %v416, %v692
        %v694 = vpop.f32.mrb[0].mxu0
        %v695 = vadd.f32 %v416, %v694
        %696 = vmatprep.mubr.f32.mxu0 0.0
        %697 = vmatmul.mubr.f32.gmra.mrb[0].mxu0 %v434
        %v698 = vpop.f32.mrb[0].mxu0
        %v699 = vadd.f32 %v421, %v698
        %v700 = vpop.f32.mrb[0].mxu0
        %v701 = vadd.f32 %v421, %v700
        %702 = vdwg.mxu0
        %703 = vmatprep.subr.mxu0 %v362
        %704 = vmatpush1.msra.mxu0 %v361
        %705 = vmatprep.subr.mxu0 %v370
        %706 = vmatpush1.msra.mxu0 %v369
        %707 = vmatprep.subr.mxu0 %v378
        %708 = vmatpush1.msra.mxu0 %v377
        %709 = vmatprep.subr.mxu0 %v386
        %710 = vmatpush1.msra.mxu0 %v385
        %711 = vmatprep.subr.mxu0 0.0
        %712 = vmatpush1.msra.mxu0 0.0
        %713 = vmatprep.subr.mxu0 0.0
        %714 = vmatpush1.msra.mxu0 0.0
        %715 = vmatprep.subr.mxu0 0.0
        %716 = vmatpush1.msra.mxu0 0.0
        %717 = vmatprep.subr.mxu0 0.0
        %718 = vmatpush1.msra.mxu0 0.0
        %719 = vmatprep.subr.mxu0 0.0
        %720 = vmatpush1.msra.mxu0 0.0
        %721 = vmatprep.subr.mxu0 0.0
        %722 = vmatpush1.msra.mxu0 0.0
        %723 = vmatprep.subr.mxu0 0.0
        %724 = vmatpush1.msra.mxu0 0.0
        %725 = vmatprep.subr.mxu0 0.0
        %726 = vmatpush1.msra.mxu0 0.0
        %727 = vmatprep.subr.mxu0 0.0
        %728 = vmatpush1.msra.mxu0 0.0
        %729 = vmatprep.subr.mxu0 0.0
        %730 = vmatpush1.msra.mxu0 0.0
        %731 = vmatprep.subr.mxu0 0.0
        %732 = vmatpush1.msra.mxu0 0.0
        %733 = vmatprep.subr.mxu0 0.0
        %734 = vmatpush1.msra.mxu0 0.0
        %735 = vmatprep.subr.mxu0 0.0
        %736 = vmatpush1.msra.mxu0 0.0
        %737 = vmatprep.subr.mxu0 0.0
        %738 = vmatpush1.msra.mxu0 0.0
        %739 = vmatprep.subr.mxu0 0.0
        %740 = vmatpush1.msra.mxu0 0.0
        %741 = vmatprep.subr.mxu0 0.0
        %742 = vmatpush1.msra.mxu0 0.0
        %743 = vmatprep.subr.mxu0 0.0
        %744 = vmatpush1.msra.mxu0 0.0
        %745 = vmatprep.subr.mxu0 0.0
        %746 = vmatpush1.msra.mxu0 0.0
        %747 = vmatprep.subr.mxu0 0.0
        %748 = vmatpush1.msra.mxu0 0.0
        %749 = vmatprep.subr.mxu0 0.0
        %750 = vmatpush1.msra.mxu0 0.0
        %751 = vmatprep.subr.mxu0 0.0
        %752 = vmatpush1.msra.mxu0 0.0
        %753 = vmatprep.subr.mxu0 0.0
        %754 = vmatpush1.msra.mxu0 0.0
        %755 = vmatprep.subr.mxu0 0.0
        %756 = vmatpush1.msra.mxu0 0.0
        %757 = vmatprep.subr.mxu0 0.0
        %758 = vmatpush1.msra.mxu0 0.0
        %759 = vmatprep.subr.mxu0 0.0
        %760 = vmatpush1.msra.mxu0 0.0
        %761 = vmatprep.subr.mxu0 0.0
        %762 = vmatpush1.msra.mxu0 0.0
        %763 = vmatprep.subr.mxu0 0.0
        %764 = vmatpush1.msra.mxu0 0.0
        %765 = vmatprep.subr.mxu0 0.0
        %766 = vmatpush1.msra.mxu0 0.0
        %767 = vmatprep.mubr.f32.mxu0 0.0
        %768 = vmatmul.mubr.f32.gmra.mrb[0].mxu0 %v425
        %v769 = vpop.f32.mrb[0].mxu0
        %v770 = vadd.f32 %v406, %v769
        %v771 = vpop.f32.mrb[0].mxu0
        %v772 = vadd.f32 %v406, %v771
        %773 = vmatprep.mubr.f32.mxu0 0.0
        %774 = vmatmul.mubr.f32.gmra.mrb[0].mxu0 %v428
        %v775 = vpop.f32.mrb[0].mxu0
        %v776 = vadd.f32 %v411, %v775
        %v777 = vpop.f32.mrb[0].mxu0
        %v778 = vadd.f32 %v411, %v777
        %779 = vmatprep.mubr.f32.mxu0 0.0
        %780 = vmatmul.mubr.f32.gmra.mrb[0].mxu0 %v431
        %v781 = vpop.f32.mrb[0].mxu0
        %v782 = vadd.f32 %v416, %v781
        %v783 = vpop.f32.mrb[0].mxu0
        %v784 = vadd.f32 %v416, %v783
        %785 = vmatprep.mubr.f32.mxu0 0.0
        %786 = vmatmul.mubr.f32.gmra.mrb[0].mxu0 %v434
        %v787 = vpop.f32.mrb[0].mxu0
        %v788 = vadd.f32 %v421, %v787
        %v789 = vpop.f32.mrb[0].mxu0
        %v790 = vadd.f32 %v421, %v789
        %791 = vdwg.mxu0
        %v792 = vmax.f32 %v503, 0.0
        %v793 = vmax.f32 %v505, 0.0
        %v794 = vmax.f32 %v592, 0.0
        %v795 = vmax.f32 %v594, 0.0
        %v796 = vmax.f32 %v681, 0.0
        %v797 = vmax.f32 %v683, 0.0
        %v798 = vmax.f32 %v770, 0.0
        %v799 = vmax.f32 %v772, 0.0
        %v800 = vmax.f32 %v509, 0.0
        %v801 = vmax.f32 %v511, 0.0
        %v802 = vmax.f32 %v598, 0.0
        %v803 = vmax.f32 %v600, 0.0
        %v804 = vmax.f32 %v687, 0.0
        %v805 = vmax.f32 %v689, 0.0
        %v806 = vmax.f32 %v776, 0.0
        %v807 = vmax.f32 %v778, 0.0
        %v808 = vmax.f32 %v515, 0.0
        %v809 = vmax.f32 %v517, 0.0
        %v810 = vmax.f32 %v604, 0.0
        %v811 = vmax.f32 %v606, 0.0
        %v812 = vmax.f32 %v693, 0.0
        %v813 = vmax.f32 %v695, 0.0
        %v814 = vmax.f32 %v782, 0.0
        %v815 = vmax.f32 %v784, 0.0
        %v816 = vmax.f32 %v521, 0.0
        %v817 = vmax.f32 %v523, 0.0
        %v818 = vmax.f32 %v610, 0.0
        %v819 = vmax.f32 %v612, 0.0
        %v820 = vmax.f32 %v699, 0.0
        %v821 = vmax.f32 %v701, 0.0
        %v822 = vmax.f32 %v788, 0.0
        %v823 = vmax.f32 %v790, 0.0
        %v824 = vld [vmem:[#allocation7] sm:$0xff]
        %v825 = vld [vmem:[#allocation7 + $0x8] sm:$0xff]
        %v826 = vld [vmem:[#allocation7 + $0x10] sm:$0xff]
        %v827 = vld [vmem:[#allocation7 + $0x18] sm:$0xff]
        %828 = vrot.lane.b32.xlu0 %v800, 17
        %v829 = vpop.permute.xlu0 %828
        %830 = vrot.lane.b32.xlu0 %v801, 17
        %v831 = vpop.permute.xlu0 %830
        %832 = vrot.lane.b32.xlu0 %v802, 17
        %v833 = vpop.permute.xlu0 %832
        %834 = vrot.lane.b32.xlu0 %v803, 17
        %v835 = vpop.permute.xlu0 %834
        %836 = vrot.lane.b32.xlu0 %v804, 17
        %v837 = vpop.permute.xlu0 %836
        %838 = vrot.lane.b32.xlu0 %v805, 17
        %v839 = vpop.permute.xlu0 %838
        %840 = vrot.lane.b32.xlu0 %v806, 17
        %v841 = vpop.permute.xlu0 %840
        %842 = vrot.lane.b32.xlu0 %v807, 17
        %v843 = vpop.permute.xlu0 %842
        %v844 = vlaneseq
        %v845 = vand.u32 %v844, 127
        %vm846 = vcmp.lt.s32.totalorder %v845, 17
        %v847 = vsel %vm846, %v841, %v843
        %v848 = vsel %vm846, %v839, %v841
        %v849 = vsel %vm846, %v837, %v839
        %v850 = vsel %vm846, %v835, %v837
        %v851 = vsel %vm846, %v833, %v835
        %v852 = vsel %vm846, %v831, %v833
        %v853 = vsel %vm846, %v829, %v831
        %v854 = vsel %vm846, %v843, %v829
        %v855 = vlaneseq
        %v856 = vshrl.u32 %v855, 7
        %v857 = vsub.s32 0, %v856
        %v858 = vrot.slane %v387, %v857
        %v859 = vlaneseq
        %v860 = vshrl.u32 %v859, 7
        %v861 = vsub.s32 0, %v860
        %v862 = vrot.slane %v388, %v861
        %v863 = vlaneseq
        %v864 = vshrl.u32 %v863, 7
        %v865 = vsub.s32 0, %v864
        %v866 = vrot.slane %v389, %v865
        %v867 = vlaneseq
        %v868 = vshrl.u32 %v867, 7
        %v869 = vsub.s32 0, %v868
        %v870 = vrot.slane %v390, %v869
        %v871 = vlaneseq
        %v872 = vshrl.u32 %v871, 7
        %v873 = vsub.s32 0, %v872
        %v874 = vrot.slane %v391, %v873
        %v875 = vlaneseq
        %v876 = vshrl.u32 %v875, 7
        %v877 = vsub.s32 0, %v876
        %v878 = vrot.slane %v392, %v877
        %v879 = vlaneseq
        %v880 = vshrl.u32 %v879, 7
        %v881 = vsub.s32 0, %v880
        %v882 = vrot.slane %v393, %v881
        %v883 = vlaneseq
        %v884 = vshrl.u32 %v883, 7
        %v885 = vsub.s32 0, %v884
        %v886 = vrot.slane %v394, %v885
        %v887 = vmul.f32 %v854, %v858
        %v888 = vmul.f32 %v853, %v862
        %v889 = vmul.f32 %v852, %v866
        %v890 = vmul.f32 %v851, %v870
        %v891 = vmul.f32 %v850, %v874
        %v892 = vmul.f32 %v849, %v878
        %v893 = vmul.f32 %v848, %v882
        %v894 = vmul.f32 %v847, %v886
        %895 = vrot.lane.b32.xlu0 %v800, 16
        %v896 = vpop.permute.xlu0 %895
        %897 = vrot.lane.b32.xlu0 %v801, 16
        %v898 = vpop.permute.xlu0 %897
        %899 = vrot.lane.b32.xlu0 %v802, 16
        %v900 = vpop.permute.xlu0 %899
        %901 = vrot.lane.b32.xlu0 %v803, 16
        %v902 = vpop.permute.xlu0 %901
        %903 = vrot.lane.b32.xlu0 %v804, 16
        %v904 = vpop.permute.xlu0 %903
        %905 = vrot.lane.b32.xlu0 %v805, 16
        %v906 = vpop.permute.xlu0 %905
        %907 = vrot.lane.b32.xlu0 %v806, 16
        %v908 = vpop.permute.xlu0 %907
        %909 = vrot.lane.b32.xlu0 %v807, 16
        %v910 = vpop.permute.xlu0 %909
        %vm911 = vcmp.lt.s32.totalorder %v845, 16
        %v912 = vsel %vm911, %v908, %v910
        %v913 = vsel %vm911, %v906, %v908
        %v914 = vsel %vm911, %v904, %v906
        %v915 = vsel %vm911, %v902, %v904
        %v916 = vsel %vm911, %v900, %v902
        %v917 = vsel %vm911, %v898, %v900
        %v918 = vsel %vm911, %v896, %v898
        %v919 = vsel %vm911, %v910, %v896
        %v920 = vlaneseq
        %v921 = vshrl.u32 %v920, 7
        %v922 = vsub.s32 1, %v921
        %v923 = vrot.slane %v387, %v922
        %v924 = vlaneseq
        %v925 = vshrl.u32 %v924, 7
        %v926 = vsub.s32 1, %v925
        %v927 = vrot.slane %v388, %v926
        %v928 = vlaneseq
        %v929 = vshrl.u32 %v928, 7
        %v930 = vsub.s32 1, %v929
        %v931 = vrot.slane %v389, %v930
        %v932 = vlaneseq
        %v933 = vshrl.u32 %v932, 7
        %v934 = vsub.s32 1, %v933
        %v935 = vrot.slane %v390, %v934
        %v936 = vlaneseq
        %v937 = vshrl.u32 %v936, 7
        %v938 = vsub.s32 1, %v937
        %v939 = vrot.slane %v391, %v938
        %v940 = vlaneseq
        %v941 = vshrl.u32 %v940, 7
        %v942 = vsub.s32 1, %v941
        %v943 = vrot.slane %v392, %v942
        %v944 = vlaneseq
        %v945 = vshrl.u32 %v944, 7
        %v946 = vsub.s32 1, %v945
        %v947 = vrot.slane %v393, %v946
        %v948 = vlaneseq
        %v949 = vshrl.u32 %v948, 7
        %v950 = vsub.s32 1, %v949
        %v951 = vrot.slane %v394, %v950
        %v952 = vmul.f32 %v919, %v923
        %v953 = vmul.f32 %v918, %v927
        %v954 = vmul.f32 %v917, %v931
        %v955 = vmul.f32 %v916, %v935
        %v956 = vmul.f32 %v915, %v939
        %v957 = vmul.f32 %v914, %v943
        %v958 = vmul.f32 %v913, %v947
        %v959 = vmul.f32 %v912, %v951
        %960 = vrot.lane.b32.xlu0 %v800, 15
        %v961 = vpop.permute.xlu0 %960
        %962 = vrot.lane.b32.xlu0 %v801, 15
        %v963 = vpop.permute.xlu0 %962
        %964 = vrot.lane.b32.xlu0 %v802, 15
        %v965 = vpop.permute.xlu0 %964
        %966 = vrot.lane.b32.xlu0 %v803, 15
        %v967 = vpop.permute.xlu0 %966
        %968 = vrot.lane.b32.xlu0 %v804, 15
        %v969 = vpop.permute.xlu0 %968
        %970 = vrot.lane.b32.xlu0 %v805, 15
        %v971 = vpop.permute.xlu0 %970
        %972 = vrot.lane.b32.xlu0 %v806, 15
        %v973 = vpop.permute.xlu0 %972
        %974 = vrot.lane.b32.xlu0 %v807, 15
        %v975 = vpop.permute.xlu0 %974
        %vm976 = vcmp.lt.s32.totalorder %v845, 15
        %v977 = vsel %vm976, %v973, %v975
        %v978 = vsel %vm976, %v971, %v973
        %v979 = vsel %vm976, %v969, %v971
        %v980 = vsel %vm976, %v967, %v969
        %v981 = vsel %vm976, %v965, %v967
        %v982 = vsel %vm976, %v963, %v965
        %v983 = vsel %vm976, %v961, %v963
        %v984 = vsel %vm976, %v975, %v961
        %v985 = vlaneseq
        %v986 = vshrl.u32 %v985, 7
        %v987 = vsub.s32 2, %v986
        %v988 = vrot.slane %v387, %v987
        %v989 = vlaneseq
        %v990 = vshrl.u32 %v989, 7
        %v991 = vsub.s32 2, %v990
        %v992 = vrot.slane %v388, %v991
        %v993 = vlaneseq
        %v994 = vshrl.u32 %v993, 7
        %v995 = vsub.s32 2, %v994
        %v996 = vrot.slane %v389, %v995
        %v997 = vlaneseq
        %v998 = vshrl.u32 %v997, 7
        %v999 = vsub.s32 2, %v998
        %v1000 = vrot.slane %v390, %v999
        %v1001 = vlaneseq
        %v1002 = vshrl.u32 %v1001, 7
        %v1003 = vsub.s32 2, %v1002
        %v1004 = vrot.slane %v391, %v1003
        %v1005 = vlaneseq
        %v1006 = vshrl.u32 %v1005, 7
        %v1007 = vsub.s32 2, %v1006
        %v1008 = vrot.slane %v392, %v1007
        %v1009 = vlaneseq
        %v1010 = vshrl.u32 %v1009, 7
        %v1011 = vsub.s32 2, %v1010
        %v1012 = vrot.slane %v393, %v1011
        %v1013 = vlaneseq
        %v1014 = vshrl.u32 %v1013, 7
        %v1015 = vsub.s32 2, %v1014
        %v1016 = vrot.slane %v394, %v1015
        %v1017 = vmul.f32 %v984, %v988
        %v1018 = vmul.f32 %v983, %v992
        %v1019 = vmul.f32 %v982, %v996
        %v1020 = vmul.f32 %v981, %v1000
        %v1021 = vmul.f32 %v980, %v1004
        %v1022 = vmul.f32 %v979, %v1008
        %v1023 = vmul.f32 %v978, %v1012
        %v1024 = vmul.f32 %v977, %v1016
        %1025 = vrot.lane.b32.xlu0 %v800, 1
        %v1026 = vpop.permute.xlu0 %1025
        %1027 = vrot.lane.b32.xlu0 %v801, 1
        %v1028 = vpop.permute.xlu0 %1027
        %1029 = vrot.lane.b32.xlu0 %v802, 1
        %v1030 = vpop.permute.xlu0 %1029
        %1031 = vrot.lane.b32.xlu0 %v803, 1
        %v1032 = vpop.permute.xlu0 %1031
        %1033 = vrot.lane.b32.xlu0 %v804, 1
        %v1034 = vpop.permute.xlu0 %1033
        %1035 = vrot.lane.b32.xlu0 %v805, 1
        %v1036 = vpop.permute.xlu0 %1035
        %1037 = vrot.lane.b32.xlu0 %v806, 1
        %v1038 = vpop.permute.xlu0 %1037
        %1039 = vrot.lane.b32.xlu0 %v807, 1
        %v1040 = vpop.permute.xlu0 %1039
        %vm1041 = vcmp.lt.s32.totalorder %v845, 1
        %v1042 = vsel %vm1041, %v1038, %v1040
        %v1043 = vsel %vm1041, %v1036, %v1038
        %v1044 = vsel %vm1041, %v1034, %v1036
        %v1045 = vsel %vm1041, %v1032, %v1034
        %v1046 = vsel %vm1041, %v1030, %v1032
        %v1047 = vsel %vm1041, %v1028, %v1030
        %v1048 = vsel %vm1041, %v1026, %v1028
        %v1049 = vsel %vm1041, %v1040, %v1026
        %v1050 = vlaneseq
        %v1051 = vshrl.u32 %v1050, 7
        %v1052 = vsub.s32 3, %v1051
        %v1053 = vrot.slane %v387, %v1052
        %v1054 = vlaneseq
        %v1055 = vshrl.u32 %v1054, 7
        %v1056 = vsub.s32 3, %v1055
        %v1057 = vrot.slane %v388, %v1056
        %v1058 = vlaneseq
        %v1059 = vshrl.u32 %v1058, 7
        %v1060 = vsub.s32 3, %v1059
        %v1061 = vrot.slane %v389, %v1060
        %v1062 = vlaneseq
        %v1063 = vshrl.u32 %v1062, 7
        %v1064 = vsub.s32 3, %v1063
        %v1065 = vrot.slane %v390, %v1064
        %v1066 = vlaneseq
        %v1067 = vshrl.u32 %v1066, 7
        %v1068 = vsub.s32 3, %v1067
        %v1069 = vrot.slane %v391, %v1068
        %v1070 = vlaneseq
        %v1071 = vshrl.u32 %v1070, 7
        %v1072 = vsub.s32 3, %v1071
        %v1073 = vrot.slane %v392, %v1072
        %v1074 = vlaneseq
        %v1075 = vshrl.u32 %v1074, 7
        %v1076 = vsub.s32 3, %v1075
        %v1077 = vrot.slane %v393, %v1076
        %v1078 = vlaneseq
        %v1079 = vshrl.u32 %v1078, 7
        %v1080 = vsub.s32 3, %v1079
        %v1081 = vrot.slane %v394, %v1080
        %v1082 = vmul.f32 %v1049, %v1053
        %v1083 = vmul.f32 %v1048, %v1057
        %v1084 = vmul.f32 %v1047, %v1061
        %v1085 = vmul.f32 %v1046, %v1065
        %v1086 = vmul.f32 %v1045, %v1069
        %v1087 = vmul.f32 %v1044, %v1073
        %v1088 = vmul.f32 %v1043, %v1077
        %v1089 = vmul.f32 %v1042, %v1081
        %1090 = vrot.lane.b32.xlu0 %v800, 127
        %v1091 = vpop.permute.xlu0 %1090
        %1092 = vrot.lane.b32.xlu0 %v801, 127
        %v1093 = vpop.permute.xlu0 %1092
        %1094 = vrot.lane.b32.xlu0 %v802, 127
        %v1095 = vpop.permute.xlu0 %1094
        %1096 = vrot.lane.b32.xlu0 %v803, 127
        %v1097 = vpop.permute.xlu0 %1096
        %1098 = vrot.lane.b32.xlu0 %v804, 127
        %v1099 = vpop.permute.xlu0 %1098
        %1100 = vrot.lane.b32.xlu0 %v805, 127
        %v1101 = vpop.permute.xlu0 %1100
        %1102 = vrot.lane.b32.xlu0 %v806, 127
        %v1103 = vpop.permute.xlu0 %1102
        %1104 = vrot.lane.b32.xlu0 %v807, 127
        %v1105 = vpop.permute.xlu0 %1104
        %vm1106 = vcmp.lt.s32.totalorder %v845, 127
        %v1107 = vsel %vm1106, %v1103, %v1105
        %v1108 = vsel %vm1106, %v1101, %v1103
        %v1109 = vsel %vm1106, %v1099, %v1101
        %v1110 = vsel %vm1106, %v1097, %v1099
        %v1111 = vsel %vm1106, %v1095, %v1097
        %v1112 = vsel %vm1106, %v1093, %v1095
        %v1113 = vsel %vm1106, %v1091, %v1093
        %v1114 = vsel %vm1106, %v1105, %v1091
        %v1115 = vlaneseq
        %v1116 = vshrl.u32 %v1115, 7
        %v1117 = vsub.s32 4, %v1116
        %v1118 = vrot.slane %v387, %v1117
        %v1119 = vlaneseq
        %v1120 = vshrl.u32 %v1119, 7
        %v1121 = vsub.s32 4, %v1120
        %v1122 = vrot.slane %v388, %v1121
        %v1123 = vlaneseq
        %v1124 = vshrl.u32 %v1123, 7
        %v1125 = vsub.s32 4, %v1124
        %v1126 = vrot.slane %v389, %v1125
        %v1127 = vlaneseq
        %v1128 = vshrl.u32 %v1127, 7
        %v1129 = vsub.s32 4, %v1128
        %v1130 = vrot.slane %v390, %v1129
        %v1131 = vlaneseq
        %v1132 = vshrl.u32 %v1131, 7
        %v1133 = vsub.s32 4, %v1132
        %v1134 = vrot.slane %v391, %v1133
        %v1135 = vlaneseq
        %v1136 = vshrl.u32 %v1135, 7
        %v1137 = vsub.s32 4, %v1136
        %v1138 = vrot.slane %v392, %v1137
        %v1139 = vlaneseq
        %v1140 = vshrl.u32 %v1139, 7
        %v1141 = vsub.s32 4, %v1140
        %v1142 = vrot.slane %v393, %v1141
        %v1143 = vlaneseq
        %v1144 = vshrl.u32 %v1143, 7
        %v1145 = vsub.s32 4, %v1144
        %v1146 = vrot.slane %v394, %v1145
        %v1147 = vmul.f32 %v1113, %v1118
        %v1148 = vmul.f32 %v1112, %v1122
        %v1149 = vmul.f32 %v1111, %v1126
        %v1150 = vmul.f32 %v1110, %v1130
        %v1151 = vmul.f32 %v1109, %v1134
        %v1152 = vmul.f32 %v1108, %v1138
        %v1153 = vmul.f32 %v1107, %v1142
        %v1154 = vmul.f32 %v1114, %v1146
        %1155 = vrot.lane.b32.xlu0 %v800, 113
        %v1156 = vpop.permute.xlu0 %1155
        %1157 = vrot.lane.b32.xlu0 %v801, 113
        %v1158 = vpop.permute.xlu0 %1157
        %1159 = vrot.lane.b32.xlu0 %v802, 113
        %v1160 = vpop.permute.xlu0 %1159
        %1161 = vrot.lane.b32.xlu0 %v803, 113
        %v1162 = vpop.permute.xlu0 %1161
        %1163 = vrot.lane.b32.xlu0 %v804, 113
        %v1164 = vpop.permute.xlu0 %1163
        %1165 = vrot.lane.b32.xlu0 %v805, 113
        %v1166 = vpop.permute.xlu0 %1165
        %1167 = vrot.lane.b32.xlu0 %v806, 113
        %v1168 = vpop.permute.xlu0 %1167
        %1169 = vrot.lane.b32.xlu0 %v807, 113
        %v1170 = vpop.permute.xlu0 %1169
        %vm1171 = vcmp.lt.s32.totalorder %v845, 113
        %v1172 = vsel %vm1171, %v1168, %v1170
        %v1173 = vsel %vm1171, %v1166, %v1168
        %v1174 = vsel %vm1171, %v1164, %v1166
        %v1175 = vsel %vm1171, %v1162, %v1164
        %v1176 = vsel %vm1171, %v1160, %v1162
        %v1177 = vsel %vm1171, %v1158, %v1160
        %v1178 = vsel %vm1171, %v1156, %v1158
        %v1179 = vsel %vm1171, %v1170, %v1156
        %v1180 = vlaneseq
        %v1181 = vshrl.u32 %v1180, 7
        %v1182 = vsub.s32 5, %v1181
        %v1183 = vrot.slane %v387, %v1182
        %v1184 = vlaneseq
        %v1185 = vshrl.u32 %v1184, 7
        %v1186 = vsub.s32 5, %v1185
        %v1187 = vrot.slane %v388, %v1186
        %v1188 = vlaneseq
        %v1189 = vshrl.u32 %v1188, 7
        %v1190 = vsub.s32 5, %v1189
        %v1191 = vrot.slane %v389, %v1190
        %v1192 = vlaneseq
        %v1193 = vshrl.u32 %v1192, 7
        %v1194 = vsub.s32 5, %v1193
        %v1195 = vrot.slane %v390, %v1194
        %v1196 = vlaneseq
        %v1197 = vshrl.u32 %v1196, 7
        %v1198 = vsub.s32 5, %v1197
        %v1199 = vrot.slane %v391, %v1198
        %v1200 = vlaneseq
        %v1201 = vshrl.u32 %v1200, 7
        %v1202 = vsub.s32 5, %v1201
        %v1203 = vrot.slane %v392, %v1202
        %v1204 = vlaneseq
        %v1205 = vshrl.u32 %v1204, 7
        %v1206 = vsub.s32 5, %v1205
        %v1207 = vrot.slane %v393, %v1206
        %v1208 = vlaneseq
        %v1209 = vshrl.u32 %v1208, 7
        %v1210 = vsub.s32 5, %v1209
        %v1211 = vrot.slane %v394, %v1210
        %v1212 = vmul.f32 %v1178, %v1183
        %v1213 = vmul.f32 %v1177, %v1187
        %v1214 = vmul.f32 %v1176, %v1191
        %v1215 = vmul.f32 %v1175, %v1195
        %v1216 = vmul.f32 %v1174, %v1199
        %v1217 = vmul.f32 %v1173, %v1203
        %v1218 = vmul.f32 %v1172, %v1207
        %v1219 = vmul.f32 %v1179, %v1211
        %1220 = vrot.lane.b32.xlu0 %v800, 112
        %v1221 = vpop.permute.xlu0 %1220
        %1222 = vrot.lane.b32.xlu0 %v801, 112
        %v1223 = vpop.permute.xlu0 %1222
        %1224 = vrot.lane.b32.xlu0 %v802, 112
        %v1225 = vpop.permute.xlu0 %1224
        %1226 = vrot.lane.b32.xlu0 %v803, 112
        %v1227 = vpop.permute.xlu0 %1226
        %1228 = vrot.lane.b32.xlu0 %v804, 112
        %v1229 = vpop.permute.xlu0 %1228
        %1230 = vrot.lane.b32.xlu0 %v805, 112
        %v1231 = vpop.permute.xlu0 %1230
        %1232 = vrot.lane.b32.xlu0 %v806, 112
        %v1233 = vpop.permute.xlu0 %1232
        %1234 = vrot.lane.b32.xlu0 %v807, 112
        %v1235 = vpop.permute.xlu0 %1234
        %vm1236 = vcmp.lt.s32.totalorder %v845, 112
        %v1237 = vsel %vm1236, %v1233, %v1235
        %v1238 = vsel %vm1236, %v1231, %v1233
        %v1239 = vsel %vm1236, %v1229, %v1231
        %v1240 = vsel %vm1236, %v1227, %v1229
        %v1241 = vsel %vm1236, %v1225, %v1227
        %v1242 = vsel %vm1236, %v1223, %v1225
        %v1243 = vsel %vm1236, %v1221, %v1223
        %v1244 = vsel %vm1236, %v1235, %v1221
        %v1245 = vlaneseq
        %v1246 = vshrl.u32 %v1245, 7
        %v1247 = vsub.s32 6, %v1246
        %v1248 = vrot.slane %v387, %v1247
        %v1249 = vlaneseq
        %v1250 = vshrl.u32 %v1249, 7
        %v1251 = vsub.s32 6, %v1250
        %v1252 = vrot.slane %v388, %v1251
        %v1253 = vlaneseq
        %v1254 = vshrl.u32 %v1253, 7
        %v1255 = vsub.s32 6, %v1254
        %v1256 = vrot.slane %v389, %v1255
        %v1257 = vlaneseq
        %v1258 = vshrl.u32 %v1257, 7
        %v1259 = vsub.s32 6, %v1258
        %v1260 = vrot.slane %v390, %v1259
        %v1261 = vlaneseq
        %v1262 = vshrl.u32 %v1261, 7
        %v1263 = vsub.s32 6, %v1262
        %v1264 = vrot.slane %v391, %v1263
        %v1265 = vlaneseq
        %v1266 = vshrl.u32 %v1265, 7
        %v1267 = vsub.s32 6, %v1266
        %v1268 = vrot.slane %v392, %v1267
        %v1269 = vlaneseq
        %v1270 = vshrl.u32 %v1269, 7
        %v1271 = vsub.s32 6, %v1270
        %v1272 = vrot.slane %v393, %v1271
        %v1273 = vlaneseq
        %v1274 = vshrl.u32 %v1273, 7
        %v1275 = vsub.s32 6, %v1274
        %v1276 = vrot.slane %v394, %v1275
        %v1277 = vmul.f32 %v1243, %v1248
        %v1278 = vmul.f32 %v1242, %v1252
        %v1279 = vmul.f32 %v1241, %v1256
        %v1280 = vmul.f32 %v1240, %v1260
        %v1281 = vmul.f32 %v1239, %v1264
        %v1282 = vmul.f32 %v1238, %v1268
        %v1283 = vmul.f32 %v1237, %v1272
        %v1284 = vmul.f32 %v1244, %v1276
        %1285 = vrot.lane.b32.xlu0 %v800, 111
        %v1286 = vpop.permute.xlu0 %1285
        %1287 = vrot.lane.b32.xlu0 %v801, 111
        %v1288 = vpop.permute.xlu0 %1287
        %1289 = vrot.lane.b32.xlu0 %v802, 111
        %v1290 = vpop.permute.xlu0 %1289
        %1291 = vrot.lane.b32.xlu0 %v803, 111
        %v1292 = vpop.permute.xlu0 %1291
        %1293 = vrot.lane.b32.xlu0 %v804, 111
        %v1294 = vpop.permute.xlu0 %1293
        %1295 = vrot.lane.b32.xlu0 %v805, 111
        %v1296 = vpop.permute.xlu0 %1295
        %1297 = vrot.lane.b32.xlu0 %v806, 111
        %v1298 = vpop.permute.xlu0 %1297
        %1299 = vrot.lane.b32.xlu0 %v807, 111
        %v1300 = vpop.permute.xlu0 %1299
        %vm1301 = vcmp.lt.s32.totalorder %v845, 111
        %v1302 = vsel %vm1301, %v1298, %v1300
        %v1303 = vsel %vm1301, %v1296, %v1298
        %v1304 = vsel %vm1301, %v1294, %v1296
        %v1305 = vsel %vm1301, %v1292, %v1294
        %v1306 = vsel %vm1301, %v1290, %v1292
        %v1307 = vsel %vm1301, %v1288, %v1290
        %v1308 = vsel %vm1301, %v1286, %v1288
        %v1309 = vsel %vm1301, %v1300, %v1286
        %v1310 = vlaneseq
        %v1311 = vshrl.u32 %v1310, 7
        %v1312 = vsub.s32 7, %v1311
        %v1313 = vrot.slane %v387, %v1312
        %v1314 = vlaneseq
        %v1315 = vshrl.u32 %v1314, 7
        %v1316 = vsub.s32 7, %v1315
        %v1317 = vrot.slane %v388, %v1316
        %v1318 = vlaneseq
        %v1319 = vshrl.u32 %v1318, 7
        %v1320 = vsub.s32 7, %v1319
        %v1321 = vrot.slane %v389, %v1320
        %v1322 = vlaneseq
        %v1323 = vshrl.u32 %v1322, 7
        %v1324 = vsub.s32 7, %v1323
        %v1325 = vrot.slane %v390, %v1324
        %v1326 = vlaneseq
        %v1327 = vshrl.u32 %v1326, 7
        %v1328 = vsub.s32 7, %v1327
        %v1329 = vrot.slane %v391, %v1328
        %v1330 = vlaneseq
        %v1331 = vshrl.u32 %v1330, 7
        %v1332 = vsub.s32 7, %v1331
        %v1333 = vrot.slane %v392, %v1332
        %v1334 = vlaneseq
        %v1335 = vshrl.u32 %v1334, 7
        %v1336 = vsub.s32 7, %v1335
        %v1337 = vrot.slane %v393, %v1336
        %v1338 = vlaneseq
        %v1339 = vshrl.u32 %v1338, 7
        %v1340 = vsub.s32 7, %v1339
        %v1341 = vrot.slane %v394, %v1340
        %v1342 = vmul.f32 %v1308, %v1313
        %v1343 = vmul.f32 %v1307, %v1317
        %v1344 = vmul.f32 %v1306, %v1321
        %v1345 = vmul.f32 %v1305, %v1325
        %v1346 = vmul.f32 %v1304, %v1329
        %v1347 = vmul.f32 %v1303, %v1333
        %v1348 = vmul.f32 %v1302, %v1337
        %v1349 = vmul.f32 %v1309, %v1341
        %v1350 = vld [vmem:[#allocation5] sm:$0xff]
        %v1351 = vld [vmem:[%s5] sm:$0xff]
        %1353 = vset.pattern.permute.xlu0 0
        %1354 = vperm.xlu0 %1353, %v1351
        %v1355 = vpop.permute.xlu0 %1354
        %vm1357 = vcmask 588800
        %v1359 = vsel %vm1357, %v1350, 0
        %1361 = vmatprep.subr.mxu0 %v888
        %1362 = vmatpush1.msra.mxu0 %v887
        %1363 = vmatprep.subr.mxu0 %v953
        %1364 = vmatpush1.msra.mxu0 %v952
        %1365 = vmatprep.subr.mxu0 %v1018
        %1366 = vmatpush1.msra.mxu0 %v1017
        %1367 = vmatprep.subr.mxu0 %v1083
        %1368 = vmatpush1.msra.mxu0 %v1082
        %1369 = vmatprep.subr.mxu0 %v801
        %1370 = vmatpush1.msra.mxu0 %v800
        %1371 = vmatprep.subr.mxu0 %v1148
        %1372 = vmatpush1.msra.mxu0 %v1147
        %1373 = vmatprep.subr.mxu0 %v1213
        %1374 = vmatpush1.msra.mxu0 %v1212
        %1375 = vmatprep.subr.mxu0 %v1278
        %1376 = vmatpush1.msra.mxu0 %v1277
        %1377 = vmatprep.subr.mxu0 %v1343
        %1378 = vmatpush1.msra.mxu0 %v1342
        %1379 = vmatprep.subr.mxu0 0.0
        %1380 = vmatpush1.msra.mxu0 0.0
        %1381 = vmatprep.subr.mxu0 0.0
        %1382 = vmatpush1.msra.mxu0 0.0
        %1383 = vmatprep.subr.mxu0 0.0
        %1384 = vmatpush1.msra.mxu0 0.0
        %1385 = vmatprep.subr.mxu0 0.0
        %1386 = vmatpush1.msra.mxu0 0.0
        %1387 = vmatprep.subr.mxu0 0.0
        %1388 = vmatpush1.msra.mxu0 0.0
        %1389 = vmatprep.subr.mxu0 0.0
        %1390 = vmatpush1.msra.mxu0 0.0
        %1391 = vmatprep.subr.mxu0 0.0
        %1392 = vmatpush1.msra.mxu0 0.0
        %1393 = vmatprep.subr.mxu0 0.0
        %1394 = vmatpush1.msra.mxu0 0.0
        %1395 = vmatprep.subr.mxu0 0.0
        %1396 = vmatpush1.msra.mxu0 0.0
        %1397 = vmatprep.subr.mxu0 0.0
        %1398 = vmatpush1.msra.mxu0 0.0
        %1399 = vmatprep.subr.mxu0 0.0
        %1400 = vmatpush1.msra.mxu0 0.0
        %1401 = vmatprep.subr.mxu0 0.0
        %1402 = vmatpush1.msra.mxu0 0.0
        %1403 = vmatprep.subr.mxu0 0.0
        %1404 = vmatpush1.msra.mxu0 0.0
        %1405 = vmatprep.subr.mxu0 0.0
        %1406 = vmatpush1.msra.mxu0 0.0
        %1407 = vmatprep.subr.mxu0 0.0
        %1408 = vmatpush1.msra.mxu0 0.0
        %1409 = vmatprep.subr.mxu0 0.0
        %1410 = vmatpush1.msra.mxu0 0.0
        %1411 = vmatprep.subr.mxu0 0.0
        %1412 = vmatpush1.msra.mxu0 0.0
        %1413 = vmatprep.subr.mxu0 0.0
        %1414 = vmatpush1.msra.mxu0 0.0
        %1415 = vmatprep.subr.mxu0 0.0
        %1416 = vmatpush1.msra.mxu0 0.0
        %1417 = vmatprep.subr.mxu0 0.0
        %1418 = vmatpush1.msra.mxu0 0.0
        %1419 = vmatprep.subr.mxu0 0.0
        %1420 = vmatpush1.msra.mxu0 0.0
        %1421 = vmatprep.subr.mxu0 0.0
        %1422 = vmatpush1.msra.mxu0 0.0
        %1423 = vmatprep.subr.mxu0 0.0
        %1424 = vmatpush1.msra.mxu0 0.0
        %1425 = vmatprep.mubr.f32.mxu0 0.0
        %1426 = vmatmul.mubr.f32.gmra.mrb[0].mxu0 %v1359
        %v1427 = vpop.f32.mrb[0].mxu0
        %v1428 = vadd.f32 %v1355, %v1427
        %v1429 = vpop.f32.mrb[0].mxu0
        %v1430 = vadd.f32 %v1355, %v1429
        %1431 = vdwg.mxu0
        %1432 = vmatprep.subr.mxu0 %v890
        %1433 = vmatpush1.msra.mxu0 %v889
        %1434 = vmatprep.subr.mxu0 %v955
        %1435 = vmatpush1.msra.mxu0 %v954
        %1436 = vmatprep.subr.mxu0 %v1020
        %1437 = vmatpush1.msra.mxu0 %v1019
        %1438 = vmatprep.subr.mxu0 %v1085
        %1439 = vmatpush1.msra.mxu0 %v1084
        %1440 = vmatprep.subr.mxu0 %v803
        %1441 = vmatpush1.msra.mxu0 %v802
        %1442 = vmatprep.subr.mxu0 %v1150
        %1443 = vmatpush1.msra.mxu0 %v1149
        %1444 = vmatprep.subr.mxu0 %v1215
        %1445 = vmatpush1.msra.mxu0 %v1214
        %1446 = vmatprep.subr.mxu0 %v1280
        %1447 = vmatpush1.msra.mxu0 %v1279
        %1448 = vmatprep.subr.mxu0 %v1345
        %1449 = vmatpush1.msra.mxu0 %v1344
        %1450 = vmatprep.subr.mxu0 0.0
        %1451 = vmatpush1.msra.mxu0 0.0
        %1452 = vmatprep.subr.mxu0 0.0
        %1453 = vmatpush1.msra.mxu0 0.0
        %1454 = vmatprep.subr.mxu0 0.0
        %1455 = vmatpush1.msra.mxu0 0.0
        %1456 = vmatprep.subr.mxu0 0.0
        %1457 = vmatpush1.msra.mxu0 0.0
        %1458 = vmatprep.subr.mxu0 0.0
        %1459 = vmatpush1.msra.mxu0 0.0
        %1460 = vmatprep.subr.mxu0 0.0
        %1461 = vmatpush1.msra.mxu0 0.0
        %1462 = vmatprep.subr.mxu0 0.0
        %1463 = vmatpush1.msra.mxu0 0.0
        %1464 = vmatprep.subr.mxu0 0.0
        %1465 = vmatpush1.msra.mxu0 0.0
        %1466 = vmatprep.subr.mxu0 0.0
        %1467 = vmatpush1.msra.mxu0 0.0
        %1468 = vmatprep.subr.mxu0 0.0
        %1469 = vmatpush1.msra.mxu0 0.0
        %1470 = vmatprep.subr.mxu0 0.0
        %1471 = vmatpush1.msra.mxu0 0.0
        %1472 = vmatprep.subr.mxu0 0.0
        %1473 = vmatpush1.msra.mxu0 0.0
        %1474 = vmatprep.subr.mxu0 0.0
        %1475 = vmatpush1.msra.mxu0 0.0
        %1476 = vmatprep.subr.mxu0 0.0
        %1477 = vmatpush1.msra.mxu0 0.0
        %1478 = vmatprep.subr.mxu0 0.0
        %1479 = vmatpush1.msra.mxu0 0.0
        %1480 = vmatprep.subr.mxu0 0.0
        %1481 = vmatpush1.msra.mxu0 0.0
        %1482 = vmatprep.subr.mxu0 0.0
        %1483 = vmatpush1.msra.mxu0 0.0
        %1484 = vmatprep.subr.mxu0 0.0
        %1485 = vmatpush1.msra.mxu0 0.0
        %1486 = vmatprep.subr.mxu0 0.0
        %1487 = vmatpush1.msra.mxu0 0.0
        %1488 = vmatprep.subr.mxu0 0.0
        %1489 = vmatpush1.msra.mxu0 0.0
        %1490 = vmatprep.subr.mxu0 0.0
        %1491 = vmatpush1.msra.mxu0 0.0
        %1492 = vmatprep.subr.mxu0 0.0
        %1493 = vmatpush1.msra.mxu0 0.0
        %1494 = vmatprep.subr.mxu0 0.0
        %1495 = vmatpush1.msra.mxu0 0.0
        %1496 = vmatprep.mubr.f32.mxu0 0.0
        %1497 = vmatmul.mubr.f32.gmra.mrb[0].mxu0 %v1359
        %v1498 = vpop.f32.mrb[0].mxu0
        %v1499 = vadd.f32 %v1355, %v1498
        %v1500 = vpop.f32.mrb[0].mxu0
        %v1501 = vadd.f32 %v1355, %v1500
        %1502 = vdwg.mxu0
        %1503 = vmatprep.subr.mxu0 %v892
        %1504 = vmatpush1.msra.mxu0 %v891
        %1505 = vmatprep.subr.mxu0 %v957
        %1506 = vmatpush1.msra.mxu0 %v956
        %1507 = vmatprep.subr.mxu0 %v1022
        %1508 = vmatpush1.msra.mxu0 %v1021
        %1509 = vmatprep.subr.mxu0 %v1087
        %1510 = vmatpush1.msra.mxu0 %v1086
        %1511 = vmatprep.subr.mxu0 %v805
        %1512 = vmatpush1.msra.mxu0 %v804
        %1513 = vmatprep.subr.mxu0 %v1152
        %1514 = vmatpush1.msra.mxu0 %v1151
        %1515 = vmatprep.subr.mxu0 %v1217
        %1516 = vmatpush1.msra.mxu0 %v1216
        %1517 = vmatprep.subr.mxu0 %v1282
        %1518 = vmatpush1.msra.mxu0 %v1281
        %1519 = vmatprep.subr.mxu0 %v1347
        %1520 = vmatpush1.msra.mxu0 %v1346
        %1521 = vmatprep.subr.mxu0 0.0
        %1522 = vmatpush1.msra.mxu0 0.0
        %1523 = vmatprep.subr.mxu0 0.0
        %1524 = vmatpush1.msra.mxu0 0.0
        %1525 = vmatprep.subr.mxu0 0.0
        %1526 = vmatpush1.msra.mxu0 0.0
        %1527 = vmatprep.subr.mxu0 0.0
        %1528 = vmatpush1.msra.mxu0 0.0
        %1529 = vmatprep.subr.mxu0 0.0
        %1530 = vmatpush1.msra.mxu0 0.0
        %1531 = vmatprep.subr.mxu0 0.0
        %1532 = vmatpush1.msra.mxu0 0.0
        %1533 = vmatprep.subr.mxu0 0.0
        %1534 = vmatpush1.msra.mxu0 0.0
        %1535 = vmatprep.subr.mxu0 0.0
        %1536 = vmatpush1.msra.mxu0 0.0
        %1537 = vmatprep.subr.mxu0 0.0
        %1538 = vmatpush1.msra.mxu0 0.0
        %1539 = vmatprep.subr.mxu0 0.0
        %1540 = vmatpush1.msra.mxu0 0.0
        %1541 = vmatprep.subr.mxu0 0.0
        %1542 = vmatpush1.msra.mxu0 0.0
        %1543 = vmatprep.subr.mxu0 0.0
        %1544 = vmatpush1.msra.mxu0 0.0
        %1545 = vmatprep.subr.mxu0 0.0
        %1546 = vmatpush1.msra.mxu0 0.0
        %1547 = vmatprep.subr.mxu0 0.0
        %1548 = vmatpush1.msra.mxu0 0.0
        %1549 = vmatprep.subr.mxu0 0.0
        %1550 = vmatpush1.msra.mxu0 0.0
        %1551 = vmatprep.subr.mxu0 0.0
        %1552 = vmatpush1.msra.mxu0 0.0
        %1553 = vmatprep.subr.mxu0 0.0
        %1554 = vmatpush1.msra.mxu0 0.0
        %1555 = vmatprep.subr.mxu0 0.0
        %1556 = vmatpush1.msra.mxu0 0.0
        %1557 = vmatprep.subr.mxu0 0.0
        %1558 = vmatpush1.msra.mxu0 0.0
        %1559 = vmatprep.subr.mxu0 0.0
        %1560 = vmatpush1.msra.mxu0 0.0
        %1561 = vmatprep.subr.mxu0 0.0
        %1562 = vmatpush1.msra.mxu0 0.0
        %1563 = vmatprep.subr.mxu0 0.0
        %1564 = vmatpush1.msra.mxu0 0.0
        %1565 = vmatprep.subr.mxu0 0.0
        %1566 = vmatpush1.msra.mxu0 0.0
        %1567 = vmatprep.mubr.f32.mxu0 0.0
        %1568 = vmatmul.mubr.f32.gmra.mrb[0].mxu0 %v1359
        %v1569 = vpop.f32.mrb[0].mxu0
        %v1570 = vadd.f32 %v1355, %v1569
        %v1571 = vpop.f32.mrb[0].mxu0
        %v1572 = vadd.f32 %v1355, %v1571
        %1573 = vdwg.mxu0
        %1574 = vmatprep.subr.mxu0 %v894
        %1575 = vmatpush1.msra.mxu0 %v893
        %1576 = vmatprep.subr.mxu0 %v959
        %1577 = vmatpush1.msra.mxu0 %v958
        %1578 = vmatprep.subr.mxu0 %v1024
        %1579 = vmatpush1.msra.mxu0 %v1023
        %1580 = vmatprep.subr.mxu0 %v1089
        %1581 = vmatpush1.msra.mxu0 %v1088
        %1582 = vmatprep.subr.mxu0 %v807
        %1583 = vmatpush1.msra.mxu0 %v806
        %1584 = vmatprep.subr.mxu0 %v1154
        %1585 = vmatpush1.msra.mxu0 %v1153
        %1586 = vmatprep.subr.mxu0 %v1219
        %1587 = vmatpush1.msra.mxu0 %v1218
        %1588 = vmatprep.subr.mxu0 %v1284
        %1589 = vmatpush1.msra.mxu0 %v1283
        %1590 = vmatprep.subr.mxu0 %v1349
        %1591 = vmatpush1.msra.mxu0 %v1348
        %1592 = vmatprep.subr.mxu0 0.0
        %1593 = vmatpush1.msra.mxu0 0.0
        %1594 = vmatprep.subr.mxu0 0.0
        %1595 = vmatpush1.msra.mxu0 0.0
        %1596 = vmatprep.subr.mxu0 0.0
        %1597 = vmatpush1.msra.mxu0 0.0
        %1598 = vmatprep.subr.mxu0 0.0
        %1599 = vmatpush1.msra.mxu0 0.0
        %1600 = vmatprep.subr.mxu0 0.0
        %1601 = vmatpush1.msra.mxu0 0.0
        %1602 = vmatprep.subr.mxu0 0.0
        %1603 = vmatpush1.msra.mxu0 0.0
        %1604 = vmatprep.subr.mxu0 0.0
        %1605 = vmatpush1.msra.mxu0 0.0
        %1606 = vmatprep.subr.mxu0 0.0
        %1607 = vmatpush1.msra.mxu0 0.0
        %1608 = vmatprep.subr.mxu0 0.0
        %1609 = vmatpush1.msra.mxu0 0.0
        %1610 = vmatprep.subr.mxu0 0.0
        %1611 = vmatpush1.msra.mxu0 0.0
        %1612 = vmatprep.subr.mxu0 0.0
        %1613 = vmatpush1.msra.mxu0 0.0
        %1614 = vmatprep.subr.mxu0 0.0
        %1615 = vmatpush1.msra.mxu0 0.0
        %1616 = vmatprep.subr.mxu0 0.0
        %1617 = vmatpush1.msra.mxu0 0.0
        %1618 = vmatprep.subr.mxu0 0.0
        %1619 = vmatpush1.msra.mxu0 0.0
        %1620 = vmatprep.subr.mxu0 0.0
        %1621 = vmatpush1.msra.mxu0 0.0
        %1622 = vmatprep.subr.mxu0 0.0
        %1623 = vmatpush1.msra.mxu0 0.0
        %1624 = vmatprep.subr.mxu0 0.0
        %1625 = vmatpush1.msra.mxu0 0.0
        %1626 = vmatprep.subr.mxu0 0.0
        %1627 = vmatpush1.msra.mxu0 0.0
        %1628 = vmatprep.subr.mxu0 0.0
        %1629 = vmatpush1.msra.mxu0 0.0
        %1630 = vmatprep.subr.mxu0 0.0
        %1631 = vmatpush1.msra.mxu0 0.0
        %1632 = vmatprep.subr.mxu0 0.0
        %1633 = vmatpush1.msra.mxu0 0.0
        %1634 = vmatprep.subr.mxu0 0.0
        %1635 = vmatpush1.msra.mxu0 0.0
        %1636 = vmatprep.subr.mxu0 0.0
        %1637 = vmatpush1.msra.mxu0 0.0
        %1638 = vmatprep.mubr.f32.mxu0 0.0
        %1639 = vmatmul.mubr.f32.gmra.mrb[0].mxu0 %v1359
        %v1640 = vpop.f32.mrb[0].mxu0
        %v1641 = vadd.f32 %v1355, %v1640
        %v1642 = vpop.f32.mrb[0].mxu0
        %v1643 = vadd.f32 %v1355, %v1642
        %1644 = vdwg.mxu0
        %v1645 = vmax.f32 %v1428, 0.0
        %v1646 = vmax.f32 %v1430, 0.0
        %v1647 = vmax.f32 %v1499, 0.0
        %v1648 = vmax.f32 %v1501, 0.0
        %v1649 = vmax.f32 %v1570, 0.0
        %v1650 = vmax.f32 %v1572, 0.0
        %v1651 = vmax.f32 %v1641, 0.0
        %v1652 = vmax.f32 %v1643, 0.0
        %1657 = vrot.lane.b32.xlu0 %v824, 120
        %v1658 = vpop.permute.xlu0 %1657
        %1659 = vrot.lane.b32.xlu0 %v825, 120
        %v1660 = vpop.permute.xlu0 %1659
        %1661 = vrot.lane.b32.xlu0 %v826, 120
        %v1662 = vpop.permute.xlu0 %1661
        %1663 = vrot.lane.b32.xlu0 %v827, 120
        %v1664 = vpop.permute.xlu0 %1663
        %vm1665 = vcmask 64512
        %v1666 = vsel %vm1665, %v1658, 0
        %v1668 = vsel %vm1665, %v1660, 0
        %v1670 = vsel %vm1665, %v1662, 0
        %v1672 = vsel %vm1665, %v1664, 0
        %1674 = vmatprep.subr.mxu0 %v1646
        %1675 = vmatpush1.msra.mxu0 %v1645
        %1676 = vmatprep.subr.mxu0 0.0
        %1677 = vmatpush1.msra.mxu0 0.0
        %1678 = vmatprep.subr.mxu0 0.0
        %1679 = vmatpush1.msra.mxu0 0.0
        %1680 = vmatprep.subr.mxu0 0.0
        %1681 = vmatpush1.msra.mxu0 0.0
        %1682 = vmatprep.subr.mxu0 0.0
        %1683 = vmatpush1.msra.mxu0 0.0
        %1684 = vmatprep.subr.mxu0 0.0
        %1685 = vmatpush1.msra.mxu0 0.0
        %1686 = vmatprep.subr.mxu0 0.0
        %1687 = vmatpush1.msra.mxu0 0.0
        %1688 = vmatprep.subr.mxu0 0.0
        %1689 = vmatpush1.msra.mxu0 0.0
        %1690 = vmatprep.subr.mxu0 0.0
        %1691 = vmatpush1.msra.mxu0 0.0
        %1692 = vmatprep.subr.mxu0 0.0
        %1693 = vmatpush1.msra.mxu0 0.0
        %1694 = vmatprep.subr.mxu0 0.0
        %1695 = vmatpush1.msra.mxu0 0.0
        %1696 = vmatprep.subr.mxu0 0.0
        %1697 = vmatpush1.msra.mxu0 0.0
        %1698 = vmatprep.subr.mxu0 0.0
        %1699 = vmatpush1.msra.mxu0 0.0
        %1700 = vmatprep.subr.mxu0 0.0
        %1701 = vmatpush1.msra.mxu0 0.0
        %1702 = vmatprep.subr.mxu0 0.0
        %1703 = vmatpush1.msra.mxu0 0.0
        %1704 = vmatprep.subr.mxu0 0.0
        %1705 = vmatpush1.msra.mxu0 0.0
        %1706 = vmatprep.subr.mxu0 0.0
        %1707 = vmatpush1.msra.mxu0 0.0
        %1708 = vmatprep.subr.mxu0 0.0
        %1709 = vmatpush1.msra.mxu0 0.0
        %1710 = vmatprep.subr.mxu0 0.0
        %1711 = vmatpush1.msra.mxu0 0.0
        %1712 = vmatprep.subr.mxu0 0.0
        %1713 = vmatpush1.msra.mxu0 0.0
        %1714 = vmatprep.subr.mxu0 0.0
        %1715 = vmatpush1.msra.mxu0 0.0
        %1716 = vmatprep.subr.mxu0 0.0
        %1717 = vmatpush1.msra.mxu0 0.0
        %1718 = vmatprep.subr.mxu0 0.0
        %1719 = vmatpush1.msra.mxu0 0.0
        %1720 = vmatprep.subr.mxu0 0.0
        %1721 = vmatpush1.msra.mxu0 0.0
        %1722 = vmatprep.subr.mxu0 0.0
        %1723 = vmatpush1.msra.mxu0 0.0
        %1724 = vmatprep.subr.mxu0 0.0
        %1725 = vmatpush1.msra.mxu0 0.0
        %1726 = vmatprep.subr.mxu0 0.0
        %1727 = vmatpush1.msra.mxu0 0.0
        %1728 = vmatprep.subr.mxu0 0.0
        %1729 = vmatpush1.msra.mxu0 0.0
        %1730 = vmatprep.subr.mxu0 0.0
        %1731 = vmatpush1.msra.mxu0 0.0
        %1732 = vmatprep.subr.mxu0 0.0
        %1733 = vmatpush1.msra.mxu0 0.0
        %1734 = vmatprep.subr.mxu0 0.0
        %1735 = vmatpush1.msra.mxu0 0.0
        %1736 = vmatprep.subr.mxu0 0.0
        %1737 = vmatpush1.msra.mxu0 0.0
        %1738 = vmatprep.mubr.f32.mxu0 0.0
        %1739 = vmatmul.mubr.f32.gmra.mrb[0].mxu0 %v1666
        %v1740 = vpop.f32.mrb[0].mxu0
        %v1741 = vadd.f32 0.0, %v1740
        %v1742 = vpop.f32.mrb[0].mxu0
        %v1743 = vadd.f32 0.0, %v1742
        %1744 = vmatprep.mubr.f32.mxu0 0.0
        %1745 = vmatmul.mubr.f32.gmra.mrb[0].mxu0 %v1668
        %v1746 = vpop.f32.mrb[0].mxu0
        %v1747 = vadd.f32 0.0, %v1746
        %v1748 = vpop.f32.mrb[0].mxu0
        %v1749 = vadd.f32 0.0, %v1748
        %1750 = vmatprep.mubr.f32.mxu0 0.0
        %1751 = vmatmul.mubr.f32.gmra.mrb[0].mxu0 %v1670
        %v1752 = vpop.f32.mrb[0].mxu0
        %v1753 = vadd.f32 0.0, %v1752
        %v1754 = vpop.f32.mrb[0].mxu0
        %v1755 = vadd.f32 0.0, %v1754
        %1756 = vmatprep.mubr.f32.mxu0 0.0
        %1757 = vmatmul.mubr.f32.gmra.mrb[0].mxu0 %v1672
        %v1758 = vpop.f32.mrb[0].mxu0
        %v1759 = vadd.f32 0.0, %v1758
        %v1760 = vpop.f32.mrb[0].mxu0
        %v1761 = vadd.f32 0.0, %v1760
        %1762 = vdwg.mxu0
        %1763 = vmatprep.subr.mxu0 %v1648
        %1764 = vmatpush1.msra.mxu0 %v1647
        %1765 = vmatprep.subr.mxu0 0.0
        %1766 = vmatpush1.msra.mxu0 0.0
        %1767 = vmatprep.subr.mxu0 0.0
        %1768 = vmatpush1.msra.mxu0 0.0
        %1769 = vmatprep.subr.mxu0 0.0
        %1770 = vmatpush1.msra.mxu0 0.0
        %1771 = vmatprep.subr.mxu0 0.0
        %1772 = vmatpush1.msra.mxu0 0.0
        %1773 = vmatprep.subr.mxu0 0.0
        %1774 = vmatpush1.msra.mxu0 0.0
        %1775 = vmatprep.subr.mxu0 0.0
        %1776 = vmatpush1.msra.mxu0 0.0
        %1777 = vmatprep.subr.mxu0 0.0
        %1778 = vmatpush1.msra.mxu0 0.0
        %1779 = vmatprep.subr.mxu0 0.0
        %1780 = vmatpush1.msra.mxu0 0.0
        %1781 = vmatprep.subr.mxu0 0.0
        %1782 = vmatpush1.msra.mxu0 0.0
        %1783 = vmatprep.subr.mxu0 0.0
        %1784 = vmatpush1.msra.mxu0 0.0
        %1785 = vmatprep.subr.mxu0 0.0
        %1786 = vmatpush1.msra.mxu0 0.0
        %1787 = vmatprep.subr.mxu0 0.0
        %1788 = vmatpush1.msra.mxu0 0.0
        %1789 = vmatprep.subr.mxu0 0.0
        %1790 = vmatpush1.msra.mxu0 0.0
        %1791 = vmatprep.subr.mxu0 0.0
        %1792 = vmatpush1.msra.mxu0 0.0
        %1793 = vmatprep.subr.mxu0 0.0
        %1794 = vmatpush1.msra.mxu0 0.0
        %1795 = vmatprep.subr.mxu0 0.0
        %1796 = vmatpush1.msra.mxu0 0.0
        %1797 = vmatprep.subr.mxu0 0.0
        %1798 = vmatpush1.msra.mxu0 0.0
        %1799 = vmatprep.subr.mxu0 0.0
        %1800 = vmatpush1.msra.mxu0 0.0
        %1801 = vmatprep.subr.mxu0 0.0
        %1802 = vmatpush1.msra.mxu0 0.0
        %1803 = vmatprep.subr.mxu0 0.0
        %1804 = vmatpush1.msra.mxu0 0.0
        %1805 = vmatprep.subr.mxu0 0.0
        %1806 = vmatpush1.msra.mxu0 0.0
        %1807 = vmatprep.subr.mxu0 0.0
        %1808 = vmatpush1.msra.mxu0 0.0
        %1809 = vmatprep.subr.mxu0 0.0
        %1810 = vmatpush1.msra.mxu0 0.0
        %1811 = vmatprep.subr.mxu0 0.0
        %1812 = vmatpush1.msra.mxu0 0.0
        %1813 = vmatprep.subr.mxu0 0.0
        %1814 = vmatpush1.msra.mxu0 0.0
        %1815 = vmatprep.subr.mxu0 0.0
        %1816 = vmatpush1.msra.mxu0 0.0
        %1817 = vmatprep.subr.mxu0 0.0
        %1818 = vmatpush1.msra.mxu0 0.0
        %1819 = vmatprep.subr.mxu0 0.0
        %1820 = vmatpush1.msra.mxu0 0.0
        %1821 = vmatprep.subr.mxu0 0.0
        %1822 = vmatpush1.msra.mxu0 0.0
        %1823 = vmatprep.subr.mxu0 0.0
        %1824 = vmatpush1.msra.mxu0 0.0
        %1825 = vmatprep.subr.mxu0 0.0
        %1826 = vmatpush1.msra.mxu0 0.0
        %1827 = vmatprep.mubr.f32.mxu0 0.0
        %1828 = vmatmul.mubr.f32.gmra.mrb[0].mxu0 %v1666
        %v1829 = vpop.f32.mrb[0].mxu0
        %v1830 = vadd.f32 0.0, %v1829
        %v1831 = vpop.f32.mrb[0].mxu0
        %v1832 = vadd.f32 0.0, %v1831
        %1833 = vmatprep.mubr.f32.mxu0 0.0
        %1834 = vmatmul.mubr.f32.gmra.mrb[0].mxu0 %v1668
        %v1835 = vpop.f32.mrb[0].mxu0
        %v1836 = vadd.f32 0.0, %v1835
        %v1837 = vpop.f32.mrb[0].mxu0
        %v1838 = vadd.f32 0.0, %v1837
        %1839 = vmatprep.mubr.f32.mxu0 0.0
        %1840 = vmatmul.mubr.f32.gmra.mrb[0].mxu0 %v1670
        %v1841 = vpop.f32.mrb[0].mxu0
        %v1842 = vadd.f32 0.0, %v1841
        %v1843 = vpop.f32.mrb[0].mxu0
        %v1844 = vadd.f32 0.0, %v1843
        %1845 = vmatprep.mubr.f32.mxu0 0.0
        %1846 = vmatmul.mubr.f32.gmra.mrb[0].mxu0 %v1672
        %v1847 = vpop.f32.mrb[0].mxu0
        %v1848 = vadd.f32 0.0, %v1847
        %v1849 = vpop.f32.mrb[0].mxu0
        %v1850 = vadd.f32 0.0, %v1849
        %1851 = vdwg.mxu0
        %1852 = vmatprep.subr.mxu0 %v1650
        %1853 = vmatpush1.msra.mxu0 %v1649
        %1854 = vmatprep.subr.mxu0 0.0
        %1855 = vmatpush1.msra.mxu0 0.0
        %1856 = vmatprep.subr.mxu0 0.0
        %1857 = vmatpush1.msra.mxu0 0.0
        %1858 = vmatprep.subr.mxu0 0.0
        %1859 = vmatpush1.msra.mxu0 0.0
        %1860 = vmatprep.subr.mxu0 0.0
        %1861 = vmatpush1.msra.mxu0 0.0
        %1862 = vmatprep.subr.mxu0 0.0
        %1863 = vmatpush1.msra.mxu0 0.0
        %1864 = vmatprep.subr.mxu0 0.0
        %1865 = vmatpush1.msra.mxu0 0.0
        %1866 = vmatprep.subr.mxu0 0.0
        %1867 = vmatpush1.msra.mxu0 0.0
        %1868 = vmatprep.subr.mxu0 0.0
        %1869 = vmatpush1.msra.mxu0 0.0
        %1870 = vmatprep.subr.mxu0 0.0
        %1871 = vmatpush1.msra.mxu0 0.0
        %1872 = vmatprep.subr.mxu0 0.0
        %1873 = vmatpush1.msra.mxu0 0.0
        %1874 = vmatprep.subr.mxu0 0.0
        %1875 = vmatpush1.msra.mxu0 0.0
        %1876 = vmatprep.subr.mxu0 0.0
        %1877 = vmatpush1.msra.mxu0 0.0
        %1878 = vmatprep.subr.mxu0 0.0
        %1879 = vmatpush1.msra.mxu0 0.0
        %1880 = vmatprep.subr.mxu0 0.0
        %1881 = vmatpush1.msra.mxu0 0.0
        %1882 = vmatprep.subr.mxu0 0.0
        %1883 = vmatpush1.msra.mxu0 0.0
        %1884 = vmatprep.subr.mxu0 0.0
        %1885 = vmatpush1.msra.mxu0 0.0
        %1886 = vmatprep.subr.mxu0 0.0
        %1887 = vmatpush1.msra.mxu0 0.0
        %1888 = vmatprep.subr.mxu0 0.0
        %1889 = vmatpush1.msra.mxu0 0.0
        %1890 = vmatprep.subr.mxu0 0.0
        %1891 = vmatpush1.msra.mxu0 0.0
        %1892 = vmatprep.subr.mxu0 0.0
        %1893 = vmatpush1.msra.mxu0 0.0
        %1894 = vmatprep.subr.mxu0 0.0
        %1895 = vmatpush1.msra.mxu0 0.0
        %1896 = vmatprep.subr.mxu0 0.0
        %1897 = vmatpush1.msra.mxu0 0.0
        %1898 = vmatprep.subr.mxu0 0.0
        %1899 = vmatpush1.msra.mxu0 0.0
        %1900 = vmatprep.subr.mxu0 0.0
        %1901 = vmatpush1.msra.mxu0 0.0
        %1902 = vmatprep.subr.mxu0 0.0
        %1903 = vmatpush1.msra.mxu0 0.0
        %1904 = vmatprep.subr.mxu0 0.0
        %1905 = vmatpush1.msra.mxu0 0.0
        %1906 = vmatprep.subr.mxu0 0.0
        %1907 = vmatpush1.msra.mxu0 0.0
        %1908 = vmatprep.subr.mxu0 0.0
        %1909 = vmatpush1.msra.mxu0 0.0
        %1910 = vmatprep.subr.mxu0 0.0
        %1911 = vmatpush1.msra.mxu0 0.0
        %1912 = vmatprep.subr.mxu0 0.0
        %1913 = vmatpush1.msra.mxu0 0.0
        %1914 = vmatprep.subr.mxu0 0.0
        %1915 = vmatpush1.msra.mxu0 0.0
        %1916 = vmatprep.mubr.f32.mxu0 0.0
        %1917 = vmatmul.mubr.f32.gmra.mrb[0].mxu0 %v1666
        %v1918 = vpop.f32.mrb[0].mxu0
        %v1919 = vadd.f32 0.0, %v1918
        %v1920 = vpop.f32.mrb[0].mxu0
        %v1921 = vadd.f32 0.0, %v1920
        %1922 = vmatprep.mubr.f32.mxu0 0.0
        %1923 = vmatmul.mubr.f32.gmra.mrb[0].mxu0 %v1668
        %v1924 = vpop.f32.mrb[0].mxu0
        %v1925 = vadd.f32 0.0, %v1924
        %v1926 = vpop.f32.mrb[0].mxu0
        %v1927 = vadd.f32 0.0, %v1926
        %1928 = vmatprep.mubr.f32.mxu0 0.0
        %1929 = vmatmul.mubr.f32.gmra.mrb[0].mxu0 %v1670
        %v1930 = vpop.f32.mrb[0].mxu0
        %v1931 = vadd.f32 0.0, %v1930
        %v1932 = vpop.f32.mrb[0].mxu0
        %v1933 = vadd.f32 0.0, %v1932
        %1934 = vmatprep.mubr.f32.mxu0 0.0
        %1935 = vmatmul.mubr.f32.gmra.mrb[0].mxu0 %v1672
        %v1936 = vpop.f32.mrb[0].mxu0
        %v1937 = vadd.f32 0.0, %v1936
        %v1938 = vpop.f32.mrb[0].mxu0
        %v1939 = vadd.f32 0.0, %v1938
        %1940 = vdwg.mxu0
        %1941 = vmatprep.subr.mxu0 %v1652
        %1942 = vmatpush1.msra.mxu0 %v1651
        %1943 = vmatprep.subr.mxu0 0.0
        %1944 = vmatpush1.msra.mxu0 0.0
        %1945 = vmatprep.subr.mxu0 0.0
        %1946 = vmatpush1.msra.mxu0 0.0
        %1947 = vmatprep.subr.mxu0 0.0
        %1948 = vmatpush1.msra.mxu0 0.0
        %1949 = vmatprep.subr.mxu0 0.0
        %1950 = vmatpush1.msra.mxu0 0.0
        %1951 = vmatprep.subr.mxu0 0.0
        %1952 = vmatpush1.msra.mxu0 0.0
        %1953 = vmatprep.subr.mxu0 0.0
        %1954 = vmatpush1.msra.mxu0 0.0
        %1955 = vmatprep.subr.mxu0 0.0
        %1956 = vmatpush1.msra.mxu0 0.0
        %1957 = vmatprep.subr.mxu0 0.0
        %1958 = vmatpush1.msra.mxu0 0.0
        %1959 = vmatprep.subr.mxu0 0.0
        %1960 = vmatpush1.msra.mxu0 0.0
        %1961 = vmatprep.subr.mxu0 0.0
        %1962 = vmatpush1.msra.mxu0 0.0
        %1963 = vmatprep.subr.mxu0 0.0
        %1964 = vmatpush1.msra.mxu0 0.0
        %1965 = vmatprep.subr.mxu0 0.0
        %1966 = vmatpush1.msra.mxu0 0.0
        %1967 = vmatprep.subr.mxu0 0.0
        %1968 = vmatpush1.msra.mxu0 0.0
        %1969 = vmatprep.subr.mxu0 0.0
        %1970 = vmatpush1.msra.mxu0 0.0
        %1971 = vmatprep.subr.mxu0 0.0
        %1972 = vmatpush1.msra.mxu0 0.0
        %1973 = vmatprep.subr.mxu0 0.0
        %1974 = vmatpush1.msra.mxu0 0.0
        %1975 = vmatprep.subr.mxu0 0.0
        %1976 = vmatpush1.msra.mxu0 0.0
        %1977 = vmatprep.subr.mxu0 0.0
        %1978 = vmatpush1.msra.mxu0 0.0
        %1979 = vmatprep.subr.mxu0 0.0
        %1980 = vmatpush1.msra.mxu0 0.0
        %1981 = vmatprep.subr.mxu0 0.0
        %1982 = vmatpush1.msra.mxu0 0.0
        %1983 = vmatprep.subr.mxu0 0.0
        %1984 = vmatpush1.msra.mxu0 0.0
        %1985 = vmatprep.subr.mxu0 0.0
        %1986 = vmatpush1.msra.mxu0 0.0
        %1987 = vmatprep.subr.mxu0 0.0
        %1988 = vmatpush1.msra.mxu0 0.0
        %1989 = vmatprep.subr.mxu0 0.0
        %1990 = vmatpush1.msra.mxu0 0.0
        %1991 = vmatprep.subr.mxu0 0.0
        %1992 = vmatpush1.msra.mxu0 0.0
        %1993 = vmatprep.subr.mxu0 0.0
        %1994 = vmatpush1.msra.mxu0 0.0
        %1995 = vmatprep.subr.mxu0 0.0
        %1996 = vmatpush1.msra.mxu0 0.0
        %1997 = vmatprep.subr.mxu0 0.0
        %1998 = vmatpush1.msra.mxu0 0.0
        %1999 = vmatprep.subr.mxu0 0.0
        %2000 = vmatpush1.msra.mxu0 0.0
        %2001 = vmatprep.subr.mxu0 0.0
        %2002 = vmatpush1.msra.mxu0 0.0
        %2003 = vmatprep.subr.mxu0 0.0
        %2004 = vmatpush1.msra.mxu0 0.0
        %2005 = vmatprep.mubr.f32.mxu0 0.0
        %2006 = vmatmul.mubr.f32.gmra.mrb[0].mxu0 %v1666
        %v2007 = vpop.f32.mrb[0].mxu0
        %v2008 = vadd.f32 0.0, %v2007
        %v2009 = vpop.f32.mrb[0].mxu0
        %v2010 = vadd.f32 0.0, %v2009
        %2011 = vmatprep.mubr.f32.mxu0 0.0
        %2012 = vmatmul.mubr.f32.gmra.mrb[0].mxu0 %v1668
        %v2013 = vpop.f32.mrb[0].mxu0
        %v2014 = vadd.f32 0.0, %v2013
        %v2015 = vpop.f32.mrb[0].mxu0
        %v2016 = vadd.f32 0.0, %v2015
        %2017 = vmatprep.mubr.f32.mxu0 0.0
        %2018 = vmatmul.mubr.f32.gmra.mrb[0].mxu0 %v1670
        %v2019 = vpop.f32.mrb[0].mxu0
        %v2020 = vadd.f32 0.0, %v2019
        %v2021 = vpop.f32.mrb[0].mxu0
        %v2022 = vadd.f32 0.0, %v2021
        %2023 = vmatprep.mubr.f32.mxu0 0.0
        %2024 = vmatmul.mubr.f32.gmra.mrb[0].mxu0 %v1672
        %v2025 = vpop.f32.mrb[0].mxu0
        %v2026 = vadd.f32 0.0, %v2025
        %v2027 = vpop.f32.mrb[0].mxu0
        %v2028 = vadd.f32 0.0, %v2027
        %2029 = vdwg.mxu0
        %v2030 = vsel %vm1665, %v824, 0
        %v2032 = vsel %vm1665, %v825, 0
        %v2034 = vsel %vm1665, %v826, 0
        %v2036 = vsel %vm1665, %v827, 0
        %2038 = vmatprep.subr.mxu0 %v793
        %2039 = vmatpush1.msra.mxu0 %v792
        %2040 = vmatprep.subr.mxu0 0.0
        %2041 = vmatpush1.msra.mxu0 0.0
        %2042 = vmatprep.subr.mxu0 0.0
        %2043 = vmatpush1.msra.mxu0 0.0
        %2044 = vmatprep.subr.mxu0 0.0
        %2045 = vmatpush1.msra.mxu0 0.0
        %2046 = vmatprep.subr.mxu0 0.0
        %2047 = vmatpush1.msra.mxu0 0.0
        %2048 = vmatprep.subr.mxu0 0.0
        %2049 = vmatpush1.msra.mxu0 0.0
        %2050 = vmatprep.subr.mxu0 0.0
        %2051 = vmatpush1.msra.mxu0 0.0
        %2052 = vmatprep.subr.mxu0 0.0
        %2053 = vmatpush1.msra.mxu0 0.0
        %2054 = vmatprep.subr.mxu0 0.0
        %2055 = vmatpush1.msra.mxu0 0.0
        %2056 = vmatprep.subr.mxu0 0.0
        %2057 = vmatpush1.msra.mxu0 0.0
        %2058 = vmatprep.subr.mxu0 0.0
        %2059 = vmatpush1.msra.mxu0 0.0
        %2060 = vmatprep.subr.mxu0 0.0
        %2061 = vmatpush1.msra.mxu0 0.0
        %2062 = vmatprep.subr.mxu0 0.0
        %2063 = vmatpush1.msra.mxu0 0.0
        %2064 = vmatprep.subr.mxu0 0.0
        %2065 = vmatpush1.msra.mxu0 0.0
        %2066 = vmatprep.subr.mxu0 0.0
        %2067 = vmatpush1.msra.mxu0 0.0
        %2068 = vmatprep.subr.mxu0 0.0
        %2069 = vmatpush1.msra.mxu0 0.0
        %2070 = vmatprep.subr.mxu0 0.0
        %2071 = vmatpush1.msra.mxu0 0.0
        %2072 = vmatprep.subr.mxu0 0.0
        %2073 = vmatpush1.msra.mxu0 0.0
        %2074 = vmatprep.subr.mxu0 0.0
        %2075 = vmatpush1.msra.mxu0 0.0
        %2076 = vmatprep.subr.mxu0 0.0
        %2077 = vmatpush1.msra.mxu0 0.0
        %2078 = vmatprep.subr.mxu0 0.0
        %2079 = vmatpush1.msra.mxu0 0.0
        %2080 = vmatprep.subr.mxu0 0.0
        %2081 = vmatpush1.msra.mxu0 0.0
        %2082 = vmatprep.subr.mxu0 0.0
        %2083 = vmatpush1.msra.mxu0 0.0
        %2084 = vmatprep.subr.mxu0 0.0
        %2085 = vmatpush1.msra.mxu0 0.0
        %2086 = vmatprep.subr.mxu0 0.0
        %2087 = vmatpush1.msra.mxu0 0.0
        %2088 = vmatprep.subr.mxu0 0.0
        %2089 = vmatpush1.msra.mxu0 0.0
        %2090 = vmatprep.subr.mxu0 0.0
        %2091 = vmatpush1.msra.mxu0 0.0
        %2092 = vmatprep.subr.mxu0 0.0
        %2093 = vmatpush1.msra.mxu0 0.0
        %2094 = vmatprep.subr.mxu0 0.0
        %2095 = vmatpush1.msra.mxu0 0.0
        %2096 = vmatprep.subr.mxu0 0.0
        %2097 = vmatpush1.msra.mxu0 0.0
        %2098 = vmatprep.subr.mxu0 0.0
        %2099 = vmatpush1.msra.mxu0 0.0
        %2100 = vmatprep.subr.mxu0 0.0
        %2101 = vmatpush1.msra.mxu0 0.0
        %2102 = vmatprep.mubr.f32.mxu0 0.0
        %2103 = vmatmul.mubr.f32.gmra.mrb[0].mxu0 %v2030
        %v2104 = vpop.f32.mrb[0].mxu0
        %v2105 = vadd.f32 %v1741, %v2104
        %v2106 = vpop.f32.mrb[0].mxu0
        %v2107 = vadd.f32 %v1743, %v2106
        %2108 = vmatprep.mubr.f32.mxu0 0.0
        %2109 = vmatmul.mubr.f32.gmra.mrb[0].mxu0 %v2032
        %v2110 = vpop.f32.mrb[0].mxu0
        %v2111 = vadd.f32 %v1747, %v2110
        %v2112 = vpop.f32.mrb[0].mxu0
        %v2113 = vadd.f32 %v1749, %v2112
        %2114 = vmatprep.mubr.f32.mxu0 0.0
        %2115 = vmatmul.mubr.f32.gmra.mrb[0].mxu0 %v2034
        %v2116 = vpop.f32.mrb[0].mxu0
        %v2117 = vadd.f32 %v1753, %v2116
        %v2118 = vpop.f32.mrb[0].mxu0
        %v2119 = vadd.f32 %v1755, %v2118
        %2120 = vmatprep.mubr.f32.mxu0 0.0
        %2121 = vmatmul.mubr.f32.gmra.mrb[0].mxu0 %v2036
        %v2122 = vpop.f32.mrb[0].mxu0
        %v2123 = vadd.f32 %v1759, %v2122
        %v2124 = vpop.f32.mrb[0].mxu0
        %v2125 = vadd.f32 %v1761, %v2124
        %2126 = vdwg.mxu0
        %2127 = vmatprep.subr.mxu0 %v795
        %2128 = vmatpush1.msra.mxu0 %v794
        %2129 = vmatprep.subr.mxu0 0.0
        %2130 = vmatpush1.msra.mxu0 0.0
        %2131 = vmatprep.subr.mxu0 0.0
        %2132 = vmatpush1.msra.mxu0 0.0
        %2133 = vmatprep.subr.mxu0 0.0
        %2134 = vmatpush1.msra.mxu0 0.0
        %2135 = vmatprep.subr.mxu0 0.0
        %2136 = vmatpush1.msra.mxu0 0.0
        %2137 = vmatprep.subr.mxu0 0.0
        %2138 = vmatpush1.msra.mxu0 0.0
        %2139 = vmatprep.subr.mxu0 0.0
        %2140 = vmatpush1.msra.mxu0 0.0
        %2141 = vmatprep.subr.mxu0 0.0
        %2142 = vmatpush1.msra.mxu0 0.0
        %2143 = vmatprep.subr.mxu0 0.0
        %2144 = vmatpush1.msra.mxu0 0.0
        %2145 = vmatprep.subr.mxu0 0.0
        %2146 = vmatpush1.msra.mxu0 0.0
        %2147 = vmatprep.subr.mxu0 0.0
        %2148 = vmatpush1.msra.mxu0 0.0
        %2149 = vmatprep.subr.mxu0 0.0
        %2150 = vmatpush1.msra.mxu0 0.0
        %2151 = vmatprep.subr.mxu0 0.0
        %2152 = vmatpush1.msra.mxu0 0.0
        %2153 = vmatprep.subr.mxu0 0.0
        %2154 = vmatpush1.msra.mxu0 0.0
        %2155 = vmatprep.subr.mxu0 0.0
        %2156 = vmatpush1.msra.mxu0 0.0
        %2157 = vmatprep.subr.mxu0 0.0
        %2158 = vmatpush1.msra.mxu0 0.0
        %2159 = vmatprep.subr.mxu0 0.0
        %2160 = vmatpush1.msra.mxu0 0.0
        %2161 = vmatprep.subr.mxu0 0.0
        %2162 = vmatpush1.msra.mxu0 0.0
        %2163 = vmatprep.subr.mxu0 0.0
        %2164 = vmatpush1.msra.mxu0 0.0
        %2165 = vmatprep.subr.mxu0 0.0
        %2166 = vmatpush1.msra.mxu0 0.0
        %2167 = vmatprep.subr.mxu0 0.0
        %2168 = vmatpush1.msra.mxu0 0.0
        %2169 = vmatprep.subr.mxu0 0.0
        %2170 = vmatpush1.msra.mxu0 0.0
        %2171 = vmatprep.subr.mxu0 0.0
        %2172 = vmatpush1.msra.mxu0 0.0
        %2173 = vmatprep.subr.mxu0 0.0
        %2174 = vmatpush1.msra.mxu0 0.0
        %2175 = vmatprep.subr.mxu0 0.0
        %2176 = vmatpush1.msra.mxu0 0.0
        %2177 = vmatprep.subr.mxu0 0.0
        %2178 = vmatpush1.msra.mxu0 0.0
        %2179 = vmatprep.subr.mxu0 0.0
        %2180 = vmatpush1.msra.mxu0 0.0
        %2181 = vmatprep.subr.mxu0 0.0
        %2182 = vmatpush1.msra.mxu0 0.0
        %2183 = vmatprep.subr.mxu0 0.0
        %2184 = vmatpush1.msra.mxu0 0.0
        %2185 = vmatprep.subr.mxu0 0.0
        %2186 = vmatpush1.msra.mxu0 0.0
        %2187 = vmatprep.subr.mxu0 0.0
        %2188 = vmatpush1.msra.mxu0 0.0
        %2189 = vmatprep.subr.mxu0 0.0
        %2190 = vmatpush1.msra.mxu0 0.0
        %2191 = vmatprep.mubr.f32.mxu0 0.0
        %2192 = vmatmul.mubr.f32.gmra.mrb[0].mxu0 %v2030
        %v2193 = vpop.f32.mrb[0].mxu0
        %v2194 = vadd.f32 %v1830, %v2193
        %v2195 = vpop.f32.mrb[0].mxu0
        %v2196 = vadd.f32 %v1832, %v2195
        %2197 = vmatprep.mubr.f32.mxu0 0.0
        %2198 = vmatmul.mubr.f32.gmra.mrb[0].mxu0 %v2032
        %v2199 = vpop.f32.mrb[0].mxu0
        %v2200 = vadd.f32 %v1836, %v2199
        %v2201 = vpop.f32.mrb[0].mxu0
        %v2202 = vadd.f32 %v1838, %v2201
        %2203 = vmatprep.mubr.f32.mxu0 0.0
        %2204 = vmatmul.mubr.f32.gmra.mrb[0].mxu0 %v2034
        %v2205 = vpop.f32.mrb[0].mxu0
        %v2206 = vadd.f32 %v1842, %v2205
        %v2207 = vpop.f32.mrb[0].mxu0
        %v2208 = vadd.f32 %v1844, %v2207
        %2209 = vmatprep.mubr.f32.mxu0 0.0
        %2210 = vmatmul.mubr.f32.gmra.mrb[0].mxu0 %v2036
        %v2211 = vpop.f32.mrb[0].mxu0
        %v2212 = vadd.f32 %v1848, %v2211
        %v2213 = vpop.f32.mrb[0].mxu0
        %v2214 = vadd.f32 %v1850, %v2213
        %2215 = vdwg.mxu0
        %2216 = vmatprep.subr.mxu0 %v797
        %2217 = vmatpush1.msra.mxu0 %v796
        %2218 = vmatprep.subr.mxu0 0.0
        %2219 = vmatpush1.msra.mxu0 0.0
        %2220 = vmatprep.subr.mxu0 0.0
        %2221 = vmatpush1.msra.mxu0 0.0
        %2222 = vmatprep.subr.mxu0 0.0
        %2223 = vmatpush1.msra.mxu0 0.0
        %2224 = vmatprep.subr.mxu0 0.0
        %2225 = vmatpush1.msra.mxu0 0.0
        %2226 = vmatprep.subr.mxu0 0.0
        %2227 = vmatpush1.msra.mxu0 0.0
        %2228 = vmatprep.subr.mxu0 0.0
        %2229 = vmatpush1.msra.mxu0 0.0
        %2230 = vmatprep.subr.mxu0 0.0
        %2231 = vmatpush1.msra.mxu0 0.0
        %2232 = vmatprep.subr.mxu0 0.0
        %2233 = vmatpush1.msra.mxu0 0.0
        %2234 = vmatprep.subr.mxu0 0.0
        %2235 = vmatpush1.msra.mxu0 0.0
        %2236 = vmatprep.subr.mxu0 0.0
        %2237 = vmatpush1.msra.mxu0 0.0
        %2238 = vmatprep.subr.mxu0 0.0
        %2239 = vmatpush1.msra.mxu0 0.0
        %2240 = vmatprep.subr.mxu0 0.0
        %2241 = vmatpush1.msra.mxu0 0.0
        %2242 = vmatprep.subr.mxu0 0.0
        %2243 = vmatpush1.msra.mxu0 0.0
        %2244 = vmatprep.subr.mxu0 0.0
        %2245 = vmatpush1.msra.mxu0 0.0
        %2246 = vmatprep.subr.mxu0 0.0
        %2247 = vmatpush1.msra.mxu0 0.0
        %2248 = vmatprep.subr.mxu0 0.0
        %2249 = vmatpush1.msra.mxu0 0.0
        %2250 = vmatprep.subr.mxu0 0.0
        %2251 = vmatpush1.msra.mxu0 0.0
        %2252 = vmatprep.subr.mxu0 0.0
        %2253 = vmatpush1.msra.mxu0 0.0
        %2254 = vmatprep.subr.mxu0 0.0
        %2255 = vmatpush1.msra.mxu0 0.0
        %2256 = vmatprep.subr.mxu0 0.0
        %2257 = vmatpush1.msra.mxu0 0.0
        %2258 = vmatprep.subr.mxu0 0.0
        %2259 = vmatpush1.msra.mxu0 0.0
        %2260 = vmatprep.subr.mxu0 0.0
        %2261 = vmatpush1.msra.mxu0 0.0
        %2262 = vmatprep.subr.mxu0 0.0
        %2263 = vmatpush1.msra.mxu0 0.0
        %2264 = vmatprep.subr.mxu0 0.0
        %2265 = vmatpush1.msra.mxu0 0.0
        %2266 = vmatprep.subr.mxu0 0.0
        %2267 = vmatpush1.msra.mxu0 0.0
        %2268 = vmatprep.subr.mxu0 0.0
        %2269 = vmatpush1.msra.mxu0 0.0
        %2270 = vmatprep.subr.mxu0 0.0
        %2271 = vmatpush1.msra.mxu0 0.0
        %2272 = vmatprep.subr.mxu0 0.0
        %2273 = vmatpush1.msra.mxu0 0.0
        %2274 = vmatprep.subr.mxu0 0.0
        %2275 = vmatpush1.msra.mxu0 0.0
        %2276 = vmatprep.subr.mxu0 0.0
        %2277 = vmatpush1.msra.mxu0 0.0
        %2278 = vmatprep.subr.mxu0 0.0
        %2279 = vmatpush1.msra.mxu0 0.0
        %2280 = vmatprep.mubr.f32.mxu0 0.0
        %2281 = vmatmul.mubr.f32.gmra.mrb[0].mxu0 %v2030
        %v2282 = vpop.f32.mrb[0].mxu0
        %v2283 = vadd.f32 %v1919, %v2282
        %v2284 = vpop.f32.mrb[0].mxu0
        %v2285 = vadd.f32 %v1921, %v2284
        %2286 = vmatprep.mubr.f32.mxu0 0.0
        %2287 = vmatmul.mubr.f32.gmra.mrb[0].mxu0 %v2032
        %v2288 = vpop.f32.mrb[0].mxu0
        %v2289 = vadd.f32 %v1925, %v2288
        %v2290 = vpop.f32.mrb[0].mxu0
        %v2291 = vadd.f32 %v1927, %v2290
        %2292 = vmatprep.mubr.f32.mxu0 0.0
        %2293 = vmatmul.mubr.f32.gmra.mrb[0].mxu0 %v2034
        %v2294 = vpop.f32.mrb[0].mxu0
        %v2295 = vadd.f32 %v1931, %v2294
        %v2296 = vpop.f32.mrb[0].mxu0
        %v2297 = vadd.f32 %v1933, %v2296
        %2298 = vmatprep.mubr.f32.mxu0 0.0
        %2299 = vmatmul.mubr.f32.gmra.mrb[0].mxu0 %v2036
        %v2300 = vpop.f32.mrb[0].mxu0
        %v2301 = vadd.f32 %v1937, %v2300
        %v2302 = vpop.f32.mrb[0].mxu0
        %v2303 = vadd.f32 %v1939, %v2302
        %2304 = vdwg.mxu0
        %2305 = vmatprep.subr.mxu0 %v799
        %2306 = vmatpush1.msra.mxu0 %v798
        %2307 = vmatprep.subr.mxu0 0.0
        %2308 = vmatpush1.msra.mxu0 0.0
        %2309 = vmatprep.subr.mxu0 0.0
        %2310 = vmatpush1.msra.mxu0 0.0
        %2311 = vmatprep.subr.mxu0 0.0
        %2312 = vmatpush1.msra.mxu0 0.0
        %2313 = vmatprep.subr.mxu0 0.0
        %2314 = vmatpush1.msra.mxu0 0.0
        %2315 = vmatprep.subr.mxu0 0.0
        %2316 = vmatpush1.msra.mxu0 0.0
        %2317 = vmatprep.subr.mxu0 0.0
        %2318 = vmatpush1.msra.mxu0 0.0
        %2319 = vmatprep.subr.mxu0 0.0
        %2320 = vmatpush1.msra.mxu0 0.0
        %2321 = vmatprep.subr.mxu0 0.0
        %2322 = vmatpush1.msra.mxu0 0.0
        %2323 = vmatprep.subr.mxu0 0.0
        %2324 = vmatpush1.msra.mxu0 0.0
        %2325 = vmatprep.subr.mxu0 0.0
        %2326 = vmatpush1.msra.mxu0 0.0
        %2327 = vmatprep.subr.mxu0 0.0
        %2328 = vmatpush1.msra.mxu0 0.0
        %2329 = vmatprep.subr.mxu0 0.0
        %2330 = vmatpush1.msra.mxu0 0.0
        %2331 = vmatprep.subr.mxu0 0.0
        %2332 = vmatpush1.msra.mxu0 0.0
        %2333 = vmatprep.subr.mxu0 0.0
        %2334 = vmatpush1.msra.mxu0 0.0
        %2335 = vmatprep.subr.mxu0 0.0
        %2336 = vmatpush1.msra.mxu0 0.0
        %2337 = vmatprep.subr.mxu0 0.0
        %2338 = vmatpush1.msra.mxu0 0.0
        %2339 = vmatprep.subr.mxu0 0.0
        %2340 = vmatpush1.msra.mxu0 0.0
        %2341 = vmatprep.subr.mxu0 0.0
        %2342 = vmatpush1.msra.mxu0 0.0
        %2343 = vmatprep.subr.mxu0 0.0
        %2344 = vmatpush1.msra.mxu0 0.0
        %2345 = vmatprep.subr.mxu0 0.0
        %2346 = vmatpush1.msra.mxu0 0.0
        %2347 = vmatprep.subr.mxu0 0.0
        %2348 = vmatpush1.msra.mxu0 0.0
        %2349 = vmatprep.subr.mxu0 0.0
        %2350 = vmatpush1.msra.mxu0 0.0
        %2351 = vmatprep.subr.mxu0 0.0
        %2352 = vmatpush1.msra.mxu0 0.0
        %2353 = vmatprep.subr.mxu0 0.0
        %2354 = vmatpush1.msra.mxu0 0.0
        %2355 = vmatprep.subr.mxu0 0.0
        %2356 = vmatpush1.msra.mxu0 0.0
        %2357 = vmatprep.subr.mxu0 0.0
        %2358 = vmatpush1.msra.mxu0 0.0
        %2359 = vmatprep.subr.mxu0 0.0
        %2360 = vmatpush1.msra.mxu0 0.0
        %2361 = vmatprep.subr.mxu0 0.0
        %2362 = vmatpush1.msra.mxu0 0.0
        %2363 = vmatprep.subr.mxu0 0.0
        %2364 = vmatpush1.msra.mxu0 0.0
        %2365 = vmatprep.subr.mxu0 0.0
        %2366 = vmatpush1.msra.mxu0 0.0
        %2367 = vmatprep.subr.mxu0 0.0
        %2368 = vmatpush1.msra.mxu0 0.0
        %2369 = vmatprep.mubr.f32.mxu0 0.0
        %2370 = vmatmul.mubr.f32.gmra.mrb[0].mxu0 %v2030
        %v2371 = vpop.f32.mrb[0].mxu0
        %v2372 = vadd.f32 %v2008, %v2371
        %v2373 = vpop.f32.mrb[0].mxu0
        %v2374 = vadd.f32 %v2010, %v2373
        %2375 = vmatprep.mubr.f32.mxu0 0.0
        %2376 = vmatmul.mubr.f32.gmra.mrb[0].mxu0 %v2032
        %v2377 = vpop.f32.mrb[0].mxu0
        %v2378 = vadd.f32 %v2014, %v2377
        %v2379 = vpop.f32.mrb[0].mxu0
        %v2380 = vadd.f32 %v2016, %v2379
        %2381 = vmatprep.mubr.f32.mxu0 0.0
        %2382 = vmatmul.mubr.f32.gmra.mrb[0].mxu0 %v2034
        %v2383 = vpop.f32.mrb[0].mxu0
        %v2384 = vadd.f32 %v2020, %v2383
        %v2385 = vpop.f32.mrb[0].mxu0
        %v2386 = vadd.f32 %v2022, %v2385
        %2387 = vmatprep.mubr.f32.mxu0 0.0
        %2388 = vmatmul.mubr.f32.gmra.mrb[0].mxu0 %v2036
        %v2389 = vpop.f32.mrb[0].mxu0
        %v2390 = vadd.f32 %v2026, %v2389
        %v2391 = vpop.f32.mrb[0].mxu0
        %v2392 = vadd.f32 %v2028, %v2391
        %2393 = vdwg.mxu0
        %v2394 = vadd.f32 %v808, %v1645
        %v2395 = vadd.f32 %v809, %v1646
        %v2396 = vadd.f32 %v810, %v1647
        %v2397 = vadd.f32 %v811, %v1648
        %v2398 = vadd.f32 %v812, %v1649
        %v2399 = vadd.f32 %v813, %v1650
        %v2400 = vadd.f32 %v814, %v1651
        %v2401 = vadd.f32 %v815, %v1652
        %2402 = vrot.lane.b32.xlu0 %v2394, 17
        %v2403 = vpop.permute.xlu0 %2402
        %2404 = vrot.lane.b32.xlu0 %v2395, 17
        %v2405 = vpop.permute.xlu0 %2404
        %2406 = vrot.lane.b32.xlu0 %v2396, 17
        %v2407 = vpop.permute.xlu0 %2406
        %2408 = vrot.lane.b32.xlu0 %v2397, 17
        %v2409 = vpop.permute.xlu0 %2408
        %2410 = vrot.lane.b32.xlu0 %v2398, 17
        %v2411 = vpop.permute.xlu0 %2410
        %2412 = vrot.lane.b32.xlu0 %v2399, 17
        %v2413 = vpop.permute.xlu0 %2412
        %2414 = vrot.lane.b32.xlu0 %v2400, 17
        %v2415 = vpop.permute.xlu0 %2414
        %2416 = vrot.lane.b32.xlu0 %v2401, 17
        %v2417 = vpop.permute.xlu0 %2416
        %v2418 = vsel %vm846, %v2415, %v2417
        %v2419 = vsel %vm846, %v2413, %v2415
        %v2420 = vsel %vm846, %v2411, %v2413
        %v2421 = vsel %vm846, %v2409, %v2411
        %v2422 = vsel %vm846, %v2407, %v2409
        %v2423 = vsel %vm846, %v2405, %v2407
        %v2424 = vsel %vm846, %v2403, %v2405
        %v2425 = vsel %vm846, %v2417, %v2403
        %v2426 = vmul.f32 %v2425, %v858
        %v2427 = vmul.f32 %v2424, %v862
        %v2428 = vmul.f32 %v2423, %v866
        %v2429 = vmul.f32 %v2422, %v870
        %v2430 = vmul.f32 %v2421, %v874
        %v2431 = vmul.f32 %v2420, %v878
        %v2432 = vmul.f32 %v2419, %v882
        %v2433 = vmul.f32 %v2418, %v886
        %2434 = vrot.lane.b32.xlu0 %v2394, 16
        %v2435 = vpop.permute.xlu0 %2434
        %2436 = vrot.lane.b32.xlu0 %v2395, 16
        %v2437 = vpop.permute.xlu0 %2436
        %2438 = vrot.lane.b32.xlu0 %v2396, 16
        %v2439 = vpop.permute.xlu0 %2438
        %2440 = vrot.lane.b32.xlu0 %v2397, 16
        %v2441 = vpop.permute.xlu0 %2440
        %2442 = vrot.lane.b32.xlu0 %v2398, 16
        %v2443 = vpop.permute.xlu0 %2442
        %2444 = vrot.lane.b32.xlu0 %v2399, 16
        %v2445 = vpop.permute.xlu0 %2444
        %2446 = vrot.lane.b32.xlu0 %v2400, 16
        %v2447 = vpop.permute.xlu0 %2446
        %2448 = vrot.lane.b32.xlu0 %v2401, 16
        %v2449 = vpop.permute.xlu0 %2448
        %v2450 = vsel %vm911, %v2447, %v2449
        %v2451 = vsel %vm911, %v2445, %v2447
        %v2452 = vsel %vm911, %v2443, %v2445
        %v2453 = vsel %vm911, %v2441, %v2443
        %v2454 = vsel %vm911, %v2439, %v2441
        %v2455 = vsel %vm911, %v2437, %v2439
        %v2456 = vsel %vm911, %v2435, %v2437
        %v2457 = vsel %vm911, %v2449, %v2435
        %v2458 = vmul.f32 %v2457, %v923
        %v2459 = vmul.f32 %v2456, %v927
        %v2460 = vmul.f32 %v2455, %v931
        %v2461 = vmul.f32 %v2454, %v935
        %v2462 = vmul.f32 %v2453, %v939
        %v2463 = vmul.f32 %v2452, %v943
        %v2464 = vmul.f32 %v2451, %v947
        %v2465 = vmul.f32 %v2450, %v951
        %2466 = vrot.lane.b32.xlu0 %v2394, 15
        %v2467 = vpop.permute.xlu0 %2466
        %2468 = vrot.lane.b32.xlu0 %v2395, 15
        %v2469 = vpop.permute.xlu0 %2468
        %2470 = vrot.lane.b32.xlu0 %v2396, 15
        %v2471 = vpop.permute.xlu0 %2470
        %2472 = vrot.lane.b32.xlu0 %v2397, 15
        %v2473 = vpop.permute.xlu0 %2472
        %2474 = vrot.lane.b32.xlu0 %v2398, 15
        %v2475 = vpop.permute.xlu0 %2474
        %2476 = vrot.lane.b32.xlu0 %v2399, 15
        %v2477 = vpop.permute.xlu0 %2476
        %2478 = vrot.lane.b32.xlu0 %v2400, 15
        %v2479 = vpop.permute.xlu0 %2478
        %2480 = vrot.lane.b32.xlu0 %v2401, 15
        %v2481 = vpop.permute.xlu0 %2480
        %v2482 = vsel %vm976, %v2479, %v2481
        %v2483 = vsel %vm976, %v2477, %v2479
        %v2484 = vsel %vm976, %v2475, %v2477
        %v2485 = vsel %vm976, %v2473, %v2475
        %v2486 = vsel %vm976, %v2471, %v2473
        %v2487 = vsel %vm976, %v2469, %v2471
        %v2488 = vsel %vm976, %v2467, %v2469
        %v2489 = vsel %vm976, %v2481, %v2467
        %v2490 = vmul.f32 %v2489, %v988
        %v2491 = vmul.f32 %v2488, %v992
        %v2492 = vmul.f32 %v2487, %v996
        %v2493 = vmul.f32 %v2486, %v1000
        %v2494 = vmul.f32 %v2485, %v1004
        %v2495 = vmul.f32 %v2484, %v1008
        %v2496 = vmul.f32 %v2483, %v1012
        %v2497 = vmul.f32 %v2482, %v1016
        %2498 = vrot.lane.b32.xlu0 %v2394, 1
        %v2499 = vpop.permute.xlu0 %2498
        %2500 = vrot.lane.b32.xlu0 %v2395, 1
        %v2501 = vpop.permute.xlu0 %2500
        %2502 = vrot.lane.b32.xlu0 %v2396, 1
        %v2503 = vpop.permute.xlu0 %2502
        %2504 = vrot.lane.b32.xlu0 %v2397, 1
        %v2505 = vpop.permute.xlu0 %2504
        %2506 = vrot.lane.b32.xlu0 %v2398, 1
        %v2507 = vpop.permute.xlu0 %2506
        %2508 = vrot.lane.b32.xlu0 %v2399, 1
        %v2509 = vpop.permute.xlu0 %2508
        %2510 = vrot.lane.b32.xlu0 %v2400, 1
        %v2511 = vpop.permute.xlu0 %2510
        %2512 = vrot.lane.b32.xlu0 %v2401, 1
        %v2513 = vpop.permute.xlu0 %2512
        %v2514 = vsel %vm1041, %v2511, %v2513
        %v2515 = vsel %vm1041, %v2509, %v2511
        %v2516 = vsel %vm1041, %v2507, %v2509
        %v2517 = vsel %vm1041, %v2505, %v2507
        %v2518 = vsel %vm1041, %v2503, %v2505
        %v2519 = vsel %vm1041, %v2501, %v2503
        %v2520 = vsel %vm1041, %v2499, %v2501
        %v2521 = vsel %vm1041, %v2513, %v2499
        %v2522 = vmul.f32 %v2521, %v1053
        %v2523 = vmul.f32 %v2520, %v1057
        %v2524 = vmul.f32 %v2519, %v1061
        %v2525 = vmul.f32 %v2518, %v1065
        %v2526 = vmul.f32 %v2517, %v1069
        %v2527 = vmul.f32 %v2516, %v1073
        %v2528 = vmul.f32 %v2515, %v1077
        %v2529 = vmul.f32 %v2514, %v1081
        %2530 = vrot.lane.b32.xlu0 %v2394, 127
        %v2531 = vpop.permute.xlu0 %2530
        %2532 = vrot.lane.b32.xlu0 %v2395, 127
        %v2533 = vpop.permute.xlu0 %2532
        %2534 = vrot.lane.b32.xlu0 %v2396, 127
        %v2535 = vpop.permute.xlu0 %2534
        %2536 = vrot.lane.b32.xlu0 %v2397, 127
        %v2537 = vpop.permute.xlu0 %2536
        %2538 = vrot.lane.b32.xlu0 %v2398, 127
        %v2539 = vpop.permute.xlu0 %2538
        %2540 = vrot.lane.b32.xlu0 %v2399, 127
        %v2541 = vpop.permute.xlu0 %2540
        %2542 = vrot.lane.b32.xlu0 %v2400, 127
        %v2543 = vpop.permute.xlu0 %2542
        %2544 = vrot.lane.b32.xlu0 %v2401, 127
        %v2545 = vpop.permute.xlu0 %2544
        %v2546 = vsel %vm1106, %v2543, %v2545
        %v2547 = vsel %vm1106, %v2541, %v2543
        %v2548 = vsel %vm1106, %v2539, %v2541
        %v2549 = vsel %vm1106, %v2537, %v2539
        %v2550 = vsel %vm1106, %v2535, %v2537
        %v2551 = vsel %vm1106, %v2533, %v2535
        %v2552 = vsel %vm1106, %v2531, %v2533
        %v2553 = vsel %vm1106, %v2545, %v2531
        %v2554 = vmul.f32 %v2552, %v1118
        %v2555 = vmul.f32 %v2551, %v1122
        %v2556 = vmul.f32 %v2550, %v1126
        %v2557 = vmul.f32 %v2549, %v1130
        %v2558 = vmul.f32 %v2548, %v1134
        %v2559 = vmul.f32 %v2547, %v1138
        %v2560 = vmul.f32 %v2546, %v1142
        %v2561 = vmul.f32 %v2553, %v1146
        %2562 = vrot.lane.b32.xlu0 %v2394, 113
        %v2563 = vpop.permute.xlu0 %2562
        %2564 = vrot.lane.b32.xlu0 %v2395, 113
        %v2565 = vpop.permute.xlu0 %2564
        %2566 = vrot.lane.b32.xlu0 %v2396, 113
        %v2567 = vpop.permute.xlu0 %2566
        %2568 = vrot.lane.b32.xlu0 %v2397, 113
        %v2569 = vpop.permute.xlu0 %2568
        %2570 = vrot.lane.b32.xlu0 %v2398, 113
        %v2571 = vpop.permute.xlu0 %2570
        %2572 = vrot.lane.b32.xlu0 %v2399, 113
        %v2573 = vpop.permute.xlu0 %2572
        %2574 = vrot.lane.b32.xlu0 %v2400, 113
        %v2575 = vpop.permute.xlu0 %2574
        %2576 = vrot.lane.b32.xlu0 %v2401, 113
        %v2577 = vpop.permute.xlu0 %2576
        %v2578 = vsel %vm1171, %v2575, %v2577
        %v2579 = vsel %vm1171, %v2573, %v2575
        %v2580 = vsel %vm1171, %v2571, %v2573
        %v2581 = vsel %vm1171, %v2569, %v2571
        %v2582 = vsel %vm1171, %v2567, %v2569
        %v2583 = vsel %vm1171, %v2565, %v2567
        %v2584 = vsel %vm1171, %v2563, %v2565
        %v2585 = vsel %vm1171, %v2577, %v2563
        %v2586 = vmul.f32 %v2584, %v1183
        %v2587 = vmul.f32 %v2583, %v1187
        %v2588 = vmul.f32 %v2582, %v1191
        %v2589 = vmul.f32 %v2581, %v1195
        %v2590 = vmul.f32 %v2580, %v1199
        %v2591 = vmul.f32 %v2579, %v1203
        %v2592 = vmul.f32 %v2578, %v1207
        %v2593 = vmul.f32 %v2585, %v1211
        %2594 = vrot.lane.b32.xlu0 %v2394, 112
        %v2595 = vpop.permute.xlu0 %2594
        %2596 = vrot.lane.b32.xlu0 %v2395, 112
        %v2597 = vpop.permute.xlu0 %2596
        %2598 = vrot.lane.b32.xlu0 %v2396, 112
        %v2599 = vpop.permute.xlu0 %2598
        %2600 = vrot.lane.b32.xlu0 %v2397, 112
        %v2601 = vpop.permute.xlu0 %2600
        %2602 = vrot.lane.b32.xlu0 %v2398, 112
        %v2603 = vpop.permute.xlu0 %2602
        %2604 = vrot.lane.b32.xlu0 %v2399, 112
        %v2605 = vpop.permute.xlu0 %2604
        %2606 = vrot.lane.b32.xlu0 %v2400, 112
        %v2607 = vpop.permute.xlu0 %2606
        %2608 = vrot.lane.b32.xlu0 %v2401, 112
        %v2609 = vpop.permute.xlu0 %2608
        %v2610 = vsel %vm1236, %v2607, %v2609
        %v2611 = vsel %vm1236, %v2605, %v2607
        %v2612 = vsel %vm1236, %v2603, %v2605
        %v2613 = vsel %vm1236, %v2601, %v2603
        %v2614 = vsel %vm1236, %v2599, %v2601
        %v2615 = vsel %vm1236, %v2597, %v2599
        %v2616 = vsel %vm1236, %v2595, %v2597
        %v2617 = vsel %vm1236, %v2609, %v2595
        %v2618 = vmul.f32 %v2616, %v1248
        %v2619 = vmul.f32 %v2615, %v1252
        %v2620 = vmul.f32 %v2614, %v1256
        %v2621 = vmul.f32 %v2613, %v1260
        %v2622 = vmul.f32 %v2612, %v1264
        %v2623 = vmul.f32 %v2611, %v1268
        %v2624 = vmul.f32 %v2610, %v1272
        %v2625 = vmul.f32 %v2617, %v1276
        %2626 = vrot.lane.b32.xlu0 %v2394, 111
        %v2627 = vpop.permute.xlu0 %2626
        %2628 = vrot.lane.b32.xlu0 %v2395, 111
        %v2629 = vpop.permute.xlu0 %2628
        %2630 = vrot.lane.b32.xlu0 %v2396, 111
        %v2631 = vpop.permute.xlu0 %2630
        %2632 = vrot.lane.b32.xlu0 %v2397, 111
        %v2633 = vpop.permute.xlu0 %2632
        %2634 = vrot.lane.b32.xlu0 %v2398, 111
        %v2635 = vpop.permute.xlu0 %2634
        %2636 = vrot.lane.b32.xlu0 %v2399, 111
        %v2637 = vpop.permute.xlu0 %2636
        %2638 = vrot.lane.b32.xlu0 %v2400, 111
        %v2639 = vpop.permute.xlu0 %2638
        %2640 = vrot.lane.b32.xlu0 %v2401, 111
        %v2641 = vpop.permute.xlu0 %2640
        %v2642 = vsel %vm1301, %v2639, %v2641
        %v2643 = vsel %vm1301, %v2637, %v2639
        %v2644 = vsel %vm1301, %v2635, %v2637
        %v2645 = vsel %vm1301, %v2633, %v2635
        %v2646 = vsel %vm1301, %v2631, %v2633
        %v2647 = vsel %vm1301, %v2629, %v2631
        %v2648 = vsel %vm1301, %v2627, %v2629
        %v2649 = vsel %vm1301, %v2641, %v2627
        %v2650 = vmul.f32 %v2648, %v1313
        %v2651 = vmul.f32 %v2647, %v1317
        %v2652 = vmul.f32 %v2646, %v1321
        %v2653 = vmul.f32 %v2645, %v1325
        %v2654 = vmul.f32 %v2644, %v1329
        %v2655 = vmul.f32 %v2643, %v1333
        %v2656 = vmul.f32 %v2642, %v1337
        %v2657 = vmul.f32 %v2649, %v1341
        %s2658 = scalar_lea.vmem [#allocation5], 8
        %v2659 = vld [vmem:[%s2658] sm:$0xff]
        %s2660 = scalar_lea.vmem %s5, 8
        %v2661 = vld [vmem:[%s2660] sm:$0xff]
        %2663 = vset.pattern.permute.xlu0 0
        %2664 = vperm.xlu0 %2663, %v2661
        %v2665 = vpop.permute.xlu0 %2664
        %v2668 = vsel %vm1357, %v2659, 0
        %2670 = vmatprep.subr.mxu0 %v2427
        %2671 = vmatpush1.msra.mxu0 %v2426
        %2672 = vmatprep.subr.mxu0 %v2459
        %2673 = vmatpush1.msra.mxu0 %v2458
        %2674 = vmatprep.subr.mxu0 %v2491
        %2675 = vmatpush1.msra.mxu0 %v2490
        %2676 = vmatprep.subr.mxu0 %v2523
        %2677 = vmatpush1.msra.mxu0 %v2522
        %2678 = vmatprep.subr.mxu0 %v2395
        %2679 = vmatpush1.msra.mxu0 %v2394
        %2680 = vmatprep.subr.mxu0 %v2555
        %2681 = vmatpush1.msra.mxu0 %v2554
        %2682 = vmatprep.subr.mxu0 %v2587
        %2683 = vmatpush1.msra.mxu0 %v2586
        %2684 = vmatprep.subr.mxu0 %v2619
        %2685 = vmatpush1.msra.mxu0 %v2618
        %2686 = vmatprep.subr.mxu0 %v2651
        %2687 = vmatpush1.msra.mxu0 %v2650
        %2688 = vmatprep.subr.mxu0 0.0
        %2689 = vmatpush1.msra.mxu0 0.0
        %2690 = vmatprep.subr.mxu0 0.0
        %2691 = vmatpush1.msra.mxu0 0.0
        %2692 = vmatprep.subr.mxu0 0.0
        %2693 = vmatpush1.msra.mxu0 0.0
        %2694 = vmatprep.subr.mxu0 0.0
        %2695 = vmatpush1.msra.mxu0 0.0
        %2696 = vmatprep.subr.mxu0 0.0
        %2697 = vmatpush1.msra.mxu0 0.0
        %2698 = vmatprep.subr.mxu0 0.0
        %2699 = vmatpush1.msra.mxu0 0.0
        %2700 = vmatprep.subr.mxu0 0.0
        %2701 = vmatpush1.msra.mxu0 0.0
        %2702 = vmatprep.subr.mxu0 0.0
        %2703 = vmatpush1.msra.mxu0 0.0
        %2704 = vmatprep.subr.mxu0 0.0
        %2705 = vmatpush1.msra.mxu0 0.0
        %2706 = vmatprep.subr.mxu0 0.0
        %2707 = vmatpush1.msra.mxu0 0.0
        %2708 = vmatprep.subr.mxu0 0.0
        %2709 = vmatpush1.msra.mxu0 0.0
        %2710 = vmatprep.subr.mxu0 0.0
        %2711 = vmatpush1.msra.mxu0 0.0
        %2712 = vmatprep.subr.mxu0 0.0
        %2713 = vmatpush1.msra.mxu0 0.0
        %2714 = vmatprep.subr.mxu0 0.0
        %2715 = vmatpush1.msra.mxu0 0.0
        %2716 = vmatprep.subr.mxu0 0.0
        %2717 = vmatpush1.msra.mxu0 0.0
        %2718 = vmatprep.subr.mxu0 0.0
        %2719 = vmatpush1.msra.mxu0 0.0
        %2720 = vmatprep.subr.mxu0 0.0
        %2721 = vmatpush1.msra.mxu0 0.0
        %2722 = vmatprep.subr.mxu0 0.0
        %2723 = vmatpush1.msra.mxu0 0.0
        %2724 = vmatprep.subr.mxu0 0.0
        %2725 = vmatpush1.msra.mxu0 0.0
        %2726 = vmatprep.subr.mxu0 0.0
        %2727 = vmatpush1.msra.mxu0 0.0
        %2728 = vmatprep.subr.mxu0 0.0
        %2729 = vmatpush1.msra.mxu0 0.0
        %2730 = vmatprep.subr.mxu0 0.0
        %2731 = vmatpush1.msra.mxu0 0.0
        %2732 = vmatprep.subr.mxu0 0.0
        %2733 = vmatpush1.msra.mxu0 0.0
        %2734 = vmatprep.mubr.f32.mxu0 0.0
        %2735 = vmatmul.mubr.f32.gmra.mrb[0].mxu0 %v2668
        %v2736 = vpop.f32.mrb[0].mxu0
        %v2737 = vadd.f32 %v2665, %v2736
        %v2738 = vpop.f32.mrb[0].mxu0
        %v2739 = vadd.f32 %v2665, %v2738
        %2740 = vdwg.mxu0
        %2741 = vmatprep.subr.mxu0 %v2429
        %2742 = vmatpush1.msra.mxu0 %v2428
        %2743 = vmatprep.subr.mxu0 %v2461
        %2744 = vmatpush1.msra.mxu0 %v2460
        %2745 = vmatprep.subr.mxu0 %v2493
        %2746 = vmatpush1.msra.mxu0 %v2492
        %2747 = vmatprep.subr.mxu0 %v2525
        %2748 = vmatpush1.msra.mxu0 %v2524
        %2749 = vmatprep.subr.mxu0 %v2397
        %2750 = vmatpush1.msra.mxu0 %v2396
        %2751 = vmatprep.subr.mxu0 %v2557
        %2752 = vmatpush1.msra.mxu0 %v2556
        %2753 = vmatprep.subr.mxu0 %v2589
        %2754 = vmatpush1.msra.mxu0 %v2588
        %2755 = vmatprep.subr.mxu0 %v2621
        %2756 = vmatpush1.msra.mxu0 %v2620
        %2757 = vmatprep.subr.mxu0 %v2653
        %2758 = vmatpush1.msra.mxu0 %v2652
        %2759 = vmatprep.subr.mxu0 0.0
        %2760 = vmatpush1.msra.mxu0 0.0
        %2761 = vmatprep.subr.mxu0 0.0
        %2762 = vmatpush1.msra.mxu0 0.0
        %2763 = vmatprep.subr.mxu0 0.0
        %2764 = vmatpush1.msra.mxu0 0.0
        %2765 = vmatprep.subr.mxu0 0.0
        %2766 = vmatpush1.msra.mxu0 0.0
        %2767 = vmatprep.subr.mxu0 0.0
        %2768 = vmatpush1.msra.mxu0 0.0
        %2769 = vmatprep.subr.mxu0 0.0
        %2770 = vmatpush1.msra.mxu0 0.0
        %2771 = vmatprep.subr.mxu0 0.0
        %2772 = vmatpush1.msra.mxu0 0.0
        %2773 = vmatprep.subr.mxu0 0.0
        %2774 = vmatpush1.msra.mxu0 0.0
        %2775 = vmatprep.subr.mxu0 0.0
        %2776 = vmatpush1.msra.mxu0 0.0
        %2777 = vmatprep.subr.mxu0 0.0
        %2778 = vmatpush1.msra.mxu0 0.0
        %2779 = vmatprep.subr.mxu0 0.0
        %2780 = vmatpush1.msra.mxu0 0.0
        %2781 = vmatprep.subr.mxu0 0.0
        %2782 = vmatpush1.msra.mxu0 0.0
        %2783 = vmatprep.subr.mxu0 0.0
        %2784 = vmatpush1.msra.mxu0 0.0
        %2785 = vmatprep.subr.mxu0 0.0
        %2786 = vmatpush1.msra.mxu0 0.0
        %2787 = vmatprep.subr.mxu0 0.0
        %2788 = vmatpush1.msra.mxu0 0.0
        %2789 = vmatprep.subr.mxu0 0.0
        %2790 = vmatpush1.msra.mxu0 0.0
        %2791 = vmatprep.subr.mxu0 0.0
        %2792 = vmatpush1.msra.mxu0 0.0
        %2793 = vmatprep.subr.mxu0 0.0
        %2794 = vmatpush1.msra.mxu0 0.0
        %2795 = vmatprep.subr.mxu0 0.0
        %2796 = vmatpush1.msra.mxu0 0.0
        %2797 = vmatprep.subr.mxu0 0.0
        %2798 = vmatpush1.msra.mxu0 0.0
        %2799 = vmatprep.subr.mxu0 0.0
        %2800 = vmatpush1.msra.mxu0 0.0
        %2801 = vmatprep.subr.mxu0 0.0
        %2802 = vmatpush1.msra.mxu0 0.0
        %2803 = vmatprep.subr.mxu0 0.0
        %2804 = vmatpush1.msra.mxu0 0.0
        %2805 = vmatprep.mubr.f32.mxu0 0.0
        %2806 = vmatmul.mubr.f32.gmra.mrb[0].mxu0 %v2668
        %v2807 = vpop.f32.mrb[0].mxu0
        %v2808 = vadd.f32 %v2665, %v2807
        %v2809 = vpop.f32.mrb[0].mxu0
        %v2810 = vadd.f32 %v2665, %v2809
        %2811 = vdwg.mxu0
        %2812 = vmatprep.subr.mxu0 %v2431
        %2813 = vmatpush1.msra.mxu0 %v2430
        %2814 = vmatprep.subr.mxu0 %v2463
        %2815 = vmatpush1.msra.mxu0 %v2462
        %2816 = vmatprep.subr.mxu0 %v2495
        %2817 = vmatpush1.msra.mxu0 %v2494
        %2818 = vmatprep.subr.mxu0 %v2527
        %2819 = vmatpush1.msra.mxu0 %v2526
        %2820 = vmatprep.subr.mxu0 %v2399
        %2821 = vmatpush1.msra.mxu0 %v2398
        %2822 = vmatprep.subr.mxu0 %v2559
        %2823 = vmatpush1.msra.mxu0 %v2558
        %2824 = vmatprep.subr.mxu0 %v2591
        %2825 = vmatpush1.msra.mxu0 %v2590
        %2826 = vmatprep.subr.mxu0 %v2623
        %2827 = vmatpush1.msra.mxu0 %v2622
        %2828 = vmatprep.subr.mxu0 %v2655
        %2829 = vmatpush1.msra.mxu0 %v2654
        %2830 = vmatprep.subr.mxu0 0.0
        %2831 = vmatpush1.msra.mxu0 0.0
        %2832 = vmatprep.subr.mxu0 0.0
        %2833 = vmatpush1.msra.mxu0 0.0
        %2834 = vmatprep.subr.mxu0 0.0
        %2835 = vmatpush1.msra.mxu0 0.0
        %2836 = vmatprep.subr.mxu0 0.0
        %2837 = vmatpush1.msra.mxu0 0.0
        %2838 = vmatprep.subr.mxu0 0.0
        %2839 = vmatpush1.msra.mxu0 0.0
        %2840 = vmatprep.subr.mxu0 0.0
        %2841 = vmatpush1.msra.mxu0 0.0
        %2842 = vmatprep.subr.mxu0 0.0
        %2843 = vmatpush1.msra.mxu0 0.0
        %2844 = vmatprep.subr.mxu0 0.0
        %2845 = vmatpush1.msra.mxu0 0.0
        %2846 = vmatprep.subr.mxu0 0.0
        %2847 = vmatpush1.msra.mxu0 0.0
        %2848 = vmatprep.subr.mxu0 0.0
        %2849 = vmatpush1.msra.mxu0 0.0
        %2850 = vmatprep.subr.mxu0 0.0
        %2851 = vmatpush1.msra.mxu0 0.0
        %2852 = vmatprep.subr.mxu0 0.0
        %2853 = vmatpush1.msra.mxu0 0.0
        %2854 = vmatprep.subr.mxu0 0.0
        %2855 = vmatpush1.msra.mxu0 0.0
        %2856 = vmatprep.subr.mxu0 0.0
        %2857 = vmatpush1.msra.mxu0 0.0
        %2858 = vmatprep.subr.mxu0 0.0
        %2859 = vmatpush1.msra.mxu0 0.0
        %2860 = vmatprep.subr.mxu0 0.0
        %2861 = vmatpush1.msra.mxu0 0.0
        %2862 = vmatprep.subr.mxu0 0.0
        %2863 = vmatpush1.msra.mxu0 0.0
        %2864 = vmatprep.subr.mxu0 0.0
        %2865 = vmatpush1.msra.mxu0 0.0
        %2866 = vmatprep.subr.mxu0 0.0
        %2867 = vmatpush1.msra.mxu0 0.0
        %2868 = vmatprep.subr.mxu0 0.0
        %2869 = vmatpush1.msra.mxu0 0.0
        %2870 = vmatprep.subr.mxu0 0.0
        %2871 = vmatpush1.msra.mxu0 0.0
        %2872 = vmatprep.subr.mxu0 0.0
        %2873 = vmatpush1.msra.mxu0 0.0
        %2874 = vmatprep.subr.mxu0 0.0
        %2875 = vmatpush1.msra.mxu0 0.0
        %2876 = vmatprep.mubr.f32.mxu0 0.0
        %2877 = vmatmul.mubr.f32.gmra.mrb[0].mxu0 %v2668
        %v2878 = vpop.f32.mrb[0].mxu0
        %v2879 = vadd.f32 %v2665, %v2878
        %v2880 = vpop.f32.mrb[0].mxu0
        %v2881 = vadd.f32 %v2665, %v2880
        %2882 = vdwg.mxu0
        %2883 = vmatprep.subr.mxu0 %v2433
        %2884 = vmatpush1.msra.mxu0 %v2432
        %2885 = vmatprep.subr.mxu0 %v2465
        %2886 = vmatpush1.msra.mxu0 %v2464
        %2887 = vmatprep.subr.mxu0 %v2497
        %2888 = vmatpush1.msra.mxu0 %v2496
        %2889 = vmatprep.subr.mxu0 %v2529
        %2890 = vmatpush1.msra.mxu0 %v2528
        %2891 = vmatprep.subr.mxu0 %v2401
        %2892 = vmatpush1.msra.mxu0 %v2400
        %2893 = vmatprep.subr.mxu0 %v2561
        %2894 = vmatpush1.msra.mxu0 %v2560
        %2895 = vmatprep.subr.mxu0 %v2593
        %2896 = vmatpush1.msra.mxu0 %v2592
        %2897 = vmatprep.subr.mxu0 %v2625
        %2898 = vmatpush1.msra.mxu0 %v2624
        %2899 = vmatprep.subr.mxu0 %v2657
        %2900 = vmatpush1.msra.mxu0 %v2656
        %2901 = vmatprep.subr.mxu0 0.0
        %2902 = vmatpush1.msra.mxu0 0.0
        %2903 = vmatprep.subr.mxu0 0.0
        %2904 = vmatpush1.msra.mxu0 0.0
        %2905 = vmatprep.subr.mxu0 0.0
        %2906 = vmatpush1.msra.mxu0 0.0
        %2907 = vmatprep.subr.mxu0 0.0
        %2908 = vmatpush1.msra.mxu0 0.0
        %2909 = vmatprep.subr.mxu0 0.0
        %2910 = vmatpush1.msra.mxu0 0.0
        %2911 = vmatprep.subr.mxu0 0.0
        %2912 = vmatpush1.msra.mxu0 0.0
        %2913 = vmatprep.subr.mxu0 0.0
        %2914 = vmatpush1.msra.mxu0 0.0
        %2915 = vmatprep.subr.mxu0 0.0
        %2916 = vmatpush1.msra.mxu0 0.0
        %2917 = vmatprep.subr.mxu0 0.0
        %2918 = vmatpush1.msra.mxu0 0.0
        %2919 = vmatprep.subr.mxu0 0.0
        %2920 = vmatpush1.msra.mxu0 0.0
        %2921 = vmatprep.subr.mxu0 0.0
        %2922 = vmatpush1.msra.mxu0 0.0
        %2923 = vmatprep.subr.mxu0 0.0
        %2924 = vmatpush1.msra.mxu0 0.0
        %2925 = vmatprep.subr.mxu0 0.0
        %2926 = vmatpush1.msra.mxu0 0.0
        %2927 = vmatprep.subr.mxu0 0.0
        %2928 = vmatpush1.msra.mxu0 0.0
        %2929 = vmatprep.subr.mxu0 0.0
        %2930 = vmatpush1.msra.mxu0 0.0
        %2931 = vmatprep.subr.mxu0 0.0
        %2932 = vmatpush1.msra.mxu0 0.0
        %2933 = vmatprep.subr.mxu0 0.0
        %2934 = vmatpush1.msra.mxu0 0.0
        %2935 = vmatprep.subr.mxu0 0.0
        %2936 = vmatpush1.msra.mxu0 0.0
        %2937 = vmatprep.subr.mxu0 0.0
        %2938 = vmatpush1.msra.mxu0 0.0
        %2939 = vmatprep.subr.mxu0 0.0
        %2940 = vmatpush1.msra.mxu0 0.0
        %2941 = vmatprep.subr.mxu0 0.0
        %2942 = vmatpush1.msra.mxu0 0.0
        %2943 = vmatprep.subr.mxu0 0.0
        %2944 = vmatpush1.msra.mxu0 0.0
        %2945 = vmatprep.subr.mxu0 0.0
        %2946 = vmatpush1.msra.mxu0 0.0
        %2947 = vmatprep.mubr.f32.mxu0 0.0
        %2948 = vmatmul.mubr.f32.gmra.mrb[0].mxu0 %v2668
        %v2949 = vpop.f32.mrb[0].mxu0
        %v2950 = vadd.f32 %v2665, %v2949
        %v2951 = vpop.f32.mrb[0].mxu0
        %v2952 = vadd.f32 %v2665, %v2951
        %2953 = vdwg.mxu0
        %v2954 = vmax.f32 %v2737, 0.0
        %v2955 = vmax.f32 %v2739, 0.0
        %v2956 = vmax.f32 %v2808, 0.0
        %v2957 = vmax.f32 %v2810, 0.0
        %v2958 = vmax.f32 %v2879, 0.0
        %v2959 = vmax.f32 %v2881, 0.0
        %v2960 = vmax.f32 %v2950, 0.0
        %v2961 = vmax.f32 %v2952, 0.0
        %2962 = vrot.lane.b32.xlu0 %v824, 112
        %v2963 = vpop.permute.xlu0 %2962
        %2964 = vrot.lane.b32.xlu0 %v825, 112
        %v2965 = vpop.permute.xlu0 %2964
        %2966 = vrot.lane.b32.xlu0 %v826, 112
        %v2967 = vpop.permute.xlu0 %2966
        %2968 = vrot.lane.b32.xlu0 %v827, 112
        %v2969 = vpop.permute.xlu0 %2968
        %v2970 = vsel %vm1665, %v2963, 0
        %v2972 = vsel %vm1665, %v2965, 0
        %v2974 = vsel %vm1665, %v2967, 0
        %v2976 = vsel %vm1665, %v2969, 0
        %2978 = vmatprep.subr.mxu0 %v2955
        %2979 = vmatpush1.msra.mxu0 %v2954
        %2980 = vmatprep.subr.mxu0 0.0
        %2981 = vmatpush1.msra.mxu0 0.0
        %2982 = vmatprep.subr.mxu0 0.0
        %2983 = vmatpush1.msra.mxu0 0.0
        %2984 = vmatprep.subr.mxu0 0.0
        %2985 = vmatpush1.msra.mxu0 0.0
        %2986 = vmatprep.subr.mxu0 0.0
        %2987 = vmatpush1.msra.mxu0 0.0
        %2988 = vmatprep.subr.mxu0 0.0
        %2989 = vmatpush1.msra.mxu0 0.0
        %2990 = vmatprep.subr.mxu0 0.0
        %2991 = vmatpush1.msra.mxu0 0.0
        %2992 = vmatprep.subr.mxu0 0.0
        %2993 = vmatpush1.msra.mxu0 0.0
        %2994 = vmatprep.subr.mxu0 0.0
        %2995 = vmatpush1.msra.mxu0 0.0
        %2996 = vmatprep.subr.mxu0 0.0
        %2997 = vmatpush1.msra.mxu0 0.0
        %2998 = vmatprep.subr.mxu0 0.0
        %2999 = vmatpush1.msra.mxu0 0.0
        %3000 = vmatprep.subr.mxu0 0.0
        %3001 = vmatpush1.msra.mxu0 0.0
        %3002 = vmatprep.subr.mxu0 0.0
        %3003 = vmatpush1.msra.mxu0 0.0
        %3004 = vmatprep.subr.mxu0 0.0
        %3005 = vmatpush1.msra.mxu0 0.0
        %3006 = vmatprep.subr.mxu0 0.0
        %3007 = vmatpush1.msra.mxu0 0.0
        %3008 = vmatprep.subr.mxu0 0.0
        %3009 = vmatpush1.msra.mxu0 0.0
        %3010 = vmatprep.subr.mxu0 0.0
        %3011 = vmatpush1.msra.mxu0 0.0
        %3012 = vmatprep.subr.mxu0 0.0
        %3013 = vmatpush1.msra.mxu0 0.0
        %3014 = vmatprep.subr.mxu0 0.0
        %3015 = vmatpush1.msra.mxu0 0.0
        %3016 = vmatprep.subr.mxu0 0.0
        %3017 = vmatpush1.msra.mxu0 0.0
        %3018 = vmatprep.subr.mxu0 0.0
        %3019 = vmatpush1.msra.mxu0 0.0
        %3020 = vmatprep.subr.mxu0 0.0
        %3021 = vmatpush1.msra.mxu0 0.0
        %3022 = vmatprep.subr.mxu0 0.0
        %3023 = vmatpush1.msra.mxu0 0.0
        %3024 = vmatprep.subr.mxu0 0.0
        %3025 = vmatpush1.msra.mxu0 0.0
        %3026 = vmatprep.subr.mxu0 0.0
        %3027 = vmatpush1.msra.mxu0 0.0
        %3028 = vmatprep.subr.mxu0 0.0
        %3029 = vmatpush1.msra.mxu0 0.0
        %3030 = vmatprep.subr.mxu0 0.0
        %3031 = vmatpush1.msra.mxu0 0.0
        %3032 = vmatprep.subr.mxu0 0.0
        %3033 = vmatpush1.msra.mxu0 0.0
        %3034 = vmatprep.subr.mxu0 0.0
        %3035 = vmatpush1.msra.mxu0 0.0
        %3036 = vmatprep.subr.mxu0 0.0
        %3037 = vmatpush1.msra.mxu0 0.0
        %3038 = vmatprep.subr.mxu0 0.0
        %3039 = vmatpush1.msra.mxu0 0.0
        %3040 = vmatprep.subr.mxu0 0.0
        %3041 = vmatpush1.msra.mxu0 0.0
        %3042 = vmatprep.mubr.f32.mxu0 0.0
        %3043 = vmatmul.mubr.f32.gmra.mrb[0].mxu0 %v2970
        %v3044 = vpop.f32.mrb[0].mxu0
        %v3045 = vadd.f32 0.0, %v3044
        %v3046 = vpop.f32.mrb[0].mxu0
        %v3047 = vadd.f32 0.0, %v3046
        %3048 = vmatprep.mubr.f32.mxu0 0.0
        %3049 = vmatmul.mubr.f32.gmra.mrb[0].mxu0 %v2972
        %v3050 = vpop.f32.mrb[0].mxu0
        %v3051 = vadd.f32 0.0, %v3050
        %v3052 = vpop.f32.mrb[0].mxu0
        %v3053 = vadd.f32 0.0, %v3052
        %3054 = vmatprep.mubr.f32.mxu0 0.0
        %3055 = vmatmul.mubr.f32.gmra.mrb[0].mxu0 %v2974
        %v3056 = vpop.f32.mrb[0].mxu0
        %v3057 = vadd.f32 0.0, %v3056
        %v3058 = vpop.f32.mrb[0].mxu0
        %v3059 = vadd.f32 0.0, %v3058
        %3060 = vmatprep.mubr.f32.mxu0 0.0
        %3061 = vmatmul.mubr.f32.gmra.mrb[0].mxu0 %v2976
        %v3062 = vpop.f32.mrb[0].mxu0
        %v3063 = vadd.f32 0.0, %v3062
        %v3064 = vpop.f32.mrb[0].mxu0
        %v3065 = vadd.f32 0.0, %v3064
        %3066 = vdwg.mxu0
        %3067 = vmatprep.subr.mxu0 %v2957
        %3068 = vmatpush1.msra.mxu0 %v2956
        %3069 = vmatprep.subr.mxu0 0.0
        %3070 = vmatpush1.msra.mxu0 0.0
        %3071 = vmatprep.subr.mxu0 0.0
        %3072 = vmatpush1.msra.mxu0 0.0
        %3073 = vmatprep.subr.mxu0 0.0
        %3074 = vmatpush1.msra.mxu0 0.0
        %3075 = vmatprep.subr.mxu0 0.0
        %3076 = vmatpush1.msra.mxu0 0.0
        %3077 = vmatprep.subr.mxu0 0.0
        %3078 = vmatpush1.msra.mxu0 0.0
        %3079 = vmatprep.subr.mxu0 0.0
        %3080 = vmatpush1.msra.mxu0 0.0
        %3081 = vmatprep.subr.mxu0 0.0
        %3082 = vmatpush1.msra.mxu0 0.0
        %3083 = vmatprep.subr.mxu0 0.0
        %3084 = vmatpush1.msra.mxu0 0.0
        %3085 = vmatprep.subr.mxu0 0.0
        %3086 = vmatpush1.msra.mxu0 0.0
        %3087 = vmatprep.subr.mxu0 0.0
        %3088 = vmatpush1.msra.mxu0 0.0
        %3089 = vmatprep.subr.mxu0 0.0
        %3090 = vmatpush1.msra.mxu0 0.0
        %3091 = vmatprep.subr.mxu0 0.0
        %3092 = vmatpush1.msra.mxu0 0.0
        %3093 = vmatprep.subr.mxu0 0.0
        %3094 = vmatpush1.msra.mxu0 0.0
        %3095 = vmatprep.subr.mxu0 0.0
        %3096 = vmatpush1.msra.mxu0 0.0
        %3097 = vmatprep.subr.mxu0 0.0
        %3098 = vmatpush1.msra.mxu0 0.0
        %3099 = vmatprep.subr.mxu0 0.0
        %3100 = vmatpush1.msra.mxu0 0.0
        %3101 = vmatprep.subr.mxu0 0.0
        %3102 = vmatpush1.msra.mxu0 0.0
        %3103 = vmatprep.subr.mxu0 0.0
        %3104 = vmatpush1.msra.mxu0 0.0
        %3105 = vmatprep.subr.mxu0 0.0
        %3106 = vmatpush1.msra.mxu0 0.0
        %3107 = vmatprep.subr.mxu0 0.0
        %3108 = vmatpush1.msra.mxu0 0.0
        %3109 = vmatprep.subr.mxu0 0.0
        %3110 = vmatpush1.msra.mxu0 0.0
        %3111 = vmatprep.subr.mxu0 0.0
        %3112 = vmatpush1.msra.mxu0 0.0
        %3113 = vmatprep.subr.mxu0 0.0
        %3114 = vmatpush1.msra.mxu0 0.0
        %3115 = vmatprep.subr.mxu0 0.0
        %3116 = vmatpush1.msra.mxu0 0.0
        %3117 = vmatprep.subr.mxu0 0.0
        %3118 = vmatpush1.msra.mxu0 0.0
        %3119 = vmatprep.subr.mxu0 0.0
        %3120 = vmatpush1.msra.mxu0 0.0
        %3121 = vmatprep.subr.mxu0 0.0
        %3122 = vmatpush1.msra.mxu0 0.0
        %3123 = vmatprep.subr.mxu0 0.0
        %3124 = vmatpush1.msra.mxu0 0.0
        %3125 = vmatprep.subr.mxu0 0.0
        %3126 = vmatpush1.msra.mxu0 0.0
        %3127 = vmatprep.subr.mxu0 0.0
        %3128 = vmatpush1.msra.mxu0 0.0
        %3129 = vmatprep.subr.mxu0 0.0
        %3130 = vmatpush1.msra.mxu0 0.0
        %3131 = vmatprep.mubr.f32.mxu0 0.0
        %3132 = vmatmul.mubr.f32.gmra.mrb[0].mxu0 %v2970
        %v3133 = vpop.f32.mrb[0].mxu0
        %v3134 = vadd.f32 0.0, %v3133
        %v3135 = vpop.f32.mrb[0].mxu0
        %v3136 = vadd.f32 0.0, %v3135
        %3137 = vmatprep.mubr.f32.mxu0 0.0
        %3138 = vmatmul.mubr.f32.gmra.mrb[0].mxu0 %v2972
        %v3139 = vpop.f32.mrb[0].mxu0
        %v3140 = vadd.f32 0.0, %v3139
        %v3141 = vpop.f32.mrb[0].mxu0
        %v3142 = vadd.f32 0.0, %v3141
        %3143 = vmatprep.mubr.f32.mxu0 0.0
        %3144 = vmatmul.mubr.f32.gmra.mrb[0].mxu0 %v2974
        %v3145 = vpop.f32.mrb[0].mxu0
        %v3146 = vadd.f32 0.0, %v3145
        %v3147 = vpop.f32.mrb[0].mxu0
        %v3148 = vadd.f32 0.0, %v3147
        %3149 = vmatprep.mubr.f32.mxu0 0.0
        %3150 = vmatmul.mubr.f32.gmra.mrb[0].mxu0 %v2976
        %v3151 = vpop.f32.mrb[0].mxu0
        %v3152 = vadd.f32 0.0, %v3151
        %v3153 = vpop.f32.mrb[0].mxu0
        %v3154 = vadd.f32 0.0, %v3153
        %3155 = vdwg.mxu0
        %3156 = vmatprep.subr.mxu0 %v2959
        %3157 = vmatpush1.msra.mxu0 %v2958
        %3158 = vmatprep.subr.mxu0 0.0
        %3159 = vmatpush1.msra.mxu0 0.0
        %3160 = vmatprep.subr.mxu0 0.0
        %3161 = vmatpush1.msra.mxu0 0.0
        %3162 = vmatprep.subr.mxu0 0.0
        %3163 = vmatpush1.msra.mxu0 0.0
        %3164 = vmatprep.subr.mxu0 0.0
        %3165 = vmatpush1.msra.mxu0 0.0
        %3166 = vmatprep.subr.mxu0 0.0
        %3167 = vmatpush1.msra.mxu0 0.0
        %3168 = vmatprep.subr.mxu0 0.0
        %3169 = vmatpush1.msra.mxu0 0.0
        %3170 = vmatprep.subr.mxu0 0.0
        %3171 = vmatpush1.msra.mxu0 0.0
        %3172 = vmatprep.subr.mxu0 0.0
        %3173 = vmatpush1.msra.mxu0 0.0
        %3174 = vmatprep.subr.mxu0 0.0
        %3175 = vmatpush1.msra.mxu0 0.0
        %3176 = vmatprep.subr.mxu0 0.0
        %3177 = vmatpush1.msra.mxu0 0.0
        %3178 = vmatprep.subr.mxu0 0.0
        %3179 = vmatpush1.msra.mxu0 0.0
        %3180 = vmatprep.subr.mxu0 0.0
        %3181 = vmatpush1.msra.mxu0 0.0
        %3182 = vmatprep.subr.mxu0 0.0
        %3183 = vmatpush1.msra.mxu0 0.0
        %3184 = vmatprep.subr.mxu0 0.0
        %3185 = vmatpush1.msra.mxu0 0.0
        %3186 = vmatprep.subr.mxu0 0.0
        %3187 = vmatpush1.msra.mxu0 0.0
        %3188 = vmatprep.subr.mxu0 0.0
        %3189 = vmatpush1.msra.mxu0 0.0
        %3190 = vmatprep.subr.mxu0 0.0
        %3191 = vmatpush1.msra.mxu0 0.0
        %3192 = vmatprep.subr.mxu0 0.0
        %3193 = vmatpush1.msra.mxu0 0.0
        %3194 = vmatprep.subr.mxu0 0.0
        %3195 = vmatpush1.msra.mxu0 0.0
        %3196 = vmatprep.subr.mxu0 0.0
        %3197 = vmatpush1.msra.mxu0 0.0
        %3198 = vmatprep.subr.mxu0 0.0
        %3199 = vmatpush1.msra.mxu0 0.0
        %3200 = vmatprep.subr.mxu0 0.0
        %3201 = vmatpush1.msra.mxu0 0.0
        %3202 = vmatprep.subr.mxu0 0.0
        %3203 = vmatpush1.msra.mxu0 0.0
        %3204 = vmatprep.subr.mxu0 0.0
        %3205 = vmatpush1.msra.mxu0 0.0
        %3206 = vmatprep.subr.mxu0 0.0
        %3207 = vmatpush1.msra.mxu0 0.0
        %3208 = vmatprep.subr.mxu0 0.0
        %3209 = vmatpush1.msra.mxu0 0.0
        %3210 = vmatprep.subr.mxu0 0.0
        %3211 = vmatpush1.msra.mxu0 0.0
        %3212 = vmatprep.subr.mxu0 0.0
        %3213 = vmatpush1.msra.mxu0 0.0
        %3214 = vmatprep.subr.mxu0 0.0
        %3215 = vmatpush1.msra.mxu0 0.0
        %3216 = vmatprep.subr.mxu0 0.0
        %3217 = vmatpush1.msra.mxu0 0.0
        %3218 = vmatprep.subr.mxu0 0.0
        %3219 = vmatpush1.msra.mxu0 0.0
        %3220 = vmatprep.mubr.f32.mxu0 0.0
        %3221 = vmatmul.mubr.f32.gmra.mrb[0].mxu0 %v2970
        %v3222 = vpop.f32.mrb[0].mxu0
        %v3223 = vadd.f32 0.0, %v3222
        %v3224 = vpop.f32.mrb[0].mxu0
        %v3225 = vadd.f32 0.0, %v3224
        %3226 = vmatprep.mubr.f32.mxu0 0.0
        %3227 = vmatmul.mubr.f32.gmra.mrb[0].mxu0 %v2972
        %v3228 = vpop.f32.mrb[0].mxu0
        %v3229 = vadd.f32 0.0, %v3228
        %v3230 = vpop.f32.mrb[0].mxu0
        %v3231 = vadd.f32 0.0, %v3230
        %3232 = vmatprep.mubr.f32.mxu0 0.0
        %3233 = vmatmul.mubr.f32.gmra.mrb[0].mxu0 %v2974
        %v3234 = vpop.f32.mrb[0].mxu0
        %v3235 = vadd.f32 0.0, %v3234
        %v3236 = vpop.f32.mrb[0].mxu0
        %v3237 = vadd.f32 0.0, %v3236
        %3238 = vmatprep.mubr.f32.mxu0 0.0
        %3239 = vmatmul.mubr.f32.gmra.mrb[0].mxu0 %v2976
        %v3240 = vpop.f32.mrb[0].mxu0
        %v3241 = vadd.f32 0.0, %v3240
        %v3242 = vpop.f32.mrb[0].mxu0
        %v3243 = vadd.f32 0.0, %v3242
        %3244 = vdwg.mxu0
        %3245 = vmatprep.subr.mxu0 %v2961
        %3246 = vmatpush1.msra.mxu0 %v2960
        %3247 = vmatprep.subr.mxu0 0.0
        %3248 = vmatpush1.msra.mxu0 0.0
        %3249 = vmatprep.subr.mxu0 0.0
        %3250 = vmatpush1.msra.mxu0 0.0
        %3251 = vmatprep.subr.mxu0 0.0
        %3252 = vmatpush1.msra.mxu0 0.0
        %3253 = vmatprep.subr.mxu0 0.0
        %3254 = vmatpush1.msra.mxu0 0.0
        %3255 = vmatprep.subr.mxu0 0.0
        %3256 = vmatpush1.msra.mxu0 0.0
        %3257 = vmatprep.subr.mxu0 0.0
        %3258 = vmatpush1.msra.mxu0 0.0
        %3259 = vmatprep.subr.mxu0 0.0
        %3260 = vmatpush1.msra.mxu0 0.0
        %3261 = vmatprep.subr.mxu0 0.0
        %3262 = vmatpush1.msra.mxu0 0.0
        %3263 = vmatprep.subr.mxu0 0.0
        %3264 = vmatpush1.msra.mxu0 0.0
        %3265 = vmatprep.subr.mxu0 0.0
        %3266 = vmatpush1.msra.mxu0 0.0
        %3267 = vmatprep.subr.mxu0 0.0
        %3268 = vmatpush1.msra.mxu0 0.0
        %3269 = vmatprep.subr.mxu0 0.0
        %3270 = vmatpush1.msra.mxu0 0.0
        %3271 = vmatprep.subr.mxu0 0.0
        %3272 = vmatpush1.msra.mxu0 0.0
        %3273 = vmatprep.subr.mxu0 0.0
        %3274 = vmatpush1.msra.mxu0 0.0
        %3275 = vmatprep.subr.mxu0 0.0
        %3276 = vmatpush1.msra.mxu0 0.0
        %3277 = vmatprep.subr.mxu0 0.0
        %3278 = vmatpush1.msra.mxu0 0.0
        %3279 = vmatprep.subr.mxu0 0.0
        %3280 = vmatpush1.msra.mxu0 0.0
        %3281 = vmatprep.subr.mxu0 0.0
        %3282 = vmatpush1.msra.mxu0 0.0
        %3283 = vmatprep.subr.mxu0 0.0
        %3284 = vmatpush1.msra.mxu0 0.0
        %3285 = vmatprep.subr.mxu0 0.0
        %3286 = vmatpush1.msra.mxu0 0.0
        %3287 = vmatprep.subr.mxu0 0.0
        %3288 = vmatpush1.msra.mxu0 0.0
        %3289 = vmatprep.subr.mxu0 0.0
        %3290 = vmatpush1.msra.mxu0 0.0
        %3291 = vmatprep.subr.mxu0 0.0
        %3292 = vmatpush1.msra.mxu0 0.0
        %3293 = vmatprep.subr.mxu0 0.0
        %3294 = vmatpush1.msra.mxu0 0.0
        %3295 = vmatprep.subr.mxu0 0.0
        %3296 = vmatpush1.msra.mxu0 0.0
        %3297 = vmatprep.subr.mxu0 0.0
        %3298 = vmatpush1.msra.mxu0 0.0
        %3299 = vmatprep.subr.mxu0 0.0
        %3300 = vmatpush1.msra.mxu0 0.0
        %3301 = vmatprep.subr.mxu0 0.0
        %3302 = vmatpush1.msra.mxu0 0.0
        %3303 = vmatprep.subr.mxu0 0.0
        %3304 = vmatpush1.msra.mxu0 0.0
        %3305 = vmatprep.subr.mxu0 0.0
        %3306 = vmatpush1.msra.mxu0 0.0
        %3307 = vmatprep.subr.mxu0 0.0
        %3308 = vmatpush1.msra.mxu0 0.0
        %3309 = vmatprep.mubr.f32.mxu0 0.0
        %3310 = vmatmul.mubr.f32.gmra.mrb[0].mxu0 %v2970
        %v3311 = vpop.f32.mrb[0].mxu0
        %v3312 = vadd.f32 0.0, %v3311
        %v3313 = vpop.f32.mrb[0].mxu0
        %v3314 = vadd.f32 0.0, %v3313
        %3315 = vmatprep.mubr.f32.mxu0 0.0
        %3316 = vmatmul.mubr.f32.gmra.mrb[0].mxu0 %v2972
        %v3317 = vpop.f32.mrb[0].mxu0
        %v3318 = vadd.f32 0.0, %v3317
        %v3319 = vpop.f32.mrb[0].mxu0
        %v3320 = vadd.f32 0.0, %v3319
        %3321 = vmatprep.mubr.f32.mxu0 0.0
        %3322 = vmatmul.mubr.f32.gmra.mrb[0].mxu0 %v2974
        %v3323 = vpop.f32.mrb[0].mxu0
        %v3324 = vadd.f32 0.0, %v3323
        %v3325 = vpop.f32.mrb[0].mxu0
        %v3326 = vadd.f32 0.0, %v3325
        %3327 = vmatprep.mubr.f32.mxu0 0.0
        %3328 = vmatmul.mubr.f32.gmra.mrb[0].mxu0 %v2976
        %v3329 = vpop.f32.mrb[0].mxu0
        %v3330 = vadd.f32 0.0, %v3329
        %v3331 = vpop.f32.mrb[0].mxu0
        %v3332 = vadd.f32 0.0, %v3331
        %3333 = vdwg.mxu0
        %v3334 = vadd.f32 %v2105, %v3045
        %v3335 = vadd.f32 %v2107, %v3047
        %v3336 = vadd.f32 %v2194, %v3134
        %v3337 = vadd.f32 %v2196, %v3136
        %v3338 = vadd.f32 %v2283, %v3223
        %v3339 = vadd.f32 %v2285, %v3225
        %v3340 = vadd.f32 %v2372, %v3312
        %v3341 = vadd.f32 %v2374, %v3314
        %v3342 = vadd.f32 %v2111, %v3051
        %v3343 = vadd.f32 %v2113, %v3053
        %v3344 = vadd.f32 %v2200, %v3140
        %v3345 = vadd.f32 %v2202, %v3142
        %v3346 = vadd.f32 %v2289, %v3229
        %v3347 = vadd.f32 %v2291, %v3231
        %v3348 = vadd.f32 %v2378, %v3318
        %v3349 = vadd.f32 %v2380, %v3320
        %v3350 = vadd.f32 %v2117, %v3057
        %v3351 = vadd.f32 %v2119, %v3059
        %v3352 = vadd.f32 %v2206, %v3146
        %v3353 = vadd.f32 %v2208, %v3148
        %v3354 = vadd.f32 %v2295, %v3235
        %v3355 = vadd.f32 %v2297, %v3237
        %v3356 = vadd.f32 %v2384, %v3324
        %v3357 = vadd.f32 %v2386, %v3326
        %v3358 = vadd.f32 %v2123, %v3063
        %v3359 = vadd.f32 %v2125, %v3065
        %v3360 = vadd.f32 %v2212, %v3152
        %v3361 = vadd.f32 %v2214, %v3154
        %v3362 = vadd.f32 %v2301, %v3241
        %v3363 = vadd.f32 %v2303, %v3243
        %v3364 = vadd.f32 %v2390, %v3330
        %v3365 = vadd.f32 %v2392, %v3332
        %v3366 = vadd.f32 %v816, %v2954
        %v3367 = vadd.f32 %v817, %v2955
        %v3368 = vadd.f32 %v818, %v2956
        %v3369 = vadd.f32 %v819, %v2957
        %v3370 = vadd.f32 %v820, %v2958
        %v3371 = vadd.f32 %v821, %v2959
        %v3372 = vadd.f32 %v822, %v2960
        %v3373 = vadd.f32 %v823, %v2961
        %3374 = vrot.lane.b32.xlu0 %v3366, 17
        %v3375 = vpop.permute.xlu0 %3374
        %3376 = vrot.lane.b32.xlu0 %v3367, 17
        %v3377 = vpop.permute.xlu0 %3376
        %3378 = vrot.lane.b32.xlu0 %v3368, 17
        %v3379 = vpop.permute.xlu0 %3378
        %3380 = vrot.lane.b32.xlu0 %v3369, 17
        %v3381 = vpop.permute.xlu0 %3380
        %3382 = vrot.lane.b32.xlu0 %v3370, 17
        %v3383 = vpop.permute.xlu0 %3382
        %3384 = vrot.lane.b32.xlu0 %v3371, 17
        %v3385 = vpop.permute.xlu0 %3384
        %3386 = vrot.lane.b32.xlu0 %v3372, 17
        %v3387 = vpop.permute.xlu0 %3386
        %3388 = vrot.lane.b32.xlu0 %v3373, 17
        %v3389 = vpop.permute.xlu0 %3388
        %v3390 = vsel %vm846, %v3387, %v3389
        %v3391 = vsel %vm846, %v3385, %v3387
        %v3392 = vsel %vm846, %v3383, %v3385
        %v3393 = vsel %vm846, %v3381, %v3383
        %v3394 = vsel %vm846, %v3379, %v3381
        %v3395 = vsel %vm846, %v3377, %v3379
        %v3396 = vsel %vm846, %v3375, %v3377
        %v3397 = vsel %vm846, %v3389, %v3375
        %v3398 = vmul.f32 %v3397, %v858
        %v3399 = vmul.f32 %v3396, %v862
        %v3400 = vmul.f32 %v3395, %v866
        %v3401 = vmul.f32 %v3394, %v870
        %v3402 = vmul.f32 %v3393, %v874
        %v3403 = vmul.f32 %v3392, %v878
        %v3404 = vmul.f32 %v3391, %v882
        %v3405 = vmul.f32 %v3390, %v886
        %3406 = vrot.lane.b32.xlu0 %v3366, 16
        %v3407 = vpop.permute.xlu0 %3406
        %3408 = vrot.lane.b32.xlu0 %v3367, 16
        %v3409 = vpop.permute.xlu0 %3408
        %3410 = vrot.lane.b32.xlu0 %v3368, 16
        %v3411 = vpop.permute.xlu0 %3410
        %3412 = vrot.lane.b32.xlu0 %v3369, 16
        %v3413 = vpop.permute.xlu0 %3412
        %3414 = vrot.lane.b32.xlu0 %v3370, 16
        %v3415 = vpop.permute.xlu0 %3414
        %3416 = vrot.lane.b32.xlu0 %v3371, 16
        %v3417 = vpop.permute.xlu0 %3416
        %3418 = vrot.lane.b32.xlu0 %v3372, 16
        %v3419 = vpop.permute.xlu0 %3418
        %3420 = vrot.lane.b32.xlu0 %v3373, 16
        %v3421 = vpop.permute.xlu0 %3420
        %v3422 = vsel %vm911, %v3419, %v3421
        %v3423 = vsel %vm911, %v3417, %v3419
        %v3424 = vsel %vm911, %v3415, %v3417
        %v3425 = vsel %vm911, %v3413, %v3415
        %v3426 = vsel %vm911, %v3411, %v3413
        %v3427 = vsel %vm911, %v3409, %v3411
        %v3428 = vsel %vm911, %v3407, %v3409
        %v3429 = vsel %vm911, %v3421, %v3407
        %v3430 = vmul.f32 %v3429, %v923
        %v3431 = vmul.f32 %v3428, %v927
        %v3432 = vmul.f32 %v3427, %v931
        %v3433 = vmul.f32 %v3426, %v935
        %v3434 = vmul.f32 %v3425, %v939
        %v3435 = vmul.f32 %v3424, %v943
        %v3436 = vmul.f32 %v3423, %v947
        %v3437 = vmul.f32 %v3422, %v951
        %3438 = vrot.lane.b32.xlu0 %v3366, 15
        %v3439 = vpop.permute.xlu0 %3438
        %3440 = vrot.lane.b32.xlu0 %v3367, 15
        %v3441 = vpop.permute.xlu0 %3440
        %3442 = vrot.lane.b32.xlu0 %v3368, 15
        %v3443 = vpop.permute.xlu0 %3442
        %3444 = vrot.lane.b32.xlu0 %v3369, 15
        %v3445 = vpop.permute.xlu0 %3444
        %3446 = vrot.lane.b32.xlu0 %v3370, 15
        %v3447 = vpop.permute.xlu0 %3446
        %3448 = vrot.lane.b32.xlu0 %v3371, 15
        %v3449 = vpop.permute.xlu0 %3448
        %3450 = vrot.lane.b32.xlu0 %v3372, 15
        %v3451 = vpop.permute.xlu0 %3450
        %3452 = vrot.lane.b32.xlu0 %v3373, 15
        %v3453 = vpop.permute.xlu0 %3452
        %v3454 = vsel %vm976, %v3451, %v3453
        %v3455 = vsel %vm976, %v3449, %v3451
        %v3456 = vsel %vm976, %v3447, %v3449
        %v3457 = vsel %vm976, %v3445, %v3447
        %v3458 = vsel %vm976, %v3443, %v3445
        %v3459 = vsel %vm976, %v3441, %v3443
        %v3460 = vsel %vm976, %v3439, %v3441
        %v3461 = vsel %vm976, %v3453, %v3439
        %v3462 = vmul.f32 %v3461, %v988
        %v3463 = vmul.f32 %v3460, %v992
        %v3464 = vmul.f32 %v3459, %v996
        %v3465 = vmul.f32 %v3458, %v1000
        %v3466 = vmul.f32 %v3457, %v1004
        %v3467 = vmul.f32 %v3456, %v1008
        %v3468 = vmul.f32 %v3455, %v1012
        %v3469 = vmul.f32 %v3454, %v1016
        %3470 = vrot.lane.b32.xlu0 %v3366, 1
        %v3471 = vpop.permute.xlu0 %3470
        %3472 = vrot.lane.b32.xlu0 %v3367, 1
        %v3473 = vpop.permute.xlu0 %3472
        %3474 = vrot.lane.b32.xlu0 %v3368, 1
        %v3475 = vpop.permute.xlu0 %3474
        %3476 = vrot.lane.b32.xlu0 %v3369, 1
        %v3477 = vpop.permute.xlu0 %3476
        %3478 = vrot.lane.b32.xlu0 %v3370, 1
        %v3479 = vpop.permute.xlu0 %3478
        %3480 = vrot.lane.b32.xlu0 %v3371, 1
        %v3481 = vpop.permute.xlu0 %3480
        %3482 = vrot.lane.b32.xlu0 %v3372, 1
        %v3483 = vpop.permute.xlu0 %3482
        %3484 = vrot.lane.b32.xlu0 %v3373, 1
        %v3485 = vpop.permute.xlu0 %3484
        %v3486 = vsel %vm1041, %v3483, %v3485
        %v3487 = vsel %vm1041, %v3481, %v3483
        %v3488 = vsel %vm1041, %v3479, %v3481
        %v3489 = vsel %vm1041, %v3477, %v3479
        %v3490 = vsel %vm1041, %v3475, %v3477
        %v3491 = vsel %vm1041, %v3473, %v3475
        %v3492 = vsel %vm1041, %v3471, %v3473
        %v3493 = vsel %vm1041, %v3485, %v3471
        %v3494 = vmul.f32 %v3493, %v1053
        %v3495 = vmul.f32 %v3492, %v1057
        %v3496 = vmul.f32 %v3491, %v1061
        %v3497 = vmul.f32 %v3490, %v1065
        %v3498 = vmul.f32 %v3489, %v1069
        %v3499 = vmul.f32 %v3488, %v1073
        %v3500 = vmul.f32 %v3487, %v1077
        %v3501 = vmul.f32 %v3486, %v1081
        %3502 = vrot.lane.b32.xlu0 %v3366, 127
        %v3503 = vpop.permute.xlu0 %3502
        %3504 = vrot.lane.b32.xlu0 %v3367, 127
        %v3505 = vpop.permute.xlu0 %3504
        %3506 = vrot.lane.b32.xlu0 %v3368, 127
        %v3507 = vpop.permute.xlu0 %3506
        %3508 = vrot.lane.b32.xlu0 %v3369, 127
        %v3509 = vpop.permute.xlu0 %3508
        %3510 = vrot.lane.b32.xlu0 %v3370, 127
        %v3511 = vpop.permute.xlu0 %3510
        %3512 = vrot.lane.b32.xlu0 %v3371, 127
        %v3513 = vpop.permute.xlu0 %3512
        %3514 = vrot.lane.b32.xlu0 %v3372, 127
        %v3515 = vpop.permute.xlu0 %3514
        %3516 = vrot.lane.b32.xlu0 %v3373, 127
        %v3517 = vpop.permute.xlu0 %3516
        %v3518 = vsel %vm1106, %v3515, %v3517
        %v3519 = vsel %vm1106, %v3513, %v3515
        %v3520 = vsel %vm1106, %v3511, %v3513
        %v3521 = vsel %vm1106, %v3509, %v3511
        %v3522 = vsel %vm1106, %v3507, %v3509
        %v3523 = vsel %vm1106, %v3505, %v3507
        %v3524 = vsel %vm1106, %v3503, %v3505
        %v3525 = vsel %vm1106, %v3517, %v3503
        %v3526 = vmul.f32 %v3524, %v1118
        %v3527 = vmul.f32 %v3523, %v1122
        %v3528 = vmul.f32 %v3522, %v1126
        %v3529 = vmul.f32 %v3521, %v1130
        %v3530 = vmul.f32 %v3520, %v1134
        %v3531 = vmul.f32 %v3519, %v1138
        %v3532 = vmul.f32 %v3518, %v1142
        %v3533 = vmul.f32 %v3525, %v1146
        %3534 = vrot.lane.b32.xlu0 %v3366, 113
        %v3535 = vpop.permute.xlu0 %3534
        %3536 = vrot.lane.b32.xlu0 %v3367, 113
        %v3537 = vpop.permute.xlu0 %3536
        %3538 = vrot.lane.b32.xlu0 %v3368, 113
        %v3539 = vpop.permute.xlu0 %3538
        %3540 = vrot.lane.b32.xlu0 %v3369, 113
        %v3541 = vpop.permute.xlu0 %3540
        %3542 = vrot.lane.b32.xlu0 %v3370, 113
        %v3543 = vpop.permute.xlu0 %3542
        %3544 = vrot.lane.b32.xlu0 %v3371, 113
        %v3545 = vpop.permute.xlu0 %3544
        %3546 = vrot.lane.b32.xlu0 %v3372, 113
        %v3547 = vpop.permute.xlu0 %3546
        %3548 = vrot.lane.b32.xlu0 %v3373, 113
        %v3549 = vpop.permute.xlu0 %3548
        %v3550 = vsel %vm1171, %v3547, %v3549
        %v3551 = vsel %vm1171, %v3545, %v3547
        %v3552 = vsel %vm1171, %v3543, %v3545
        %v3553 = vsel %vm1171, %v3541, %v3543
        %v3554 = vsel %vm1171, %v3539, %v3541
        %v3555 = vsel %vm1171, %v3537, %v3539
        %v3556 = vsel %vm1171, %v3535, %v3537
        %v3557 = vsel %vm1171, %v3549, %v3535
        %v3558 = vmul.f32 %v3556, %v1183
        %v3559 = vmul.f32 %v3555, %v1187
        %v3560 = vmul.f32 %v3554, %v1191
        %v3561 = vmul.f32 %v3553, %v1195
        %v3562 = vmul.f32 %v3552, %v1199
        %v3563 = vmul.f32 %v3551, %v1203
        %v3564 = vmul.f32 %v3550, %v1207
        %v3565 = vmul.f32 %v3557, %v1211
        %3566 = vrot.lane.b32.xlu0 %v3366, 112
        %v3567 = vpop.permute.xlu0 %3566
        %3568 = vrot.lane.b32.xlu0 %v3367, 112
        %v3569 = vpop.permute.xlu0 %3568
        %3570 = vrot.lane.b32.xlu0 %v3368, 112
        %v3571 = vpop.permute.xlu0 %3570
        %3572 = vrot.lane.b32.xlu0 %v3369, 112
        %v3573 = vpop.permute.xlu0 %3572
        %3574 = vrot.lane.b32.xlu0 %v3370, 112
        %v3575 = vpop.permute.xlu0 %3574
        %3576 = vrot.lane.b32.xlu0 %v3371, 112
        %v3577 = vpop.permute.xlu0 %3576
        %3578 = vrot.lane.b32.xlu0 %v3372, 112
        %v3579 = vpop.permute.xlu0 %3578
        %3580 = vrot.lane.b32.xlu0 %v3373, 112
        %v3581 = vpop.permute.xlu0 %3580
        %v3582 = vsel %vm1236, %v3579, %v3581
        %v3583 = vsel %vm1236, %v3577, %v3579
        %v3584 = vsel %vm1236, %v3575, %v3577
        %v3585 = vsel %vm1236, %v3573, %v3575
        %v3586 = vsel %vm1236, %v3571, %v3573
        %v3587 = vsel %vm1236, %v3569, %v3571
        %v3588 = vsel %vm1236, %v3567, %v3569
        %v3589 = vsel %vm1236, %v3581, %v3567
        %v3590 = vmul.f32 %v3588, %v1248
        %v3591 = vmul.f32 %v3587, %v1252
        %v3592 = vmul.f32 %v3586, %v1256
        %v3593 = vmul.f32 %v3585, %v1260
        %v3594 = vmul.f32 %v3584, %v1264
        %v3595 = vmul.f32 %v3583, %v1268
        %v3596 = vmul.f32 %v3582, %v1272
        %v3597 = vmul.f32 %v3589, %v1276
        %3598 = vrot.lane.b32.xlu0 %v3366, 111
        %v3599 = vpop.permute.xlu0 %3598
        %3600 = vrot.lane.b32.xlu0 %v3367, 111
        %v3601 = vpop.permute.xlu0 %3600
        %3602 = vrot.lane.b32.xlu0 %v3368, 111
        %v3603 = vpop.permute.xlu0 %3602
        %3604 = vrot.lane.b32.xlu0 %v3369, 111
        %v3605 = vpop.permute.xlu0 %3604
        %3606 = vrot.lane.b32.xlu0 %v3370, 111
        %v3607 = vpop.permute.xlu0 %3606
        %3608 = vrot.lane.b32.xlu0 %v3371, 111
        %v3609 = vpop.permute.xlu0 %3608
        %3610 = vrot.lane.b32.xlu0 %v3372, 111
        %v3611 = vpop.permute.xlu0 %3610
        %3612 = vrot.lane.b32.xlu0 %v3373, 111
        %v3613 = vpop.permute.xlu0 %3612
        %v3614 = vsel %vm1301, %v3611, %v3613
        %v3615 = vsel %vm1301, %v3609, %v3611
        %v3616 = vsel %vm1301, %v3607, %v3609
        %v3617 = vsel %vm1301, %v3605, %v3607
        %v3618 = vsel %vm1301, %v3603, %v3605
        %v3619 = vsel %vm1301, %v3601, %v3603
        %v3620 = vsel %vm1301, %v3599, %v3601
        %v3621 = vsel %vm1301, %v3613, %v3599
        %v3622 = vmul.f32 %v3620, %v1313
        %v3623 = vmul.f32 %v3619, %v1317
        %v3624 = vmul.f32 %v3618, %v1321
        %v3625 = vmul.f32 %v3617, %v1325
        %v3626 = vmul.f32 %v3616, %v1329
        %v3627 = vmul.f32 %v3615, %v1333
        %v3628 = vmul.f32 %v3614, %v1337
        %v3629 = vmul.f32 %v3621, %v1341
        %s3630 = scalar_lea.vmem [#allocation5], 16
        %v3631 = vld [vmem:[%s3630] sm:$0xff]
        %s3632 = scalar_lea.vmem %s5, 16
        %v3633 = vld [vmem:[%s3632] sm:$0xff]
        %3635 = vset.pattern.permute.xlu0 0
        %3636 = vperm.xlu0 %3635, %v3633
        %v3637 = vpop.permute.xlu0 %3636
        %v3640 = vsel %vm1357, %v3631, 0
        %3642 = vmatprep.subr.mxu0 %v3399
        %3643 = vmatpush1.msra.mxu0 %v3398
        %3644 = vmatprep.subr.mxu0 %v3431
        %3645 = vmatpush1.msra.mxu0 %v3430
        %3646 = vmatprep.subr.mxu0 %v3463
        %3647 = vmatpush1.msra.mxu0 %v3462
        %3648 = vmatprep.subr.mxu0 %v3495
        %3649 = vmatpush1.msra.mxu0 %v3494
        %3650 = vmatprep.subr.mxu0 %v3367
        %3651 = vmatpush1.msra.mxu0 %v3366
        %3652 = vmatprep.subr.mxu0 %v3527
        %3653 = vmatpush1.msra.mxu0 %v3526
        %3654 = vmatprep.subr.mxu0 %v3559
        %3655 = vmatpush1.msra.mxu0 %v3558
        %3656 = vmatprep.subr.mxu0 %v3591
        %3657 = vmatpush1.msra.mxu0 %v3590
        %3658 = vmatprep.subr.mxu0 %v3623
        %3659 = vmatpush1.msra.mxu0 %v3622
        %3660 = vmatprep.subr.mxu0 0.0
        %3661 = vmatpush1.msra.mxu0 0.0
        %3662 = vmatprep.subr.mxu0 0.0
        %3663 = vmatpush1.msra.mxu0 0.0
        %3664 = vmatprep.subr.mxu0 0.0
        %3665 = vmatpush1.msra.mxu0 0.0
        %3666 = vmatprep.subr.mxu0 0.0
        %3667 = vmatpush1.msra.mxu0 0.0
        %3668 = vmatprep.subr.mxu0 0.0
        %3669 = vmatpush1.msra.mxu0 0.0
        %3670 = vmatprep.subr.mxu0 0.0
        %3671 = vmatpush1.msra.mxu0 0.0
        %3672 = vmatprep.subr.mxu0 0.0
        %3673 = vmatpush1.msra.mxu0 0.0
        %3674 = vmatprep.subr.mxu0 0.0
        %3675 = vmatpush1.msra.mxu0 0.0
        %3676 = vmatprep.subr.mxu0 0.0
        %3677 = vmatpush1.msra.mxu0 0.0
        %3678 = vmatprep.subr.mxu0 0.0
        %3679 = vmatpush1.msra.mxu0 0.0
        %3680 = vmatprep.subr.mxu0 0.0
        %3681 = vmatpush1.msra.mxu0 0.0
        %3682 = vmatprep.subr.mxu0 0.0
        %3683 = vmatpush1.msra.mxu0 0.0
        %3684 = vmatprep.subr.mxu0 0.0
        %3685 = vmatpush1.msra.mxu0 0.0
        %3686 = vmatprep.subr.mxu0 0.0
        %3687 = vmatpush1.msra.mxu0 0.0
        %3688 = vmatprep.subr.mxu0 0.0
        %3689 = vmatpush1.msra.mxu0 0.0
        %3690 = vmatprep.subr.mxu0 0.0
        %3691 = vmatpush1.msra.mxu0 0.0
        %3692 = vmatprep.subr.mxu0 0.0
        %3693 = vmatpush1.msra.mxu0 0.0
        %3694 = vmatprep.subr.mxu0 0.0
        %3695 = vmatpush1.msra.mxu0 0.0
        %3696 = vmatprep.subr.mxu0 0.0
        %3697 = vmatpush1.msra.mxu0 0.0
        %3698 = vmatprep.subr.mxu0 0.0
        %3699 = vmatpush1.msra.mxu0 0.0
        %3700 = vmatprep.subr.mxu0 0.0
        %3701 = vmatpush1.msra.mxu0 0.0
        %3702 = vmatprep.subr.mxu0 0.0
        %3703 = vmatpush1.msra.mxu0 0.0
        %3704 = vmatprep.subr.mxu0 0.0
        %3705 = vmatpush1.msra.mxu0 0.0
        %3706 = vmatprep.mubr.f32.mxu0 0.0
        %3707 = vmatmul.mubr.f32.gmra.mrb[0].mxu0 %v3640
        %v3708 = vpop.f32.mrb[0].mxu0
        %v3709 = vadd.f32 %v3637, %v3708
        %v3710 = vpop.f32.mrb[0].mxu0
        %v3711 = vadd.f32 %v3637, %v3710
        %3712 = vdwg.mxu0
        %3713 = vmatprep.subr.mxu0 %v3401
        %3714 = vmatpush1.msra.mxu0 %v3400
        %3715 = vmatprep.subr.mxu0 %v3433
        %3716 = vmatpush1.msra.mxu0 %v3432
        %3717 = vmatprep.subr.mxu0 %v3465
        %3718 = vmatpush1.msra.mxu0 %v3464
        %3719 = vmatprep.subr.mxu0 %v3497
        %3720 = vmatpush1.msra.mxu0 %v3496
        %3721 = vmatprep.subr.mxu0 %v3369
        %3722 = vmatpush1.msra.mxu0 %v3368
        %3723 = vmatprep.subr.mxu0 %v3529
        %3724 = vmatpush1.msra.mxu0 %v3528
        %3725 = vmatprep.subr.mxu0 %v3561
        %3726 = vmatpush1.msra.mxu0 %v3560
        %3727 = vmatprep.subr.mxu0 %v3593
        %3728 = vmatpush1.msra.mxu0 %v3592
        %3729 = vmatprep.subr.mxu0 %v3625
        %3730 = vmatpush1.msra.mxu0 %v3624
        %3731 = vmatprep.subr.mxu0 0.0
        %3732 = vmatpush1.msra.mxu0 0.0
        %3733 = vmatprep.subr.mxu0 0.0
        %3734 = vmatpush1.msra.mxu0 0.0
        %3735 = vmatprep.subr.mxu0 0.0
        %3736 = vmatpush1.msra.mxu0 0.0
        %3737 = vmatprep.subr.mxu0 0.0
        %3738 = vmatpush1.msra.mxu0 0.0
        %3739 = vmatprep.subr.mxu0 0.0
        %3740 = vmatpush1.msra.mxu0 0.0
        %3741 = vmatprep.subr.mxu0 0.0
        %3742 = vmatpush1.msra.mxu0 0.0
        %3743 = vmatprep.subr.mxu0 0.0
        %3744 = vmatpush1.msra.mxu0 0.0
        %3745 = vmatprep.subr.mxu0 0.0
        %3746 = vmatpush1.msra.mxu0 0.0
        %3747 = vmatprep.subr.mxu0 0.0
        %3748 = vmatpush1.msra.mxu0 0.0
        %3749 = vmatprep.subr.mxu0 0.0
        %3750 = vmatpush1.msra.mxu0 0.0
        %3751 = vmatprep.subr.mxu0 0.0
        %3752 = vmatpush1.msra.mxu0 0.0
        %3753 = vmatprep.subr.mxu0 0.0
        %3754 = vmatpush1.msra.mxu0 0.0
        %3755 = vmatprep.subr.mxu0 0.0
        %3756 = vmatpush1.msra.mxu0 0.0
        %3757 = vmatprep.subr.mxu0 0.0
        %3758 = vmatpush1.msra.mxu0 0.0
        %3759 = vmatprep.subr.mxu0 0.0
        %3760 = vmatpush1.msra.mxu0 0.0
        %3761 = vmatprep.subr.mxu0 0.0
        %3762 = vmatpush1.msra.mxu0 0.0
        %3763 = vmatprep.subr.mxu0 0.0
        %3764 = vmatpush1.msra.mxu0 0.0
        %3765 = vmatprep.subr.mxu0 0.0
        %3766 = vmatpush1.msra.mxu0 0.0
        %3767 = vmatprep.subr.mxu0 0.0
        %3768 = vmatpush1.msra.mxu0 0.0
        %3769 = vmatprep.subr.mxu0 0.0
        %3770 = vmatpush1.msra.mxu0 0.0
        %3771 = vmatprep.subr.mxu0 0.0
        %3772 = vmatpush1.msra.mxu0 0.0
        %3773 = vmatprep.subr.mxu0 0.0
        %3774 = vmatpush1.msra.mxu0 0.0
        %3775 = vmatprep.subr.mxu0 0.0
        %3776 = vmatpush1.msra.mxu0 0.0
        %3777 = vmatprep.mubr.f32.mxu0 0.0
        %3778 = vmatmul.mubr.f32.gmra.mrb[0].mxu0 %v3640
        %v3779 = vpop.f32.mrb[0].mxu0
        %v3780 = vadd.f32 %v3637, %v3779
        %v3781 = vpop.f32.mrb[0].mxu0
        %v3782 = vadd.f32 %v3637, %v3781
        %3783 = vdwg.mxu0
        %3784 = vmatprep.subr.mxu0 %v3403
        %3785 = vmatpush1.msra.mxu0 %v3402
        %3786 = vmatprep.subr.mxu0 %v3435
        %3787 = vmatpush1.msra.mxu0 %v3434
        %3788 = vmatprep.subr.mxu0 %v3467
        %3789 = vmatpush1.msra.mxu0 %v3466
        %3790 = vmatprep.subr.mxu0 %v3499
        %3791 = vmatpush1.msra.mxu0 %v3498
        %3792 = vmatprep.subr.mxu0 %v3371
        %3793 = vmatpush1.msra.mxu0 %v3370
        %3794 = vmatprep.subr.mxu0 %v3531
        %3795 = vmatpush1.msra.mxu0 %v3530
        %3796 = vmatprep.subr.mxu0 %v3563
        %3797 = vmatpush1.msra.mxu0 %v3562
        %3798 = vmatprep.subr.mxu0 %v3595
        %3799 = vmatpush1.msra.mxu0 %v3594
        %3800 = vmatprep.subr.mxu0 %v3627
        %3801 = vmatpush1.msra.mxu0 %v3626
        %3802 = vmatprep.subr.mxu0 0.0
        %3803 = vmatpush1.msra.mxu0 0.0
        %3804 = vmatprep.subr.mxu0 0.0
        %3805 = vmatpush1.msra.mxu0 0.0
        %3806 = vmatprep.subr.mxu0 0.0
        %3807 = vmatpush1.msra.mxu0 0.0
        %3808 = vmatprep.subr.mxu0 0.0
        %3809 = vmatpush1.msra.mxu0 0.0
        %3810 = vmatprep.subr.mxu0 0.0
        %3811 = vmatpush1.msra.mxu0 0.0
        %3812 = vmatprep.subr.mxu0 0.0
        %3813 = vmatpush1.msra.mxu0 0.0
        %3814 = vmatprep.subr.mxu0 0.0
        %3815 = vmatpush1.msra.mxu0 0.0
        %3816 = vmatprep.subr.mxu0 0.0
        %3817 = vmatpush1.msra.mxu0 0.0
        %3818 = vmatprep.subr.mxu0 0.0
        %3819 = vmatpush1.msra.mxu0 0.0
        %3820 = vmatprep.subr.mxu0 0.0
        %3821 = vmatpush1.msra.mxu0 0.0
        %3822 = vmatprep.subr.mxu0 0.0
        %3823 = vmatpush1.msra.mxu0 0.0
        %3824 = vmatprep.subr.mxu0 0.0
        %3825 = vmatpush1.msra.mxu0 0.0
        %3826 = vmatprep.subr.mxu0 0.0
        %3827 = vmatpush1.msra.mxu0 0.0
        %3828 = vmatprep.subr.mxu0 0.0
        %3829 = vmatpush1.msra.mxu0 0.0
        %3830 = vmatprep.subr.mxu0 0.0
        %3831 = vmatpush1.msra.mxu0 0.0
        %3832 = vmatprep.subr.mxu0 0.0
        %3833 = vmatpush1.msra.mxu0 0.0
        %3834 = vmatprep.subr.mxu0 0.0
        %3835 = vmatpush1.msra.mxu0 0.0
        %3836 = vmatprep.subr.mxu0 0.0
        %3837 = vmatpush1.msra.mxu0 0.0
        %3838 = vmatprep.subr.mxu0 0.0
        %3839 = vmatpush1.msra.mxu0 0.0
        %3840 = vmatprep.subr.mxu0 0.0
        %3841 = vmatpush1.msra.mxu0 0.0
        %3842 = vmatprep.subr.mxu0 0.0
        %3843 = vmatpush1.msra.mxu0 0.0
        %3844 = vmatprep.subr.mxu0 0.0
        %3845 = vmatpush1.msra.mxu0 0.0
        %3846 = vmatprep.subr.mxu0 0.0
        %3847 = vmatpush1.msra.mxu0 0.0
        %3848 = vmatprep.mubr.f32.mxu0 0.0
        %3849 = vmatmul.mubr.f32.gmra.mrb[0].mxu0 %v3640
        %v3850 = vpop.f32.mrb[0].mxu0
        %v3851 = vadd.f32 %v3637, %v3850
        %v3852 = vpop.f32.mrb[0].mxu0
        %v3853 = vadd.f32 %v3637, %v3852
        %3854 = vdwg.mxu0
        %3855 = vmatprep.subr.mxu0 %v3405
        %3856 = vmatpush1.msra.mxu0 %v3404
        %3857 = vmatprep.subr.mxu0 %v3437
        %3858 = vmatpush1.msra.mxu0 %v3436
        %3859 = vmatprep.subr.mxu0 %v3469
        %3860 = vmatpush1.msra.mxu0 %v3468
        %3861 = vmatprep.subr.mxu0 %v3501
        %3862 = vmatpush1.msra.mxu0 %v3500
        %3863 = vmatprep.subr.mxu0 %v3373
        %3864 = vmatpush1.msra.mxu0 %v3372
        %3865 = vmatprep.subr.mxu0 %v3533
        %3866 = vmatpush1.msra.mxu0 %v3532
        %3867 = vmatprep.subr.mxu0 %v3565
        %3868 = vmatpush1.msra.mxu0 %v3564
        %3869 = vmatprep.subr.mxu0 %v3597
        %3870 = vmatpush1.msra.mxu0 %v3596
        %3871 = vmatprep.subr.mxu0 %v3629
        %3872 = vmatpush1.msra.mxu0 %v3628
        %3873 = vmatprep.subr.mxu0 0.0
        %3874 = vmatpush1.msra.mxu0 0.0
        %3875 = vmatprep.subr.mxu0 0.0
        %3876 = vmatpush1.msra.mxu0 0.0
        %3877 = vmatprep.subr.mxu0 0.0
        %3878 = vmatpush1.msra.mxu0 0.0
        %3879 = vmatprep.subr.mxu0 0.0
        %3880 = vmatpush1.msra.mxu0 0.0
        %3881 = vmatprep.subr.mxu0 0.0
        %3882 = vmatpush1.msra.mxu0 0.0
        %3883 = vmatprep.subr.mxu0 0.0
        %3884 = vmatpush1.msra.mxu0 0.0
        %3885 = vmatprep.subr.mxu0 0.0
        %3886 = vmatpush1.msra.mxu0 0.0
        %3887 = vmatprep.subr.mxu0 0.0
        %3888 = vmatpush1.msra.mxu0 0.0
        %3889 = vmatprep.subr.mxu0 0.0
        %3890 = vmatpush1.msra.mxu0 0.0
        %3891 = vmatprep.subr.mxu0 0.0
        %3892 = vmatpush1.msra.mxu0 0.0
        %3893 = vmatprep.subr.mxu0 0.0
        %3894 = vmatpush1.msra.mxu0 0.0
        %3895 = vmatprep.subr.mxu0 0.0
        %3896 = vmatpush1.msra.mxu0 0.0
        %3897 = vmatprep.subr.mxu0 0.0
        %3898 = vmatpush1.msra.mxu0 0.0
        %3899 = vmatprep.subr.mxu0 0.0
        %3900 = vmatpush1.msra.mxu0 0.0
        %3901 = vmatprep.subr.mxu0 0.0
        %3902 = vmatpush1.msra.mxu0 0.0
        %3903 = vmatprep.subr.mxu0 0.0
        %3904 = vmatpush1.msra.mxu0 0.0
        %3905 = vmatprep.subr.mxu0 0.0
        %3906 = vmatpush1.msra.mxu0 0.0
        %3907 = vmatprep.subr.mxu0 0.0
        %3908 = vmatpush1.msra.mxu0 0.0
        %3909 = vmatprep.subr.mxu0 0.0
        %3910 = vmatpush1.msra.mxu0 0.0
        %3911 = vmatprep.subr.mxu0 0.0
        %3912 = vmatpush1.msra.mxu0 0.0
        %3913 = vmatprep.subr.mxu0 0.0
        %3914 = vmatpush1.msra.mxu0 0.0
        %3915 = vmatprep.subr.mxu0 0.0
        %3916 = vmatpush1.msra.mxu0 0.0
        %3917 = vmatprep.subr.mxu0 0.0
        %3918 = vmatpush1.msra.mxu0 0.0
        %3919 = vmatprep.mubr.f32.mxu0 0.0
        %3920 = vmatmul.mubr.f32.gmra.mrb[0].mxu0 %v3640
        %v3921 = vpop.f32.mrb[0].mxu0
        %v3922 = vadd.f32 %v3637, %v3921
        %v3923 = vpop.f32.mrb[0].mxu0
        %v3924 = vadd.f32 %v3637, %v3923
        %3925 = vdwg.mxu0
        %v3926 = vmax.f32 %v3709, 0.0
        %v3927 = vmax.f32 %v3711, 0.0
        %v3928 = vmax.f32 %v3780, 0.0
        %v3929 = vmax.f32 %v3782, 0.0
        %v3930 = vmax.f32 %v3851, 0.0
        %v3931 = vmax.f32 %v3853, 0.0
        %v3932 = vmax.f32 %v3922, 0.0
        %v3933 = vmax.f32 %v3924, 0.0
        %3934 = vrot.lane.b32.xlu0 %v824, 104
        %v3935 = vpop.permute.xlu0 %3934
        %3936 = vrot.lane.b32.xlu0 %v825, 104
        %v3937 = vpop.permute.xlu0 %3936
        %3938 = vrot.lane.b32.xlu0 %v826, 104
        %v3939 = vpop.permute.xlu0 %3938
        %3940 = vrot.lane.b32.xlu0 %v827, 104
        %v3941 = vpop.permute.xlu0 %3940
        %v3942 = vsel %vm1665, %v3935, 0
        %v3944 = vsel %vm1665, %v3937, 0
        %v3946 = vsel %vm1665, %v3939, 0
        %v3948 = vsel %vm1665, %v3941, 0
        %3950 = vmatprep.subr.mxu0 %v3927
        %3951 = vmatpush1.msra.mxu0 %v3926
        %3952 = vmatprep.subr.mxu0 0.0
        %3953 = vmatpush1.msra.mxu0 0.0
        %3954 = vmatprep.subr.mxu0 0.0
        %3955 = vmatpush1.msra.mxu0 0.0
        %3956 = vmatprep.subr.mxu0 0.0
        %3957 = vmatpush1.msra.mxu0 0.0
        %3958 = vmatprep.subr.mxu0 0.0
        %3959 = vmatpush1.msra.mxu0 0.0
        %3960 = vmatprep.subr.mxu0 0.0
        %3961 = vmatpush1.msra.mxu0 0.0
        %3962 = vmatprep.subr.mxu0 0.0
        %3963 = vmatpush1.msra.mxu0 0.0
        %3964 = vmatprep.subr.mxu0 0.0
        %3965 = vmatpush1.msra.mxu0 0.0
        %3966 = vmatprep.subr.mxu0 0.0
        %3967 = vmatpush1.msra.mxu0 0.0
        %3968 = vmatprep.subr.mxu0 0.0
        %3969 = vmatpush1.msra.mxu0 0.0
        %3970 = vmatprep.subr.mxu0 0.0
        %3971 = vmatpush1.msra.mxu0 0.0
        %3972 = vmatprep.subr.mxu0 0.0
        %3973 = vmatpush1.msra.mxu0 0.0
        %3974 = vmatprep.subr.mxu0 0.0
        %3975 = vmatpush1.msra.mxu0 0.0
        %3976 = vmatprep.subr.mxu0 0.0
        %3977 = vmatpush1.msra.mxu0 0.0
        %3978 = vmatprep.subr.mxu0 0.0
        %3979 = vmatpush1.msra.mxu0 0.0
        %3980 = vmatprep.subr.mxu0 0.0
        %3981 = vmatpush1.msra.mxu0 0.0
        %3982 = vmatprep.subr.mxu0 0.0
        %3983 = vmatpush1.msra.mxu0 0.0
        %3984 = vmatprep.subr.mxu0 0.0
        %3985 = vmatpush1.msra.mxu0 0.0
        %3986 = vmatprep.subr.mxu0 0.0
        %3987 = vmatpush1.msra.mxu0 0.0
        %3988 = vmatprep.subr.mxu0 0.0
        %3989 = vmatpush1.msra.mxu0 0.0
        %3990 = vmatprep.subr.mxu0 0.0
        %3991 = vmatpush1.msra.mxu0 0.0
        %3992 = vmatprep.subr.mxu0 0.0
        %3993 = vmatpush1.msra.mxu0 0.0
        %3994 = vmatprep.subr.mxu0 0.0
        %3995 = vmatpush1.msra.mxu0 0.0
        %3996 = vmatprep.subr.mxu0 0.0
        %3997 = vmatpush1.msra.mxu0 0.0
        %3998 = vmatprep.subr.mxu0 0.0
        %3999 = vmatpush1.msra.mxu0 0.0
        %4000 = vmatprep.subr.mxu0 0.0
        %4001 = vmatpush1.msra.mxu0 0.0
        %4002 = vmatprep.subr.mxu0 0.0
        %4003 = vmatpush1.msra.mxu0 0.0
        %4004 = vmatprep.subr.mxu0 0.0
        %4005 = vmatpush1.msra.mxu0 0.0
        %4006 = vmatprep.subr.mxu0 0.0
        %4007 = vmatpush1.msra.mxu0 0.0
        %4008 = vmatprep.subr.mxu0 0.0
        %4009 = vmatpush1.msra.mxu0 0.0
        %4010 = vmatprep.subr.mxu0 0.0
        %4011 = vmatpush1.msra.mxu0 0.0
        %4012 = vmatprep.subr.mxu0 0.0
        %4013 = vmatpush1.msra.mxu0 0.0
        %4014 = vmatprep.mubr.f32.mxu0 0.0
        %4015 = vmatmul.mubr.f32.gmra.mrb[0].mxu0 %v3942
        %v4016 = vpop.f32.mrb[0].mxu0
        %v4017 = vadd.f32 0.0, %v4016
        %v4018 = vpop.f32.mrb[0].mxu0
        %v4019 = vadd.f32 0.0, %v4018
        %4020 = vmatprep.mubr.f32.mxu0 0.0
        %4021 = vmatmul.mubr.f32.gmra.mrb[0].mxu0 %v3944
        %v4022 = vpop.f32.mrb[0].mxu0
        %v4023 = vadd.f32 0.0, %v4022
        %v4024 = vpop.f32.mrb[0].mxu0
        %v4025 = vadd.f32 0.0, %v4024
        %4026 = vmatprep.mubr.f32.mxu0 0.0
        %4027 = vmatmul.mubr.f32.gmra.mrb[0].mxu0 %v3946
        %v4028 = vpop.f32.mrb[0].mxu0
        %v4029 = vadd.f32 0.0, %v4028
        %v4030 = vpop.f32.mrb[0].mxu0
        %v4031 = vadd.f32 0.0, %v4030
        %4032 = vmatprep.mubr.f32.mxu0 0.0
        %4033 = vmatmul.mubr.f32.gmra.mrb[0].mxu0 %v3948
        %v4034 = vpop.f32.mrb[0].mxu0
        %v4035 = vadd.f32 0.0, %v4034
        %v4036 = vpop.f32.mrb[0].mxu0
        %v4037 = vadd.f32 0.0, %v4036
        %4038 = vdwg.mxu0
        %4039 = vmatprep.subr.mxu0 %v3929
        %4040 = vmatpush1.msra.mxu0 %v3928
        %4041 = vmatprep.subr.mxu0 0.0
        %4042 = vmatpush1.msra.mxu0 0.0
        %4043 = vmatprep.subr.mxu0 0.0
        %4044 = vmatpush1.msra.mxu0 0.0
        %4045 = vmatprep.subr.mxu0 0.0
        %4046 = vmatpush1.msra.mxu0 0.0
        %4047 = vmatprep.subr.mxu0 0.0
        %4048 = vmatpush1.msra.mxu0 0.0
        %4049 = vmatprep.subr.mxu0 0.0
        %4050 = vmatpush1.msra.mxu0 0.0
        %4051 = vmatprep.subr.mxu0 0.0
        %4052 = vmatpush1.msra.mxu0 0.0
        %4053 = vmatprep.subr.mxu0 0.0
        %4054 = vmatpush1.msra.mxu0 0.0
        %4055 = vmatprep.subr.mxu0 0.0
        %4056 = vmatpush1.msra.mxu0 0.0
        %4057 = vmatprep.subr.mxu0 0.0
        %4058 = vmatpush1.msra.mxu0 0.0
        %4059 = vmatprep.subr.mxu0 0.0
        %4060 = vmatpush1.msra.mxu0 0.0
        %4061 = vmatprep.subr.mxu0 0.0
        %4062 = vmatpush1.msra.mxu0 0.0
        %4063 = vmatprep.subr.mxu0 0.0
        %4064 = vmatpush1.msra.mxu0 0.0
        %4065 = vmatprep.subr.mxu0 0.0
        %4066 = vmatpush1.msra.mxu0 0.0
        %4067 = vmatprep.subr.mxu0 0.0
        %4068 = vmatpush1.msra.mxu0 0.0
        %4069 = vmatprep.subr.mxu0 0.0
        %4070 = vmatpush1.msra.mxu0 0.0
        %4071 = vmatprep.subr.mxu0 0.0
        %4072 = vmatpush1.msra.mxu0 0.0
        %4073 = vmatprep.subr.mxu0 0.0
        %4074 = vmatpush1.msra.mxu0 0.0
        %4075 = vmatprep.subr.mxu0 0.0
        %4076 = vmatpush1.msra.mxu0 0.0
        %4077 = vmatprep.subr.mxu0 0.0
        %4078 = vmatpush1.msra.mxu0 0.0
        %4079 = vmatprep.subr.mxu0 0.0
        %4080 = vmatpush1.msra.mxu0 0.0
        %4081 = vmatprep.subr.mxu0 0.0
        %4082 = vmatpush1.msra.mxu0 0.0
        %4083 = vmatprep.subr.mxu0 0.0
        %4084 = vmatpush1.msra.mxu0 0.0
        %4085 = vmatprep.subr.mxu0 0.0
        %4086 = vmatpush1.msra.mxu0 0.0
        %4087 = vmatprep.subr.mxu0 0.0
        %4088 = vmatpush1.msra.mxu0 0.0
        %4089 = vmatprep.subr.mxu0 0.0
        %4090 = vmatpush1.msra.mxu0 0.0
        %4091 = vmatprep.subr.mxu0 0.0
        %4092 = vmatpush1.msra.mxu0 0.0
        %4093 = vmatprep.subr.mxu0 0.0
        %4094 = vmatpush1.msra.mxu0 0.0
        %4095 = vmatprep.subr.mxu0 0.0
        %4096 = vmatpush1.msra.mxu0 0.0
        %4097 = vmatprep.subr.mxu0 0.0
        %4098 = vmatpush1.msra.mxu0 0.0
        %4099 = vmatprep.subr.mxu0 0.0
        %4100 = vmatpush1.msra.mxu0 0.0
        %4101 = vmatprep.subr.mxu0 0.0
        %4102 = vmatpush1.msra.mxu0 0.0
        %4103 = vmatprep.mubr.f32.mxu0 0.0
        %4104 = vmatmul.mubr.f32.gmra.mrb[0].mxu0 %v3942
        %v4105 = vpop.f32.mrb[0].mxu0
        %v4106 = vadd.f32 0.0, %v4105
        %v4107 = vpop.f32.mrb[0].mxu0
        %v4108 = vadd.f32 0.0, %v4107
        %4109 = vmatprep.mubr.f32.mxu0 0.0
        %4110 = vmatmul.mubr.f32.gmra.mrb[0].mxu0 %v3944
        %v4111 = vpop.f32.mrb[0].mxu0
        %v4112 = vadd.f32 0.0, %v4111
        %v4113 = vpop.f32.mrb[0].mxu0
        %v4114 = vadd.f32 0.0, %v4113
        %4115 = vmatprep.mubr.f32.mxu0 0.0
        %4116 = vmatmul.mubr.f32.gmra.mrb[0].mxu0 %v3946
        %v4117 = vpop.f32.mrb[0].mxu0
        %v4118 = vadd.f32 0.0, %v4117
        %v4119 = vpop.f32.mrb[0].mxu0
        %v4120 = vadd.f32 0.0, %v4119
        %4121 = vmatprep.mubr.f32.mxu0 0.0
        %4122 = vmatmul.mubr.f32.gmra.mrb[0].mxu0 %v3948
        %v4123 = vpop.f32.mrb[0].mxu0
        %v4124 = vadd.f32 0.0, %v4123
        %v4125 = vpop.f32.mrb[0].mxu0
        %v4126 = vadd.f32 0.0, %v4125
        %4127 = vdwg.mxu0
        %4128 = vmatprep.subr.mxu0 %v3931
        %4129 = vmatpush1.msra.mxu0 %v3930
        %4130 = vmatprep.subr.mxu0 0.0
        %4131 = vmatpush1.msra.mxu0 0.0
        %4132 = vmatprep.subr.mxu0 0.0
        %4133 = vmatpush1.msra.mxu0 0.0
        %4134 = vmatprep.subr.mxu0 0.0
        %4135 = vmatpush1.msra.mxu0 0.0
        %4136 = vmatprep.subr.mxu0 0.0
        %4137 = vmatpush1.msra.mxu0 0.0
        %4138 = vmatprep.subr.mxu0 0.0
        %4139 = vmatpush1.msra.mxu0 0.0
        %4140 = vmatprep.subr.mxu0 0.0
        %4141 = vmatpush1.msra.mxu0 0.0
        %4142 = vmatprep.subr.mxu0 0.0
        %4143 = vmatpush1.msra.mxu0 0.0
        %4144 = vmatprep.subr.mxu0 0.0
        %4145 = vmatpush1.msra.mxu0 0.0
        %4146 = vmatprep.subr.mxu0 0.0
        %4147 = vmatpush1.msra.mxu0 0.0
        %4148 = vmatprep.subr.mxu0 0.0
        %4149 = vmatpush1.msra.mxu0 0.0
        %4150 = vmatprep.subr.mxu0 0.0
        %4151 = vmatpush1.msra.mxu0 0.0
        %4152 = vmatprep.subr.mxu0 0.0
        %4153 = vmatpush1.msra.mxu0 0.0
        %4154 = vmatprep.subr.mxu0 0.0
        %4155 = vmatpush1.msra.mxu0 0.0
        %4156 = vmatprep.subr.mxu0 0.0
        %4157 = vmatpush1.msra.mxu0 0.0
        %4158 = vmatprep.subr.mxu0 0.0
        %4159 = vmatpush1.msra.mxu0 0.0
        %4160 = vmatprep.subr.mxu0 0.0
        %4161 = vmatpush1.msra.mxu0 0.0
        %4162 = vmatprep.subr.mxu0 0.0
        %4163 = vmatpush1.msra.mxu0 0.0
        %4164 = vmatprep.subr.mxu0 0.0
        %4165 = vmatpush1.msra.mxu0 0.0
        %4166 = vmatprep.subr.mxu0 0.0
        %4167 = vmatpush1.msra.mxu0 0.0
        %4168 = vmatprep.subr.mxu0 0.0
        %4169 = vmatpush1.msra.mxu0 0.0
        %4170 = vmatprep.subr.mxu0 0.0
        %4171 = vmatpush1.msra.mxu0 0.0
        %4172 = vmatprep.subr.mxu0 0.0
        %4173 = vmatpush1.msra.mxu0 0.0
        %4174 = vmatprep.subr.mxu0 0.0
        %4175 = vmatpush1.msra.mxu0 0.0
        %4176 = vmatprep.subr.mxu0 0.0
        %4177 = vmatpush1.msra.mxu0 0.0
        %4178 = vmatprep.subr.mxu0 0.0
        %4179 = vmatpush1.msra.mxu0 0.0
        %4180 = vmatprep.subr.mxu0 0.0
        %4181 = vmatpush1.msra.mxu0 0.0
        %4182 = vmatprep.subr.mxu0 0.0
        %4183 = vmatpush1.msra.mxu0 0.0
        %4184 = vmatprep.subr.mxu0 0.0
        %4185 = vmatpush1.msra.mxu0 0.0
        %4186 = vmatprep.subr.mxu0 0.0
        %4187 = vmatpush1.msra.mxu0 0.0
        %4188 = vmatprep.subr.mxu0 0.0
        %4189 = vmatpush1.msra.mxu0 0.0
        %4190 = vmatprep.subr.mxu0 0.0
        %4191 = vmatpush1.msra.mxu0 0.0
        %4192 = vmatprep.mubr.f32.mxu0 0.0
        %4193 = vmatmul.mubr.f32.gmra.mrb[0].mxu0 %v3942
        %v4194 = vpop.f32.mrb[0].mxu0
        %v4195 = vadd.f32 0.0, %v4194
        %v4196 = vpop.f32.mrb[0].mxu0
        %v4197 = vadd.f32 0.0, %v4196
        %4198 = vmatprep.mubr.f32.mxu0 0.0
        %4199 = vmatmul.mubr.f32.gmra.mrb[0].mxu0 %v3944
        %v4200 = vpop.f32.mrb[0].mxu0
        %v4201 = vadd.f32 0.0, %v4200
        %v4202 = vpop.f32.mrb[0].mxu0
        %v4203 = vadd.f32 0.0, %v4202
        %4204 = vmatprep.mubr.f32.mxu0 0.0
        %4205 = vmatmul.mubr.f32.gmra.mrb[0].mxu0 %v3946
        %v4206 = vpop.f32.mrb[0].mxu0
        %v4207 = vadd.f32 0.0, %v4206
        %v4208 = vpop.f32.mrb[0].mxu0
        %v4209 = vadd.f32 0.0, %v4208
        %4210 = vmatprep.mubr.f32.mxu0 0.0
        %4211 = vmatmul.mubr.f32.gmra.mrb[0].mxu0 %v3948
        %v4212 = vpop.f32.mrb[0].mxu0
        %v4213 = vadd.f32 0.0, %v4212
        %v4214 = vpop.f32.mrb[0].mxu0
        %v4215 = vadd.f32 0.0, %v4214
        %4216 = vdwg.mxu0
        %4217 = vmatprep.subr.mxu0 %v3933
        %4218 = vmatpush1.msra.mxu0 %v3932
        %4219 = vmatprep.subr.mxu0 0.0
        %4220 = vmatpush1.msra.mxu0 0.0
        %4221 = vmatprep.subr.mxu0 0.0
        %4222 = vmatpush1.msra.mxu0 0.0
        %4223 = vmatprep.subr.mxu0 0.0
        %4224 = vmatpush1.msra.mxu0 0.0
        %4225 = vmatprep.subr.mxu0 0.0
        %4226 = vmatpush1.msra.mxu0 0.0
        %4227 = vmatprep.subr.mxu0 0.0
        %4228 = vmatpush1.msra.mxu0 0.0
        %4229 = vmatprep.subr.mxu0 0.0
        %4230 = vmatpush1.msra.mxu0 0.0
        %4231 = vmatprep.subr.mxu0 0.0
        %4232 = vmatpush1.msra.mxu0 0.0
        %4233 = vmatprep.subr.mxu0 0.0
        %4234 = vmatpush1.msra.mxu0 0.0
        %4235 = vmatprep.subr.mxu0 0.0
        %4236 = vmatpush1.msra.mxu0 0.0
        %4237 = vmatprep.subr.mxu0 0.0
        %4238 = vmatpush1.msra.mxu0 0.0
        %4239 = vmatprep.subr.mxu0 0.0
        %4240 = vmatpush1.msra.mxu0 0.0
        %4241 = vmatprep.subr.mxu0 0.0
        %4242 = vmatpush1.msra.mxu0 0.0
        %4243 = vmatprep.subr.mxu0 0.0
        %4244 = vmatpush1.msra.mxu0 0.0
        %4245 = vmatprep.subr.mxu0 0.0
        %4246 = vmatpush1.msra.mxu0 0.0
        %4247 = vmatprep.subr.mxu0 0.0
        %4248 = vmatpush1.msra.mxu0 0.0
        %4249 = vmatprep.subr.mxu0 0.0
        %4250 = vmatpush1.msra.mxu0 0.0
        %4251 = vmatprep.subr.mxu0 0.0
        %4252 = vmatpush1.msra.mxu0 0.0
        %4253 = vmatprep.subr.mxu0 0.0
        %4254 = vmatpush1.msra.mxu0 0.0
        %4255 = vmatprep.subr.mxu0 0.0
        %4256 = vmatpush1.msra.mxu0 0.0
        %4257 = vmatprep.subr.mxu0 0.0
        %4258 = vmatpush1.msra.mxu0 0.0
        %4259 = vmatprep.subr.mxu0 0.0
        %4260 = vmatpush1.msra.mxu0 0.0
        %4261 = vmatprep.subr.mxu0 0.0
        %4262 = vmatpush1.msra.mxu0 0.0
        %4263 = vmatprep.subr.mxu0 0.0
        %4264 = vmatpush1.msra.mxu0 0.0
        %4265 = vmatprep.subr.mxu0 0.0
        %4266 = vmatpush1.msra.mxu0 0.0
        %4267 = vmatprep.subr.mxu0 0.0
        %4268 = vmatpush1.msra.mxu0 0.0
        %4269 = vmatprep.subr.mxu0 0.0
        %4270 = vmatpush1.msra.mxu0 0.0
        %4271 = vmatprep.subr.mxu0 0.0
        %4272 = vmatpush1.msra.mxu0 0.0
        %4273 = vmatprep.subr.mxu0 0.0
        %4274 = vmatpush1.msra.mxu0 0.0
        %4275 = vmatprep.subr.mxu0 0.0
        %4276 = vmatpush1.msra.mxu0 0.0
        %4277 = vmatprep.subr.mxu0 0.0
        %4278 = vmatpush1.msra.mxu0 0.0
        %4279 = vmatprep.subr.mxu0 0.0
        %4280 = vmatpush1.msra.mxu0 0.0
        %4281 = vmatprep.mubr.f32.mxu0 0.0
        %4282 = vmatmul.mubr.f32.gmra.mrb[0].mxu0 %v3942
        %v4283 = vpop.f32.mrb[0].mxu0
        %v4284 = vadd.f32 0.0, %v4283
        %v4285 = vpop.f32.mrb[0].mxu0
        %v4286 = vadd.f32 0.0, %v4285
        %4287 = vmatprep.mubr.f32.mxu0 0.0
        %4288 = vmatmul.mubr.f32.gmra.mrb[0].mxu0 %v3944
        %v4289 = vpop.f32.mrb[0].mxu0
        %v4290 = vadd.f32 0.0, %v4289
        %v4291 = vpop.f32.mrb[0].mxu0
        %v4292 = vadd.f32 0.0, %v4291
        %4293 = vmatprep.mubr.f32.mxu0 0.0
        %4294 = vmatmul.mubr.f32.gmra.mrb[0].mxu0 %v3946
        %v4295 = vpop.f32.mrb[0].mxu0
        %v4296 = vadd.f32 0.0, %v4295
        %v4297 = vpop.f32.mrb[0].mxu0
        %v4298 = vadd.f32 0.0, %v4297
        %4299 = vmatprep.mubr.f32.mxu0 0.0
        %4300 = vmatmul.mubr.f32.gmra.mrb[0].mxu0 %v3948
        %v4301 = vpop.f32.mrb[0].mxu0
        %v4302 = vadd.f32 0.0, %v4301
        %v4303 = vpop.f32.mrb[0].mxu0
        %v4304 = vadd.f32 0.0, %v4303
        %4305 = vdwg.mxu0
        %v4306 = vadd.f32 %v3334, %v4017
        %v4307 = vadd.f32 %v3335, %v4019
        %v4308 = vadd.f32 %v3336, %v4106
        %v4309 = vadd.f32 %v3337, %v4108
        %v4310 = vadd.f32 %v3338, %v4195
        %v4311 = vadd.f32 %v3339, %v4197
        %v4312 = vadd.f32 %v3340, %v4284
        %v4313 = vadd.f32 %v3341, %v4286
        %v4314 = vadd.f32 %v3342, %v4023
        %v4315 = vadd.f32 %v3343, %v4025
        %v4316 = vadd.f32 %v3344, %v4112
        %v4317 = vadd.f32 %v3345, %v4114
        %v4318 = vadd.f32 %v3346, %v4201
        %v4319 = vadd.f32 %v3347, %v4203
        %v4320 = vadd.f32 %v3348, %v4290
        %v4321 = vadd.f32 %v3349, %v4292
        %v4322 = vadd.f32 %v3350, %v4029
        %v4323 = vadd.f32 %v3351, %v4031
        %v4324 = vadd.f32 %v3352, %v4118
        %v4325 = vadd.f32 %v3353, %v4120
        %v4326 = vadd.f32 %v3354, %v4207
        %v4327 = vadd.f32 %v3355, %v4209
        %v4328 = vadd.f32 %v3356, %v4296
        %v4329 = vadd.f32 %v3357, %v4298
        %v4330 = vadd.f32 %v3358, %v4035
        %v4331 = vadd.f32 %v3359, %v4037
        %v4332 = vadd.f32 %v3360, %v4124
        %v4333 = vadd.f32 %v3361, %v4126
        %v4334 = vadd.f32 %v3362, %v4213
        %v4335 = vadd.f32 %v3363, %v4215
        %v4336 = vadd.f32 %v3364, %v4302
        %v4337 = vadd.f32 %v3365, %v4304
        %v4338 = vld [vmem:[%s7] sm:$0xff]
        %v4339 = vld [vmem:[%s7 + $0x8] sm:$0xff]
        %v4340 = vld [vmem:[%s7 + $0x10] sm:$0xff]
        %v4341 = vld [vmem:[%s7 + $0x18] sm:$0xff]
        %4343 = vset.pattern.permute.xlu0 0
        %4344 = vperm.xlu0 %4343, %v4338
        %v4345 = vpop.permute.xlu0 %4344
        %4348 = vset.pattern.permute.xlu0 0
        %4349 = vperm.xlu0 %4348, %v4339
        %v4350 = vpop.permute.xlu0 %4349
        %4353 = vset.pattern.permute.xlu0 0
        %4354 = vperm.xlu0 %4353, %v4340
        %v4355 = vpop.permute.xlu0 %4354
        %4358 = vset.pattern.permute.xlu0 0
        %4359 = vperm.xlu0 %4358, %v4341
        %v4360 = vpop.permute.xlu0 %4359
        %v4362 = vadd.f32 %v4306, %v4345
        %v4363 = vadd.f32 %v4307, %v4345
        %v4364 = vadd.f32 %v4308, %v4345
        %v4365 = vadd.f32 %v4309, %v4345
        %v4366 = vadd.f32 %v4310, %v4345
        %v4367 = vadd.f32 %v4311, %v4345
        %v4368 = vadd.f32 %v4312, %v4345
        %v4369 = vadd.f32 %v4313, %v4345
        %v4370 = vadd.f32 %v4314, %v4350
        %v4371 = vadd.f32 %v4315, %v4350
        %v4372 = vadd.f32 %v4316, %v4350
        %v4373 = vadd.f32 %v4317, %v4350
        %v4374 = vadd.f32 %v4318, %v4350
        %v4375 = vadd.f32 %v4319, %v4350
        %v4376 = vadd.f32 %v4320, %v4350
        %v4377 = vadd.f32 %v4321, %v4350
        %v4378 = vadd.f32 %v4322, %v4355
        %v4379 = vadd.f32 %v4323, %v4355
        %v4380 = vadd.f32 %v4324, %v4355
        %v4381 = vadd.f32 %v4325, %v4355
        %v4382 = vadd.f32 %v4326, %v4355
        %v4383 = vadd.f32 %v4327, %v4355
        %v4384 = vadd.f32 %v4328, %v4355
        %v4385 = vadd.f32 %v4329, %v4355
        %v4386 = vadd.f32 %v4330, %v4360
        %v4387 = vadd.f32 %v4331, %v4360
        %v4388 = vadd.f32 %v4332, %v4360
        %v4389 = vadd.f32 %v4333, %v4360
        %v4390 = vadd.f32 %v4334, %v4360
        %v4391 = vadd.f32 %v4335, %v4360
        %v4392 = vadd.f32 %v4336, %v4360
        %v4393 = vadd.f32 %v4337, %v4360
        %v4394 = vadd.f32 %v4362, %v355
        %v4395 = vadd.f32 %v4363, %v356
        %v4396 = vadd.f32 %v4364, %v357
        %v4397 = vadd.f32 %v4365, %v358
        %v4398 = vadd.f32 %v4366, %v359
        %v4399 = vadd.f32 %v4367, %v360
        %v4400 = vadd.f32 %v4368, %v361
        %v4401 = vadd.f32 %v4369, %v362
        %v4402 = vadd.f32 %v4370, %v363
        %v4403 = vadd.f32 %v4371, %v364
        %v4404 = vadd.f32 %v4372, %v365
        %v4405 = vadd.f32 %v4373, %v366
        %v4406 = vadd.f32 %v4374, %v367
        %v4407 = vadd.f32 %v4375, %v368
        %v4408 = vadd.f32 %v4376, %v369
        %v4409 = vadd.f32 %v4377, %v370
        %v4410 = vadd.f32 %v4378, %v371
        %v4411 = vadd.f32 %v4379, %v372
        %v4412 = vadd.f32 %v4380, %v373
        %v4413 = vadd.f32 %v4381, %v374
        %v4414 = vadd.f32 %v4382, %v375
        %v4415 = vadd.f32 %v4383, %v376
        %v4416 = vadd.f32 %v4384, %v377
        %v4417 = vadd.f32 %v4385, %v378
        %v4418 = vadd.f32 %v4386, %v379
        %v4419 = vadd.f32 %v4387, %v380
        %v4420 = vadd.f32 %v4388, %v381
        %v4421 = vadd.f32 %v4389, %v382
        %v4422 = vadd.f32 %v4390, %v383
        %v4423 = vadd.f32 %v4391, %v384
        %v4424 = vadd.f32 %v4392, %v385
        %v4425 = vadd.f32 %v4393, %v386
        %v4426 = vmax.f32 %v4394, 0.0
        %v4427 = vmax.f32 %v4395, 0.0
        %v4428 = vmax.f32 %v4396, 0.0
        %v4429 = vmax.f32 %v4397, 0.0
        %v4430 = vmax.f32 %v4398, 0.0
        %v4431 = vmax.f32 %v4399, 0.0
        %v4432 = vmax.f32 %v4400, 0.0
        %v4433 = vmax.f32 %v4401, 0.0
        %v4434 = vmax.f32 %v4402, 0.0
        %v4435 = vmax.f32 %v4403, 0.0
        %v4436 = vmax.f32 %v4404, 0.0
        %v4437 = vmax.f32 %v4405, 0.0
        %v4438 = vmax.f32 %v4406, 0.0
        %v4439 = vmax.f32 %v4407, 0.0
        %v4440 = vmax.f32 %v4408, 0.0
        %v4441 = vmax.f32 %v4409, 0.0
        %v4442 = vmax.f32 %v4410, 0.0
        %v4443 = vmax.f32 %v4411, 0.0
        %v4444 = vmax.f32 %v4412, 0.0
        %v4445 = vmax.f32 %v4413, 0.0
        %v4446 = vmax.f32 %v4414, 0.0
        %v4447 = vmax.f32 %v4415, 0.0
        %v4448 = vmax.f32 %v4416, 0.0
        %v4449 = vmax.f32 %v4417, 0.0
        %v4450 = vmax.f32 %v4418, 0.0
        %v4451 = vmax.f32 %v4419, 0.0
        %v4452 = vmax.f32 %v4420, 0.0
        %v4453 = vmax.f32 %v4421, 0.0
        %v4454 = vmax.f32 %v4422, 0.0
        %v4455 = vmax.f32 %v4423, 0.0
        %v4456 = vmax.f32 %v4424, 0.0
        %v4457 = vmax.f32 %v4425, 0.0
        %4458 = vst [vmem:[%s352] sm:$0xff] %v4426
        %4459 = vst [vmem:[%s352 + $0x8] sm:$0xff] %v4427
        %4460 = vst [vmem:[%s352 + $0x10] sm:$0xff] %v4428
        %4461 = vst [vmem:[%s352 + $0x18] sm:$0xff] %v4429
        %4462 = vst [vmem:[%s352 + $0x20] sm:$0xff] %v4430
        %4463 = vst [vmem:[%s352 + $0x28] sm:$0xff] %v4431
        %4464 = vst [vmem:[%s352 + $0x30] sm:$0xff] %v4432
        %4465 = vst [vmem:[%s352 + $0x38] sm:$0xff] %v4433
        %4466 = vst [vmem:[%s352 + $0x40] sm:$0xff] %v4434
        %4467 = vst [vmem:[%s352 + $0x48] sm:$0xff] %v4435
        %4468 = vst [vmem:[%s352 + $0x50] sm:$0xff] %v4436
        %4469 = vst [vmem:[%s352 + $0x58] sm:$0xff] %v4437
        %4470 = vst [vmem:[%s352 + $0x60] sm:$0xff] %v4438
        %4471 = vst [vmem:[%s352 + $0x68] sm:$0xff] %v4439
        %4472 = vst [vmem:[%s352 + $0x70] sm:$0xff] %v4440
        %4473 = vst [vmem:[%s352 + $0x78] sm:$0xff] %v4441
        %4474 = vst [vmem:[%s352 + $0x80] sm:$0xff] %v4442
        %4475 = vst [vmem:[%s352 + $0x88] sm:$0xff] %v4443
        %4476 = vst [vmem:[%s352 + $0x90] sm:$0xff] %v4444
        %4477 = vst [vmem:[%s352 + $0x98] sm:$0xff] %v4445
        %4478 = vst [vmem:[%s352 + $0xa0] sm:$0xff] %v4446
        %4479 = vst [vmem:[%s352 + $0xa8] sm:$0xff] %v4447
        %4480 = vst [vmem:[%s352 + $0xb0] sm:$0xff] %v4448
        %4481 = vst [vmem:[%s352 + $0xb8] sm:$0xff] %v4449
        %4482 = vst [vmem:[%s352 + $0xc0] sm:$0xff] %v4450
        %4483 = vst [vmem:[%s352 + $0xc8] sm:$0xff] %v4451
        %4484 = vst [vmem:[%s352 + $0xd0] sm:$0xff] %v4452
        %4485 = vst [vmem:[%s352 + $0xd8] sm:$0xff] %v4453
        %4486 = vst [vmem:[%s352 + $0xe0] sm:$0xff] %v4454
        %4487 = vst [vmem:[%s352 + $0xe8] sm:$0xff] %v4455
        %4488 = vst [vmem:[%s352 + $0xf0] sm:$0xff] %v4456
        %4489 = vst [vmem:[%s352 + $0xf8] sm:$0xff] %v4457
        %s4490 = sand.u32 %s207, 1
        %s4491 = scalar_lea.sflag [#allocation4], %s4490
        %s4492 = sand.u32 %s207, 1
        %s4493 = smul.addr %s4492, 256
        %s4494 = scalar_lea.vmem [#allocation8], %s4493
        // Predicated region
        $region65: #{tpu_custom_call.1} parent=51 // pred_check
          %p4495 = pneg %p217
        $region66: #{tpu_custom_call.1} parent=51 // pred_check_branch
          %4497 = sbr.rel (%p4495) target = $region68
        $region67: #{tpu_custom_call.1} parent=51 // pred_region
          %s4498 = smul.u32 8, %s26
          %s4500 = ssub.s32 4096, 4096
          %4501 = vsyncadd %s4491, %s4500
          %s4502 = smul.addr %s4498, 128
          %s4503 = scalar_lea.hbm %s8, %s4502
          %s4504 = sshll.u32 %s4494, 4
          %s4505 = int_to_ptr.vmem [resolvable:$true] %s4504
          %4510 = dma.vmem_to_hbm [thread:$0]  %s4505, 4096, %s4503, %s4491, 1024, 2048, 64
        $region68: #{tpu_custom_call.1} parent=51 // pred_fallthru
          _
      $region52: #{tpu_custom_call.1} parent=5 // pred_fallthru
        _
      %p4511 = scmp.le.s32.totalorder 2, %s21
      // Predicated region
      $region69: #{tpu_custom_call.1} parent=5 // pred_check
        %p4512 = pneg %p4511
      $region70: #{tpu_custom_call.1} parent=5 // pred_check_branch
        %4514 = sbr.rel (%p4512) target = $region72
      $region71: #{tpu_custom_call.1} parent=5 // pred_region
        %s4515 = ssub.s32 %s21, 2
        // Predicated region
        $region73: #{tpu_custom_call.1} parent=71 // pred_check
          %p4516 = pneg %p223
        $region74: #{tpu_custom_call.1} parent=71 // pred_check_branch
          %4518 = sbr.rel (%p4516) target = $region76
        $region75: #{tpu_custom_call.1} parent=71 // pred_region
          %s4519 = sand.u32 %s208, 1
          %s4520 = scalar_lea.sflag [#allocation4], %s4519
          %s4521 = sand.u32 %s208, 1
          %s4522 = smul.addr %s4521, 256
          %s4523 = scalar_lea.vmem [#allocation8], %s4522
          %4524 = dma.done %s4520, 4096
        $region76: #{tpu_custom_call.1} parent=71 // pred_fallthru
          _
      $region72: #{tpu_custom_call.1} parent=5 // pred_fallthru
        _
    $region6: #{tpu_custom_call.1} parent=1 // loop_footer
      %s25 = sadd.s32 1, %s21
    $region7: #{tpu_custom_call.1} parent=1 // loop_footer_branch
      %20 = sbr.rel target = $region3
    $region8: #{tpu_custom_call.1} parent=1 // loop_exit
      _
    %4525 = vsyncpa [#allocation3], 1
    %s4526 = scalar_lea.sflag [#allocation3], 1
    %4527 = vsyncpa %s4526, 1
    %4528 = vsyncpa [#allocation6], 1
    %4529 = vsyncpa [#allocation4], 1
    %s4530 = scalar_lea.sflag [#allocation4], 1
    %4531 = vsyncpa %s4530, 1

</llo_original>
